<compile_context>
chip_gen: v5e
topology: v5e:2x2
jax: 0.10.0
libtpu: 0.0.40
codegen_flags: <defaults>
</compile_context>

<pallas_src>
import jax
import jax.numpy as jnp
from jax import lax
from jax.experimental import pallas as pl
from jax.experimental.pallas import tpu as pltpu

BN_EPS = 1e-5


# ----------------------------------------------------------------------------
# Pass 1: conv(3x3) + bias + per-tile BN partial statistics
# ----------------------------------------------------------------------------
def _conv_bias_stats_kernel(c_ref, h0_ref, h1_ref, w_ref, b_ref, y_ref, st_ref):
    """TH output rows of the 3x3/s1/p1 conv + bias, plus per-tile [sum, sumsq].

    c_ref  : (1, TH, W+2, Cin)  center rows of the spatially padded input (bf16)
    h0_ref : (1, 1,  W+2, Cin)  first halo row below the tile             (bf16)
    h1_ref : (1, 1,  W+2, Cin)  second halo row below the tile            (bf16)
    w_ref  : (9*Cin, Cp)        im2col weight, row = (kh*3+kw)*Cin + cin  (bf16)
    b_ref  : (1, Cp)            conv bias                                 (f32)
    y_ref  : (1, TH, W, Cp)     conv + bias output                        (bf16)
    st_ref : (1, 1, 2, Cp)      per-tile [sum, sum-of-squares]            (f32)
    """
    th = y_ref.shape[1]
    wo = y_ref.shape[2]
    cp = y_ref.shape[3]
    cin = c_ref.shape[3]

    # (TH+2, W+2, Cin) window for this tile (two extra halo rows).
    window = jnp.concatenate([c_ref[0], h0_ref[0], h1_ref[0]], axis=0)

    # In-VMEM im2col: K = 9*Cin, a single MXU matmul per grid step.
    cols = [window[kh:kh + th, kw:kw + wo, :]
            for kh in range(3) for kw in range(3)]
    lhs = jnp.concatenate(cols, axis=-1).reshape(th * wo, 9 * cin)

    acc = jnp.dot(lhs, w_ref[...], preferred_element_type=jnp.float32)
    y = acc + b_ref[...]                                    # (TH*W, Cp) f32

    y_ref[...] = y.reshape(1, th, wo, cp).astype(y_ref.dtype)

    # BN partials ride along with the matmul tile (f32 accumulators).
    s = jnp.sum(y, axis=0, keepdims=True)                   # (1, Cp)
    ss = jnp.sum(y * y, axis=0, keepdims=True)              # (1, Cp)
    st_ref[...] = jnp.concatenate([s, ss], axis=0).reshape(1, 1, 2, cp)


# ----------------------------------------------------------------------------
# Pass 2: y * scale + shift, ReLU   (scale/shift fold BN mean/var/gamma/beta)
# ----------------------------------------------------------------------------
def _bn_relu_kernel(y_ref, scale_ref, shift_ref, o_ref):
    y = y_ref[...].astype(jnp.float32)
    o_ref[...] = jnp.maximum(
        y * scale_ref[...] + shift_ref[...], 0.0).astype(o_ref.dtype)


def _round_up(x, m):
    return (x + m - 1) // m * m


def _pick_row_tile_h(h):
    # Largest TH <= 16 that divides H (matmul M = TH*W rows per step).
    for t in (16, 8, 4, 2, 1):
        if h % t == 0:
            return t
    return 1


def _conv_block_nhwc(x_nhwc, weight, bias, gamma, beta, out_dtype):
    """ConvBlock forward in NHWC.  Returns (N, H, W, Cp); real channels are the
    first Cout lanes (Cp = Cout rounded up to 128, padded lanes exactly zero)."""
    n, h, w, cin_x = x_nhwc.shape
    cout, cin_w, kh, kw = weight.shape
    assert (kh, kw) == (3, 3)
    cp = _round_up(cout, 128)
    m = n * h * w

    # The activation may carry zero lane-padding channels from the previous
    # block; zero-pad the weight's Cin to match (padded rows are zero, so the
    # result is unchanged and no channel-slice HBM round trip is needed).
    if cin_w < cin_x:
        weight = jnp.pad(weight, ((0, 0), (0, cin_x - cin_w), (0, 0), (0, 0)))
    cin = cin_x

    # im2col weight layout: row = (kh*3 + kw)*Cin + cin; Cout lane-padded; bf16.
    w_im2col = jnp.transpose(weight, (2, 3, 1, 0)).reshape(9 * cin, cout)
    w_im2col = jnp.pad(w_im2col, ((0, 0), (0, cp - cout))).astype(jnp.bfloat16)
    b_p = jnp.pad(bias, (0, cp - cout)).reshape(1, cp).astype(jnp.float32)

    # Spatial zero-padding only (no HBM im2col expansion).
    # TODO(synk): the +1 spatial halo could be folded into the kernel (pl.when
    # on boundary tiles + W masking) to avoid this extra padded HBM copy.
    x_pad = jnp.pad(x_nhwc.astype(jnp.bfloat16), ((0, 0), (1, 1), (1, 1), (0, 0)))

    th = _pick_row_tile_h(h)
    grid1 = (n, h // th)

    flops1 = 2 * m * (9 * cin) * cp
    bytes1 = int(x_pad.size * 2 * (th + 2) / th + w_im2col.size * 2
                 + m * cp * 2 + n * (h // th) * 2 * cp * 4)

    y, stats = pl.pallas_call(
        _conv_bias_stats_kernel,
        grid=grid1,
        in_specs=[
            # Center rows [j*TH, j*TH+TH) of the padded input ...
            pl.BlockSpec((1, th, w + 2, cin), lambda i, j: (i, j, 0, 0)),
            # ... plus two single-row halo blocks below the tile.
            pl.BlockSpec((1, 1, w + 2, cin), lambda i, j: (i, j * th + th, 0, 0)),
            pl.BlockSpec((1, 1, w + 2, cin),
                         lambda i, j: (i, j * th + th + 1, 0, 0)),
            pl.BlockSpec((9 * cin, cp), lambda i, j: (0, 0)),
            pl.BlockSpec((1, cp), lambda i, j: (0, 0)),
        ],
        out_specs=[
            pl.BlockSpec((1, th, w, cp), lambda i, j: (i, j, 0, 0)),
            pl.BlockSpec((1, 1, 2, cp), lambda i, j: (i, j, 0, 0)),
        ],
        out_shape=[
            jax.ShapeDtypeStruct((n, h, w, cp), jnp.bfloat16),
            jax.ShapeDtypeStruct((n, h // th, 2, cp), jnp.float32),
        ],
        compiler_params=pltpu.CompilerParams(
            dimension_semantics=("parallel", "parallel")),
        cost_estimate=pl.CostEstimate(
            flops=flops1, transcendentals=0, bytes_accessed=bytes1),
    )(x_pad, x_pad, x_pad, w_im2col, b_p)

    # Tiny per-channel finalize of the BN statistics (training-mode, biased).
    # f32 sums of f32 tile-partials; E[y^2]-E[y]^2 clamped at 0.
    s = jnp.sum(stats, axis=(0, 1))                         # (2, Cp) f32
    mean = s[0] / m
    var = jnp.maximum(s[1] / m - mean * mean, 0.0)
    g_p = jnp.pad(gamma.astype(jnp.float32), (0, cp - cout))
    be_p = jnp.pad(beta.astype(jnp.float32), (0, cp - cout))
    scale_v = g_p * lax.rsqrt(var + BN_EPS)
    shift_v = be_p - mean * scale_v
    scale = scale_v.reshape(1, cp)
    shift = shift_v.reshape(1, cp)

    # Pass 2: normalize + affine + ReLU; memory-bound, so large lane-dense
    # row tiles (up to 2048 x 128) with a cdiv grid (masked tail).
    tm = min(2048, m)
    grid2 = (pl.cdiv(m, tm),)
    bytes2 = int(m * cp * 2 + m * cp * jnp.dtype(out_dtype).itemsize + 2 * cp * 4)
    out = pl.pallas_call(
        _bn_relu_kernel,
        grid=grid2,
        in_specs=[
            pl.BlockSpec((tm, cp), lambda i: (i, 0)),
            pl.BlockSpec((1, cp), lambda i: (0, 0)),
            pl.BlockSpec((1, cp), lambda i: (0, 0)),
        ],
        out_specs=pl.BlockSpec((tm, cp), lambda i: (i, 0)),
        out_shape=jax.ShapeDtypeStruct((m, cp), out_dtype),
        compiler_params=pltpu.CompilerParams(dimension_semantics=("parallel",)),
        cost_estimate=pl.CostEstimate(
            flops=2 * m * cp, transcendentals=0, bytes_accessed=bytes2),
    )(y.reshape(m, cp), scale, shift)

    return out.reshape(n, h, w, cp)


@jax.jit
def basic_block_forward(x_nchw, w1, b1, g1, be1, w2, b2, g2, be2):
    """BasicBlock: ConvBlock(Cin->Cout) then ConvBlock(Cout->Cout); NCHW API."""
    cout2 = w2.shape[0]
    x_nhwc = jnp.transpose(x_nchw, (0, 2, 3, 1))
    # Block 1 emits bf16 with Cp=128 lane padding kept (padded lanes are zero);
    # block 2's weight Cin is zero-padded to match, so no channel slice needed.
    y1 = _conv_block_nhwc(x_nhwc, w1, b1, g1, be1, out_dtype=jnp.bfloat16)
    y2 = _conv_block_nhwc(y1, w2, b2, g2, be2, out_dtype=jnp.float32)
    y2 = y2[..., :cout2]
    return jnp.transpose(y2, (0, 3, 1, 2))
    # TODO(synk): dropout=0.0 in the default config so nn.Dropout2d is never
    # instantiated; BN running_mean/var buffer updates are not modeled (only
    # the training-mode forward normalization).


# ----------------------------------------------------------------------------
# Pure-JAX reference (same precision policy: bf16 conv operands, f32 the rest)
# ----------------------------------------------------------------------------
def _conv_block_ref(x_nchw, weight, bias, gamma, beta):
    y = lax.conv_general_dilated(
        x_nchw.astype(jnp.bfloat16), weight.astype(jnp.bfloat16),
        window_strides=(1, 1), padding=((1, 1), (1, 1)),
        dimension_numbers=("NCHW", "OIHW", "NCHW"),
        preferred_element_type=jnp.float32)
    y = y + bias.reshape(1, -1, 1, 1).astype(jnp.float32)
    mean = jnp.mean(y, axis=(0, 2, 3), keepdims=True)
    var = jnp.mean((y - mean) ** 2, axis=(0, 2, 3), keepdims=True)
    y = (y - mean) * lax.rsqrt(var + BN_EPS)
    y = y * gamma.reshape(1, -1, 1, 1) + beta.reshape(1, -1, 1, 1)
    return jnp.maximum(y, 0.0)


def _basic_block_ref(x, w1, b1, g1, be1, w2, b2, g2, be2):
    return _conv_block_ref(_conv_block_ref(x, w1, b1, g1, be1), w2, b2, g2, be2)


if __name__ == "__main__":
    key = jax.random.PRNGKey(0)
    k_x, k_w1, k_b1, k_w2, k_b2 = jax.random.split(key, 5)

    N, CIN, COUT, H, W = 2, 4, 8, 16, 16
    K = 3

    x = jax.random.normal(k_x, (N, CIN, H, W), dtype=jnp.float32)

    fan1 = CIN * K * K
    bound1 = 1.0 / float(fan1) ** 0.5
    w1 = jax.random.uniform(k_w1, (COUT, CIN, K, K), jnp.float32, -bound1, bound1)
    b1 = jax.random.uniform(k_b1, (COUT,), jnp.float32, -bound1, bound1)
    g1 = jnp.ones((COUT,), jnp.float32)
    be1 = jnp.zeros((COUT,), jnp.float32)

    fan2 = COUT * K * K
    bound2 = 1.0 / float(fan2) ** 0.5
    w2 = jax.random.uniform(k_w2, (COUT, COUT, K, K), jnp.float32, -bound2, bound2)
    b2 = jax.random.uniform(k_b2, (COUT,), jnp.float32, -bound2, bound2)
    g2 = jnp.ones((COUT,), jnp.float32)
    be2 = jnp.zeros((COUT,), jnp.float32)

    out = basic_block_forward(x, w1, b1, g1, be1, w2, b2, g2, be2)
    out = jax.block_until_ready(out)

    ref = _basic_block_ref(x, w1, b1, g1, be1, w2, b2, g2, be2)
    assert out.shape == (N, COUT, H, W)
    # Tolerance covers bf16-operand rounding, the bf16 y intermediate, and
    # accumulation-order differences.
    assert jnp.allclose(out, ref, rtol=2e-2, atol=2e-2), "mismatch vs reference"

    print("KERNEL_OK")
</pallas_src>

<mosaic_0001>
module attributes {stable_mosaic.version = 11 : i64} {
  func.func @_conv_bias_stats_kernel(%arg0: i32, %arg1: i32, %arg2: memref<1x16x18x4xbf16, #tpu.memory_space<vmem>>, %arg3: memref<1x1x18x4xbf16, #tpu.memory_space<vmem>>, %arg4: memref<1x1x18x4xbf16, #tpu.memory_space<vmem>>, %arg5: memref<36x128xbf16, #tpu.memory_space<vmem>>, %arg6: memref<1x128xf32, #tpu.memory_space<vmem>>, %arg7: memref<1x16x16x128xbf16, #tpu.memory_space<vmem>>, %arg8: memref<1x1x2x128xf32, #tpu.memory_space<vmem>>) attributes {dimension_semantics = [#tpu.dimension_semantics<parallel>, #tpu.dimension_semantics<parallel>], iteration_bounds = array<i64: 2, 1>, scalar_prefetch = 0 : i64, scratch_operands = 0 : i64, tpu.core_type = #tpu.core_type<tc>, window_params = [{transform_indices = @transform_0, window_bounds = array<i64: 1, 16, 18, 4>}, {transform_indices = @transform_1, window_bounds = array<i64: 1, 1, 18, 4>}, {transform_indices = @transform_2, window_bounds = array<i64: 1, 1, 18, 4>}, {pipeline_mode = #tpu.pipeline_mode<synchronous>, transform_indices = @transform_3, window_bounds = array<i64: 36, 128>}, {pipeline_mode = #tpu.pipeline_mode<synchronous>, transform_indices = @transform_4, window_bounds = array<i64: 1, 128>}, {transform_indices = @transform_5, window_bounds = array<i64: 1, 16, 16, 128>}, {transform_indices = @transform_6, window_bounds = array<i64: 1, 1, 2, 128>}]} {
    %c0 = arith.constant 0 : index
    %c0_0 = arith.constant 0 : index
    %c0_1 = arith.constant 0 : index
    %c0_2 = arith.constant 0 : index
    %0 = vector.load %arg2[%c0, %c0_0, %c0_1, %c0_2] : memref<1x16x18x4xbf16, #tpu.memory_space<vmem>>, vector<1x16x18x4xbf16>
    %1 = vector.shape_cast %0 : vector<1x16x18x4xbf16> to vector<16x18x4xbf16>
    %c0_3 = arith.constant 0 : index
    %c0_4 = arith.constant 0 : index
    %c0_5 = arith.constant 0 : index
    %c0_6 = arith.constant 0 : index
    %2 = vector.load %arg3[%c0_3, %c0_4, %c0_5, %c0_6] : memref<1x1x18x4xbf16, #tpu.memory_space<vmem>>, vector<1x1x18x4xbf16>
    %3 = vector.shape_cast %2 : vector<1x1x18x4xbf16> to vector<1x18x4xbf16>
    %c0_7 = arith.constant 0 : index
    %c0_8 = arith.constant 0 : index
    %c0_9 = arith.constant 0 : index
    %c0_10 = arith.constant 0 : index
    %4 = vector.load %arg4[%c0_7, %c0_8, %c0_9, %c0_10] : memref<1x1x18x4xbf16, #tpu.memory_space<vmem>>, vector<1x1x18x4xbf16>
    %5 = vector.shape_cast %4 : vector<1x1x18x4xbf16> to vector<1x18x4xbf16>
    %6 = tpu.concatenate %1, %3, %5 in 0 : vector<16x18x4xbf16>, vector<1x18x4xbf16>, vector<1x18x4xbf16> -> vector<18x18x4xbf16>
    %7 = vector.extract_strided_slice %6 {offsets = [0, 0, 0], sizes = [16, 16, 4], strides = [1, 1, 1]} : vector<18x18x4xbf16> to vector<16x16x4xbf16>
    %8 = vector.extract_strided_slice %6 {offsets = [0, 1, 0], sizes = [16, 16, 4], strides = [1, 1, 1]} : vector<18x18x4xbf16> to vector<16x16x4xbf16>
    %9 = vector.extract_strided_slice %6 {offsets = [0, 2, 0], sizes = [16, 16, 4], strides = [1, 1, 1]} : vector<18x18x4xbf16> to vector<16x16x4xbf16>
    %10 = vector.extract_strided_slice %6 {offsets = [1, 0, 0], sizes = [16, 16, 4], strides = [1, 1, 1]} : vector<18x18x4xbf16> to vector<16x16x4xbf16>
    %11 = vector.extract_strided_slice %6 {offsets = [1, 1, 0], sizes = [16, 16, 4], strides = [1, 1, 1]} : vector<18x18x4xbf16> to vector<16x16x4xbf16>
    %12 = vector.extract_strided_slice %6 {offsets = [1, 2, 0], sizes = [16, 16, 4], strides = [1, 1, 1]} : vector<18x18x4xbf16> to vector<16x16x4xbf16>
    %13 = vector.extract_strided_slice %6 {offsets = [2, 0, 0], sizes = [16, 16, 4], strides = [1, 1, 1]} : vector<18x18x4xbf16> to vector<16x16x4xbf16>
    %14 = vector.extract_strided_slice %6 {offsets = [2, 1, 0], sizes = [16, 16, 4], strides = [1, 1, 1]} : vector<18x18x4xbf16> to vector<16x16x4xbf16>
    %15 = vector.extract_strided_slice %6 {offsets = [2, 2, 0], sizes = [16, 16, 4], strides = [1, 1, 1]} : vector<18x18x4xbf16> to vector<16x16x4xbf16>
    %16 = tpu.concatenate %7, %8, %9, %10, %11, %12, %13, %14, %15 in 2 : vector<16x16x4xbf16>, vector<16x16x4xbf16>, vector<16x16x4xbf16>, vector<16x16x4xbf16>, vector<16x16x4xbf16>, vector<16x16x4xbf16>, vector<16x16x4xbf16>, vector<16x16x4xbf16>, vector<16x16x4xbf16> -> vector<16x16x36xbf16>
    %17 = vector.shape_cast %16 : vector<16x16x36xbf16> to vector<256x36xbf16>
    %c0_11 = arith.constant 0 : index
    %c0_12 = arith.constant 0 : index
    %18 = vector.load %arg5[%c0_11, %c0_12] : memref<36x128xbf16, #tpu.memory_space<vmem>>, vector<36x128xbf16>
    %cst = arith.constant dense<0.000000e+00> : vector<256x128xf32>
    %19 = tpu.matmul %17, %18, %cst {dimension_numbers = #tpu.dot_dimension_numbers<[1], [0], [0], [1], [0, 0, 1, 1], [], []>} : vector<256x36xbf16>, vector<36x128xbf16>, vector<256x128xf32> -> vector<256x128xf32>
    %c0_13 = arith.constant 0 : index
    %c0_14 = arith.constant 0 : index
    %20 = vector.load %arg6[%c0_13, %c0_14] : memref<1x128xf32, #tpu.memory_space<vmem>>, vector<1x128xf32>
    %21 = vector.broadcast %20 : vector<1x128xf32> to vector<256x128xf32>
    %22 = arith.addf %19, %21 : vector<256x128xf32>
    %23 = vector.shape_cast %22 : vector<256x128xf32> to vector<1x16x16x128xf32>
    %24 = arith.truncf %23 : vector<1x16x16x128xf32> to vector<1x16x16x128xbf16>
    %c0_15 = arith.constant 0 : index
    %c0_16 = arith.constant 0 : index
    %c0_17 = arith.constant 0 : index
    %c0_18 = arith.constant 0 : index
    %25 = vector.load %arg7[%c0_15, %c0_16, %c0_17, %c0_18] : memref<1x16x16x128xbf16, #tpu.memory_space<vmem>>, vector<1x16x16x128xbf16>
    tpu.vector_store %arg7[%c0_15, %c0_16, %c0_17, %c0_18], %24 {strides = array<i32>} : memref<1x16x16x128xbf16, #tpu.memory_space<vmem>>, vector<1x16x16x128xbf16>,
    %cst_19 = arith.constant dense<0.000000e+00> : vector<128xf32>
    %26 = vector.multi_reduction <add>, %22, %cst_19 [0] : vector<256x128xf32> to vector<128xf32>
    %27 = vector.shape_cast %26 : vector<128xf32> to vector<1x128xf32>
    %28 = arith.mulf %22, %22 : vector<256x128xf32>
    %cst_20 = arith.constant dense<0.000000e+00> : vector<128xf32>
    %29 = vector.multi_reduction <add>, %28, %cst_20 [0] : vector<256x128xf32> to vector<128xf32>
    %30 = vector.shape_cast %29 : vector<128xf32> to vector<1x128xf32>
    %31 = tpu.concatenate %27, %30 in 0 : vector<1x128xf32>, vector<1x128xf32> -> vector<2x128xf32>
    %32 = vector.shape_cast %31 : vector<2x128xf32> to vector<1x1x2x128xf32>
    %c0_21 = arith.constant 0 : index
    %c0_22 = arith.constant 0 : index
    %c0_23 = arith.constant 0 : index
    %c0_24 = arith.constant 0 : index
    %33 = vector.load %arg8[%c0_21, %c0_22, %c0_23, %c0_24] : memref<1x1x2x128xf32, #tpu.memory_space<vmem>>, vector<1x1x2x128xf32>
    tpu.vector_store %arg8[%c0_21, %c0_22, %c0_23, %c0_24], %32 {strides = array<i32>} : memref<1x1x2x128xf32, #tpu.memory_space<vmem>>, vector<1x1x2x128xf32>,
    return
  }
  func.func @transform_0(%arg0: i32, %arg1: i32) -> (i32, i32, i32, i32) {
    %c0_i32 = arith.constant 0 : i32
    %c0_i32_0 = arith.constant 0 : i32
    %c0_i32_1 = arith.constant 0 : i32
    return %arg0, %arg1, %c0_i32, %c0_i32_0 : i32, i32, i32, i32
  }
  func.func @transform_1(%arg0: i32, %arg1: i32) -> (i32, i32, i32, i32) {
    %c16_i32 = arith.constant 16 : i32
    %0 = arith.muli %arg1, %c16_i32 : i32
    %c16_i32_0 = arith.constant 16 : i32
    %1 = arith.addi %0, %c16_i32_0 : i32
    %c0_i32 = arith.constant 0 : i32
    %c0_i32_1 = arith.constant 0 : i32
    %c0_i32_2 = arith.constant 0 : i32
    return %arg0, %1, %c0_i32, %c0_i32_1 : i32, i32, i32, i32
  }
  func.func @transform_2(%arg0: i32, %arg1: i32) -> (i32, i32, i32, i32) {
    %c16_i32 = arith.constant 16 : i32
    %0 = arith.muli %arg1, %c16_i32 : i32
    %c16_i32_0 = arith.constant 16 : i32
    %1 = arith.addi %0, %c16_i32_0 : i32
    %c1_i32 = arith.constant 1 : i32
    %2 = arith.addi %1, %c1_i32 : i32
    %c0_i32 = arith.constant 0 : i32
    %c0_i32_1 = arith.constant 0 : i32
    %c0_i32_2 = arith.constant 0 : i32
    return %arg0, %2, %c0_i32, %c0_i32_1 : i32, i32, i32, i32
  }
  func.func @transform_3(%arg0: i32, %arg1: i32) -> (i32, i32) {
    %c0_i32 = arith.constant 0 : i32
    %c0_i32_0 = arith.constant 0 : i32
    %c0_i32_1 = arith.constant 0 : i32
    return %c0_i32, %c0_i32_0 : i32, i32
  }
  func.func @transform_4(%arg0: i32, %arg1: i32) -> (i32, i32) {
    %c0_i32 = arith.constant 0 : i32
    %c0_i32_0 = arith.constant 0 : i32
    %c0_i32_1 = arith.constant 0 : i32
    return %c0_i32, %c0_i32_0 : i32, i32
  }
  func.func @transform_5(%arg0: i32, %arg1: i32) -> (i32, i32, i32, i32) {
    %c0_i32 = arith.constant 0 : i32
    %c0_i32_0 = arith.constant 0 : i32
    %c0_i32_1 = arith.constant 0 : i32
    return %arg0, %arg1, %c0_i32, %c0_i32_0 : i32, i32, i32, i32
  }
  func.func @transform_6(%arg0: i32, %arg1: i32) -> (i32, i32, i32, i32) {
    %c0_i32 = arith.constant 0 : i32
    %c0_i32_0 = arith.constant 0 : i32
    %c0_i32_1 = arith.constant 0 : i32
    return %arg0, %arg1, %c0_i32, %c0_i32_0 : i32, i32, i32, i32
  }
}

module attributes {stable_mosaic.version = 11 : i64} {
  func.func @_bn_relu_kernel(%arg0: i32, %arg1: memref<512x128xbf16, #tpu.memory_space<vmem>>, %arg2: memref<1x128xf32, #tpu.memory_space<vmem>>, %arg3: memref<1x128xf32, #tpu.memory_space<vmem>>, %arg4: memref<512x128xbf16, #tpu.memory_space<vmem>>) attributes {dimension_semantics = [#tpu.dimension_semantics<parallel>], iteration_bounds = array<i64: 1>, scalar_prefetch = 0 : i64, scratch_operands = 0 : i64, tpu.core_type = #tpu.core_type<tc>, window_params = [{transform_indices = @transform_0, window_bounds = array<i64: 512, 128>}, {pipeline_mode = #tpu.pipeline_mode<synchronous>, transform_indices = @transform_1, window_bounds = array<i64: 1, 128>}, {pipeline_mode = #tpu.pipeline_mode<synchronous>, transform_indices = @transform_2, window_bounds = array<i64: 1, 128>}, {transform_indices = @transform_3, window_bounds = array<i64: 512, 128>}]} {
    %c0 = arith.constant 0 : index
    %c0_0 = arith.constant 0 : index
    %0 = vector.load %arg1[%c0, %c0_0] : memref<512x128xbf16, #tpu.memory_space<vmem>>, vector<512x128xbf16>
    %1 = arith.extf %0 : vector<512x128xbf16> to vector<512x128xf32>
    %c0_1 = arith.constant 0 : index
    %c0_2 = arith.constant 0 : index
    %2 = vector.load %arg2[%c0_1, %c0_2] : memref<1x128xf32, #tpu.memory_space<vmem>>, vector<1x128xf32>
    %3 = vector.broadcast %2 : vector<1x128xf32> to vector<512x128xf32>
    %4 = arith.mulf %1, %3 : vector<512x128xf32>
    %c0_3 = arith.constant 0 : index
    %c0_4 = arith.constant 0 : index
    %5 = vector.load %arg3[%c0_3, %c0_4] : memref<1x128xf32, #tpu.memory_space<vmem>>, vector<1x128xf32>
    %6 = vector.broadcast %5 : vector<1x128xf32> to vector<512x128xf32>
    %7 = arith.addf %4, %6 : vector<512x128xf32>
    %cst = arith.constant 0.000000e+00 : f32
    %8 = vector.broadcast %cst : f32 to vector<512x128xf32>
    %9 = arith.maximumf %7, %8 : vector<512x128xf32>
    %10 = arith.truncf %9 : vector<512x128xf32> to vector<512x128xbf16>
    %c0_5 = arith.constant 0 : index
    %c0_6 = arith.constant 0 : index
    %11 = vector.load %arg4[%c0_5, %c0_6] : memref<512x128xbf16, #tpu.memory_space<vmem>>, vector<512x128xbf16>
    tpu.vector_store %arg4[%c0_5, %c0_6], %10 {strides = array<i32>} : memref<512x128xbf16, #tpu.memory_space<vmem>>, vector<512x128xbf16>,
    return
  }
  func.func @transform_0(%arg0: i32) -> (i32, i32) {
    %c0_i32 = arith.constant 0 : i32
    %c0_i32_0 = arith.constant 0 : i32
    return %arg0, %c0_i32 : i32, i32
  }
  func.func @transform_1(%arg0: i32) -> (i32, i32) {
    %c0_i32 = arith.constant 0 : i32
    %c0_i32_0 = arith.constant 0 : i32
    %c0_i32_1 = arith.constant 0 : i32
    return %c0_i32, %c0_i32_0 : i32, i32
  }
  func.func @transform_2(%arg0: i32) -> (i32, i32) {
    %c0_i32 = arith.constant 0 : i32
    %c0_i32_0 = arith.constant 0 : i32
    %c0_i32_1 = arith.constant 0 : i32
    return %c0_i32, %c0_i32_0 : i32, i32
  }
  func.func @transform_3(%arg0: i32) -> (i32, i32) {
    %c0_i32 = arith.constant 0 : i32
    %c0_i32_0 = arith.constant 0 : i32
    return %arg0, %c0_i32 : i32, i32
  }
}

module attributes {stable_mosaic.version = 11 : i64} {
  func.func @_conv_bias_stats_kernel(%arg0: i32, %arg1: i32, %arg2: memref<1x16x18x128xbf16, #tpu.memory_space<vmem>>, %arg3: memref<1x1x18x128xbf16, #tpu.memory_space<vmem>>, %arg4: memref<1x1x18x128xbf16, #tpu.memory_space<vmem>>, %arg5: memref<1152x128xbf16, #tpu.memory_space<vmem>>, %arg6: memref<1x128xf32, #tpu.memory_space<vmem>>, %arg7: memref<1x16x16x128xbf16, #tpu.memory_space<vmem>>, %arg8: memref<1x1x2x128xf32, #tpu.memory_space<vmem>>) attributes {dimension_semantics = [#tpu.dimension_semantics<parallel>, #tpu.dimension_semantics<parallel>], iteration_bounds = array<i64: 2, 1>, scalar_prefetch = 0 : i64, scratch_operands = 0 : i64, tpu.core_type = #tpu.core_type<tc>, window_params = [{transform_indices = @transform_0, window_bounds = array<i64: 1, 16, 18, 128>}, {transform_indices = @transform_1, window_bounds = array<i64: 1, 1, 18, 128>}, {transform_indices = @transform_2, window_bounds = array<i64: 1, 1, 18, 128>}, {pipeline_mode = #tpu.pipeline_mode<synchronous>, transform_indices = @transform_3, window_bounds = array<i64: 1152, 128>}, {pipeline_mode = #tpu.pipeline_mode<synchronous>, transform_indices = @transform_4, window_bounds = array<i64: 1, 128>}, {transform_indices = @transform_5, window_bounds = array<i64: 1, 16, 16, 128>}, {transform_indices = @transform_6, window_bounds = array<i64: 1, 1, 2, 128>}]} {
    %c0 = arith.constant 0 : index
    %c0_0 = arith.constant 0 : index
    %c0_1 = arith.constant 0 : index
    %c0_2 = arith.constant 0 : index
    %0 = vector.load %arg2[%c0, %c0_0, %c0_1, %c0_2] : memref<1x16x18x128xbf16, #tpu.memory_space<vmem>>, vector<1x16x18x128xbf16>
    %1 = vector.shape_cast %0 : vector<1x16x18x128xbf16> to vector<16x18x128xbf16>
    %c0_3 = arith.constant 0 : index
    %c0_4 = arith.constant 0 : index
    %c0_5 = arith.constant 0 : index
    %c0_6 = arith.constant 0 : index
    %2 = vector.load %arg3[%c0_3, %c0_4, %c0_5, %c0_6] : memref<1x1x18x128xbf16, #tpu.memory_space<vmem>>, vector<1x1x18x128xbf16>
    %3 = vector.shape_cast %2 : vector<1x1x18x128xbf16> to vector<1x18x128xbf16>
    %c0_7 = arith.constant 0 : index
    %c0_8 = arith.constant 0 : index
    %c0_9 = arith.constant 0 : index
    %c0_10 = arith.constant 0 : index
    %4 = vector.load %arg4[%c0_7, %c0_8, %c0_9, %c0_10] : memref<1x1x18x128xbf16, #tpu.memory_space<vmem>>, vector<1x1x18x128xbf16>
    %5 = vector.shape_cast %4 : vector<1x1x18x128xbf16> to vector<1x18x128xbf16>
    %6 = tpu.concatenate %1, %3, %5 in 0 : vector<16x18x128xbf16>, vector<1x18x128xbf16>, vector<1x18x128xbf16> -> vector<18x18x128xbf16>
    %7 = vector.extract_strided_slice %6 {offsets = [0, 0, 0], sizes = [16, 16, 128], strides = [1, 1, 1]} : vector<18x18x128xbf16> to vector<16x16x128xbf16>
    %8 = vector.extract_strided_slice %6 {offsets = [0, 1, 0], sizes = [16, 16, 128], strides = [1, 1, 1]} : vector<18x18x128xbf16> to vector<16x16x128xbf16>
    %9 = vector.extract_strided_slice %6 {offsets = [0, 2, 0], sizes = [16, 16, 128], strides = [1, 1, 1]} : vector<18x18x128xbf16> to vector<16x16x128xbf16>
    %10 = vector.extract_strided_slice %6 {offsets = [1, 0, 0], sizes = [16, 16, 128], strides = [1, 1, 1]} : vector<18x18x128xbf16> to vector<16x16x128xbf16>
    %11 = vector.extract_strided_slice %6 {offsets = [1, 1, 0], sizes = [16, 16, 128], strides = [1, 1, 1]} : vector<18x18x128xbf16> to vector<16x16x128xbf16>
    %12 = vector.extract_strided_slice %6 {offsets = [1, 2, 0], sizes = [16, 16, 128], strides = [1, 1, 1]} : vector<18x18x128xbf16> to vector<16x16x128xbf16>
    %13 = vector.extract_strided_slice %6 {offsets = [2, 0, 0], sizes = [16, 16, 128], strides = [1, 1, 1]} : vector<18x18x128xbf16> to vector<16x16x128xbf16>
    %14 = vector.extract_strided_slice %6 {offsets = [2, 1, 0], sizes = [16, 16, 128], strides = [1, 1, 1]} : vector<18x18x128xbf16> to vector<16x16x128xbf16>
    %15 = vector.extract_strided_slice %6 {offsets = [2, 2, 0], sizes = [16, 16, 128], strides = [1, 1, 1]} : vector<18x18x128xbf16> to vector<16x16x128xbf16>
    %16 = tpu.concatenate %7, %8, %9, %10, %11, %12, %13, %14, %15 in 2 : vector<16x16x128xbf16>, vector<16x16x128xbf16>, vector<16x16x128xbf16>, vector<16x16x128xbf16>, vector<16x16x128xbf16>, vector<16x16x128xbf16>, vector<16x16x128xbf16>, vector<16x16x128xbf16>, vector<16x16x128xbf16> -> vector<16x16x1152xbf16>
    %17 = vector.shape_cast %16 : vector<16x16x1152xbf16> to vector<256x1152xbf16>
    %c0_11 = arith.constant 0 : index
    %c0_12 = arith.constant 0 : index
    %18 = vector.load %arg5[%c0_11, %c0_12] : memref<1152x128xbf16, #tpu.memory_space<vmem>>, vector<1152x128xbf16>
    %cst = arith.constant dense<0.000000e+00> : vector<256x128xf32>
    %19 = tpu.matmul %17, %18, %cst {dimension_numbers = #tpu.dot_dimension_numbers<[1], [0], [0], [1], [0, 0, 1, 1], [], []>} : vector<256x1152xbf16>, vector<1152x128xbf16>, vector<256x128xf32> -> vector<256x128xf32>
    %c0_13 = arith.constant 0 : index
    %c0_14 = arith.constant 0 : index
    %20 = vector.load %arg6[%c0_13, %c0_14] : memref<1x128xf32, #tpu.memory_space<vmem>>, vector<1x128xf32>
    %21 = vector.broadcast %20 : vector<1x128xf32> to vector<256x128xf32>
    %22 = arith.addf %19, %21 : vector<256x128xf32>
    %23 = vector.shape_cast %22 : vector<256x128xf32> to vector<1x16x16x128xf32>
    %24 = arith.truncf %23 : vector<1x16x16x128xf32> to vector<1x16x16x128xbf16>
    %c0_15 = arith.constant 0 : index
    %c0_16 = arith.constant 0 : index
    %c0_17 = arith.constant 0 : index
    %c0_18 = arith.constant 0 : index
    %25 = vector.load %arg7[%c0_15, %c0_16, %c0_17, %c0_18] : memref<1x16x16x128xbf16, #tpu.memory_space<vmem>>, vector<1x16x16x128xbf16>
    tpu.vector_store %arg7[%c0_15, %c0_16, %c0_17, %c0_18], %24 {strides = array<i32>} : memref<1x16x16x128xbf16, #tpu.memory_space<vmem>>, vector<1x16x16x128xbf16>,
    %cst_19 = arith.constant dense<0.000000e+00> : vector<128xf32>
    %26 = vector.multi_reduction <add>, %22, %cst_19 [0] : vector<256x128xf32> to vector<128xf32>
    %27 = vector.shape_cast %26 : vector<128xf32> to vector<1x128xf32>
    %28 = arith.mulf %22, %22 : vector<256x128xf32>
    %cst_20 = arith.constant dense<0.000000e+00> : vector<128xf32>
    %29 = vector.multi_reduction <add>, %28, %cst_20 [0] : vector<256x128xf32> to vector<128xf32>
    %30 = vector.shape_cast %29 : vector<128xf32> to vector<1x128xf32>
    %31 = tpu.concatenate %27, %30 in 0 : vector<1x128xf32>, vector<1x128xf32> -> vector<2x128xf32>
    %32 = vector.shape_cast %31 : vector<2x128xf32> to vector<1x1x2x128xf32>
    %c0_21 = arith.constant 0 : index
    %c0_22 = arith.constant 0 : index
    %c0_23 = arith.constant 0 : index
    %c0_24 = arith.constant 0 : index
    %33 = vector.load %arg8[%c0_21, %c0_22, %c0_23, %c0_24] : memref<1x1x2x128xf32, #tpu.memory_space<vmem>>, vector<1x1x2x128xf32>
    tpu.vector_store %arg8[%c0_21, %c0_22, %c0_23, %c0_24], %32 {strides = array<i32>} : memref<1x1x2x128xf32, #tpu.memory_space<vmem>>, vector<1x1x2x128xf32>,
    return
  }
  func.func @transform_0(%arg0: i32, %arg1: i32) -> (i32, i32, i32, i32) {
    %c0_i32 = arith.constant 0 : i32
    %c0_i32_0 = arith.constant 0 : i32
    %c0_i32_1 = arith.constant 0 : i32
    return %arg0, %arg1, %c0_i32, %c0_i32_0 : i32, i32, i32, i32
  }
  func.func @transform_1(%arg0: i32, %arg1: i32) -> (i32, i32, i32, i32) {
    %c16_i32 = arith.constant 16 : i32
    %0 = arith.muli %arg1, %c16_i32 : i32
    %c16_i32_0 = arith.constant 16 : i32
    %1 = arith.addi %0, %c16_i32_0 : i32
    %c0_i32 = arith.constant 0 : i32
    %c0_i32_1 = arith.constant 0 : i32
    %c0_i32_2 = arith.constant 0 : i32
    return %arg0, %1, %c0_i32, %c0_i32_1 : i32, i32, i32, i32
  }
  func.func @transform_2(%arg0: i32, %arg1: i32) -> (i32, i32, i32, i32) {
    %c16_i32 = arith.constant 16 : i32
    %0 = arith.muli %arg1, %c16_i32 : i32
    %c16_i32_0 = arith.constant 16 : i32
    %1 = arith.addi %0, %c16_i32_0 : i32
    %c1_i32 = arith.constant 1 : i32
    %2 = arith.addi %1, %c1_i32 : i32
    %c0_i32 = arith.constant 0 : i32
    %c0_i32_1 = arith.constant 0 : i32
    %c0_i32_2 = arith.constant 0 : i32
    return %arg0, %2, %c0_i32, %c0_i32_1 : i32, i32, i32, i32
  }
  func.func @transform_3(%arg0: i32, %arg1: i32) -> (i32, i32) {
    %c0_i32 = arith.constant 0 : i32
    %c0_i32_0 = arith.constant 0 : i32
    %c0_i32_1 = arith.constant 0 : i32
    return %c0_i32, %c0_i32_0 : i32, i32
  }
  func.func @transform_4(%arg0: i32, %arg1: i32) -> (i32, i32) {
    %c0_i32 = arith.constant 0 : i32
    %c0_i32_0 = arith.constant 0 : i32
    %c0_i32_1 = arith.constant 0 : i32
    return %c0_i32, %c0_i32_0 : i32, i32
  }
  func.func @transform_5(%arg0: i32, %arg1: i32) -> (i32, i32, i32, i32) {
    %c0_i32 = arith.constant 0 : i32
    %c0_i32_0 = arith.constant 0 : i32
    %c0_i32_1 = arith.constant 0 : i32
    return %arg0, %arg1, %c0_i32, %c0_i32_0 : i32, i32, i32, i32
  }
  func.func @transform_6(%arg0: i32, %arg1: i32) -> (i32, i32, i32, i32) {
    %c0_i32 = arith.constant 0 : i32
    %c0_i32_0 = arith.constant 0 : i32
    %c0_i32_1 = arith.constant 0 : i32
    return %arg0, %arg1, %c0_i32, %c0_i32_0 : i32, i32, i32, i32
  }
}

module attributes {stable_mosaic.version = 11 : i64} {
  func.func @_bn_relu_kernel(%arg0: i32, %arg1: memref<512x128xbf16, #tpu.memory_space<vmem>>, %arg2: memref<1x128xf32, #tpu.memory_space<vmem>>, %arg3: memref<1x128xf32, #tpu.memory_space<vmem>>, %arg4: memref<512x128xf32, #tpu.memory_space<vmem>>) attributes {dimension_semantics = [#tpu.dimension_semantics<parallel>], iteration_bounds = array<i64: 1>, scalar_prefetch = 0 : i64, scratch_operands = 0 : i64, tpu.core_type = #tpu.core_type<tc>, window_params = [{transform_indices = @transform_0, window_bounds = array<i64: 512, 128>}, {pipeline_mode = #tpu.pipeline_mode<synchronous>, transform_indices = @transform_1, window_bounds = array<i64: 1, 128>}, {pipeline_mode = #tpu.pipeline_mode<synchronous>, transform_indices = @transform_2, window_bounds = array<i64: 1, 128>}, {transform_indices = @transform_3, window_bounds = array<i64: 512, 128>}]} {
    %c0 = arith.constant 0 : index
    %c0_0 = arith.constant 0 : index
    %0 = vector.load %arg1[%c0, %c0_0] : memref<512x128xbf16, #tpu.memory_space<vmem>>, vector<512x128xbf16>
    %1 = arith.extf %0 : vector<512x128xbf16> to vector<512x128xf32>
    %c0_1 = arith.constant 0 : index
    %c0_2 = arith.constant 0 : index
    %2 = vector.load %arg2[%c0_1, %c0_2] : memref<1x128xf32, #tpu.memory_space<vmem>>, vector<1x128xf32>
    %3 = vector.broadcast %2 : vector<1x128xf32> to vector<512x128xf32>
    %4 = arith.mulf %1, %3 : vector<512x128xf32>
    %c0_3 = arith.constant 0 : index
    %c0_4 = arith.constant 0 : index
    %5 = vector.load %arg3[%c0_3, %c0_4] : memref<1x128xf32, #tpu.memory_space<vmem>>, vector<1x128xf32>
    %6 = vector.broadcast %5 : vector<1x128xf32> to vector<512x128xf32>
    %7 = arith.addf %4, %6 : vector<512x128xf32>
    %cst = arith.constant 0.000000e+00 : f32
    %8 = vector.broadcast %cst : f32 to vector<512x128xf32>
    %9 = arith.maximumf %7, %8 : vector<512x128xf32>
    %c0_5 = arith.constant 0 : index
    %c0_6 = arith.constant 0 : index
    %10 = vector.load %arg4[%c0_5, %c0_6] : memref<512x128xf32, #tpu.memory_space<vmem>>, vector<512x128xf32>
    tpu.vector_store %arg4[%c0_5, %c0_6], %9 {strides = array<i32>} : memref<512x128xf32, #tpu.memory_space<vmem>>, vector<512x128xf32>,
    return
  }
  func.func @transform_0(%arg0: i32) -> (i32, i32) {
    %c0_i32 = arith.constant 0 : i32
    %c0_i32_0 = arith.constant 0 : i32
    return %arg0, %c0_i32 : i32, i32
  }
  func.func @transform_1(%arg0: i32) -> (i32, i32) {
    %c0_i32 = arith.constant 0 : i32
    %c0_i32_0 = arith.constant 0 : i32
    %c0_i32_1 = arith.constant 0 : i32
    return %c0_i32, %c0_i32_0 : i32, i32
  }
  func.func @transform_2(%arg0: i32) -> (i32, i32) {
    %c0_i32 = arith.constant 0 : i32
    %c0_i32_0 = arith.constant 0 : i32
    %c0_i32_1 = arith.constant 0 : i32
    return %c0_i32, %c0_i32_0 : i32, i32
  }
  func.func @transform_3(%arg0: i32) -> (i32, i32) {
    %c0_i32 = arith.constant 0 : i32
    %c0_i32_0 = arith.constant 0 : i32
    return %arg0, %c0_i32 : i32, i32
  }
}

</mosaic_0001>

<llo_original>
// kernel: basic_block_forward.5
$region0: #{basic_block_forward.5}
  #allocation0 [shape = 'u32[]', space=smem, size = 0x4, offset = 0x4, fixed_abs, tag = 'smem constant byte address 0x4 - core index']
  #allocation1 [shape = 'u32[72,128]{1,0:T(1,128)}', space=vmem, size = 0x9000, scoped, tag = 'internal scratch']
  %s0 = inlined_call_operand.vmem [shape: bf16[512,128], index: 0, kind: input, shape index: {}]
  %s1 = inlined_call_operand.vmem [shape: f32[1,128], index: 1, kind: input, shape index: {}]
  %s2 = inlined_call_operand.vmem [shape: f32[1,128], index: 2, kind: input, shape index: {}]
  %s3 = inlined_call_operand.vmem [shape: bf16[512,128], index: 3, kind: output, shape index: {}]
  %s4 = sld [smem:[#allocation0]]
  $region22: #{basic_block_forward.5} parent=0
    _
  %s6 = ssub.s32 1, %s4
  %s7 = scalar_select 0, %s6, %s4
  // Predicated region
  $region2: #{basic_block_forward.5} parent=0 // pred_check
    _
  $region3: #{basic_block_forward.5} parent=0 // pred_check_branch
    %9 = sbr.rel (0) target = $region5
  $region4: #{basic_block_forward.5} parent=0 // pred_region
    _
  $region5: #{basic_block_forward.5} parent=0 // pred_fallthru
    _
  // Predicated region
  $region6: #{basic_block_forward.5} parent=0 // pred_check
    _
  $region7: #{basic_block_forward.5} parent=0 // pred_check_branch
    %11 = sbr.rel (0) target = $region9
  $region8: #{basic_block_forward.5} parent=0 // pred_region
    _
  $region9: #{basic_block_forward.5} parent=0 // pred_fallthru
    _
  // Predicated region
  $region10: #{basic_block_forward.5} parent=0 // pred_check
    _
  $region11: #{basic_block_forward.5} parent=0 // pred_check_branch
    %13 = sbr.rel (0) target = $region13
  $region12: #{basic_block_forward.5} parent=0 // pred_region
    _
  $region13: #{basic_block_forward.5} parent=0 // pred_fallthru
    _
  %v14 = vld [vmem:[%s0] sm:$0xf]
  %v15 = vld [vmem:[%s0 + $0x4] sm:$0xf]
  %v16 = vld [vmem:[%s0 + $0x8] sm:$0xf]
  %v17 = vld [vmem:[%s0 + $0xc] sm:$0xf]
  %v18 = vld [vmem:[%s0 + $0x10] sm:$0xf]
  %v19 = vld [vmem:[%s0 + $0x14] sm:$0xf]
  %v20 = vld [vmem:[%s0 + $0x18] sm:$0xf]
  %v21 = vld [vmem:[%s0 + $0x1c] sm:$0xf]
  %v22 = vld [vmem:[%s0 + $0x20] sm:$0xf]
  %v23 = vld [vmem:[%s0 + $0x24] sm:$0xf]
  %v24 = vld [vmem:[%s0 + $0x28] sm:$0xf]
  %v25 = vld [vmem:[%s0 + $0x2c] sm:$0xf]
  %v26 = vld [vmem:[%s0 + $0x30] sm:$0xf]
  %v27 = vld [vmem:[%s0 + $0x34] sm:$0xf]
  %v28 = vld [vmem:[%s0 + $0x38] sm:$0xf]
  %v29 = vld [vmem:[%s0 + $0x3c] sm:$0xf]
  %v30 = vld [vmem:[%s0 + $0x40] sm:$0xf]
  %v31 = vld [vmem:[%s0 + $0x44] sm:$0xf]
  %v32 = vld [vmem:[%s0 + $0x48] sm:$0xf]
  %v33 = vld [vmem:[%s0 + $0x4c] sm:$0xf]
  %v34 = vld [vmem:[%s0 + $0x50] sm:$0xf]
  %v35 = vld [vmem:[%s0 + $0x54] sm:$0xf]
  %v36 = vld [vmem:[%s0 + $0x58] sm:$0xf]
  %v37 = vld [vmem:[%s0 + $0x5c] sm:$0xf]
  %v38 = vld [vmem:[%s0 + $0x60] sm:$0xf]
  %v39 = vld [vmem:[%s0 + $0x64] sm:$0xf]
  %v40 = vld [vmem:[%s0 + $0x68] sm:$0xf]
  %v41 = vld [vmem:[%s0 + $0x6c] sm:$0xf]
  %v42 = vld [vmem:[%s0 + $0x70] sm:$0xf]
  %v43 = vld [vmem:[%s0 + $0x74] sm:$0xf]
  %v44 = vld [vmem:[%s0 + $0x78] sm:$0xf]
  %v45 = vld [vmem:[%s0 + $0x7c] sm:$0xf]
  %v46 = vld [vmem:[%s0 + $0x80] sm:$0xf]
  %v47 = vld [vmem:[%s0 + $0x84] sm:$0xf]
  %v48 = vld [vmem:[%s0 + $0x88] sm:$0xf]
  %v49 = vld [vmem:[%s0 + $0x8c] sm:$0xf]
  %v50 = vld [vmem:[%s0 + $0x90] sm:$0xf]
  %v51 = vld [vmem:[%s0 + $0x94] sm:$0xf]
  %v52 = vld [vmem:[%s0 + $0x98] sm:$0xf]
  %v53 = vld [vmem:[%s0 + $0x9c] sm:$0xf]
  %v54 = vld [vmem:[%s0 + $0xa0] sm:$0xf]
  %v55 = vld [vmem:[%s0 + $0xa4] sm:$0xf]
  %v56 = vld [vmem:[%s0 + $0xa8] sm:$0xf]
  %v57 = vld [vmem:[%s0 + $0xac] sm:$0xf]
  %v58 = vld [vmem:[%s0 + $0xb0] sm:$0xf]
  %v59 = vld [vmem:[%s0 + $0xb4] sm:$0xf]
  %v60 = vld [vmem:[%s0 + $0xb8] sm:$0xf]
  %v61 = vld [vmem:[%s0 + $0xbc] sm:$0xf]
  %v62 = vld [vmem:[%s0 + $0xc0] sm:$0xf]
  %v63 = vld [vmem:[%s0 + $0xc4] sm:$0xf]
  %v64 = vld [vmem:[%s0 + $0xc8] sm:$0xf]
  %v65 = vld [vmem:[%s0 + $0xcc] sm:$0xf]
  %v66 = vld [vmem:[%s0 + $0xd0] sm:$0xf]
  %v67 = vld [vmem:[%s0 + $0xd4] sm:$0xf]
  %v68 = vld [vmem:[%s0 + $0xd8] sm:$0xf]
  %v69 = vld [vmem:[%s0 + $0xdc] sm:$0xf]
  %v70 = vld [vmem:[%s0 + $0xe0] sm:$0xf]
  %v71 = vld [vmem:[%s0 + $0xe4] sm:$0xf]
  %v72 = vld [vmem:[%s0 + $0xe8] sm:$0xf]
  %v73 = vld [vmem:[%s0 + $0xec] sm:$0xf]
  %v74 = vld [vmem:[%s0 + $0xf0] sm:$0xf]
  %v75 = vld [vmem:[%s0 + $0xf4] sm:$0xf]
  %v76 = vld [vmem:[%s0 + $0xf8] sm:$0xf]
  %v77 = vld [vmem:[%s0 + $0xfc] sm:$0xf]
  %v78 = vunpack.c.l.bf16 %v14
  %v79 = vunpack.c.l.bf16 %v15
  %v80 = vunpack.c.l.bf16 %v16
  %v81 = vunpack.c.l.bf16 %v17
  %v82 = vunpack.c.l.bf16 %v18
  %v83 = vunpack.c.l.bf16 %v19
  %v84 = vunpack.c.l.bf16 %v20
  %v85 = vunpack.c.l.bf16 %v21
  %v86 = vunpack.c.l.bf16 %v22
  %v87 = vunpack.c.l.bf16 %v23
  %v88 = vunpack.c.l.bf16 %v24
  %v89 = vunpack.c.l.bf16 %v25
  %v90 = vunpack.c.l.bf16 %v26
  %v91 = vunpack.c.l.bf16 %v27
  %v92 = vunpack.c.l.bf16 %v28
  %v93 = vunpack.c.l.bf16 %v29
  %v94 = vunpack.c.l.bf16 %v30
  %v95 = vunpack.c.l.bf16 %v31
  %v96 = vunpack.c.l.bf16 %v32
  %v97 = vunpack.c.l.bf16 %v33
  %v98 = vunpack.c.l.bf16 %v34
  %v99 = vunpack.c.l.bf16 %v35
  %v100 = vunpack.c.l.bf16 %v36
  %v101 = vunpack.c.l.bf16 %v37
  %v102 = vunpack.c.l.bf16 %v38
  %v103 = vunpack.c.l.bf16 %v39
  %v104 = vunpack.c.l.bf16 %v40
  %v105 = vunpack.c.l.bf16 %v41
  %v106 = vunpack.c.l.bf16 %v42
  %v107 = vunpack.c.l.bf16 %v43
  %v108 = vunpack.c.l.bf16 %v44
  %v109 = vunpack.c.l.bf16 %v45
  %v110 = vunpack.c.l.bf16 %v46
  %v111 = vunpack.c.l.bf16 %v47
  %v112 = vunpack.c.l.bf16 %v48
  %v113 = vunpack.c.l.bf16 %v49
  %v114 = vunpack.c.l.bf16 %v50
  %v115 = vunpack.c.l.bf16 %v51
  %v116 = vunpack.c.l.bf16 %v52
  %v117 = vunpack.c.l.bf16 %v53
  %v118 = vunpack.c.l.bf16 %v54
  %v119 = vunpack.c.l.bf16 %v55
  %v120 = vunpack.c.l.bf16 %v56
  %v121 = vunpack.c.l.bf16 %v57
  %v122 = vunpack.c.l.bf16 %v58
  %v123 = vunpack.c.l.bf16 %v59
  %v124 = vunpack.c.l.bf16 %v60
  %v125 = vunpack.c.l.bf16 %v61
  %v126 = vunpack.c.l.bf16 %v62
  %v127 = vunpack.c.l.bf16 %v63
  %v128 = vunpack.c.l.bf16 %v64
  %v129 = vunpack.c.l.bf16 %v65
  %v130 = vunpack.c.l.bf16 %v66
  %v131 = vunpack.c.l.bf16 %v67
  %v132 = vunpack.c.l.bf16 %v68
  %v133 = vunpack.c.l.bf16 %v69
  %v134 = vunpack.c.l.bf16 %v70
  %v135 = vunpack.c.l.bf16 %v71
  %v136 = vunpack.c.l.bf16 %v72
  %v137 = vunpack.c.l.bf16 %v73
  %v138 = vunpack.c.l.bf16 %v74
  %v139 = vunpack.c.l.bf16 %v75
  %v140 = vunpack.c.l.bf16 %v76
  %v141 = vunpack.c.l.bf16 %v77
  %v142 = vld [vmem:[%s1] sm:$0x1]
  %v144 = vperm.slane %v142, 0
  %v146 = vmul.f32 %v78, %v144
  %v147 = vmul.f32 %v79, %v144
  %v148 = vmul.f32 %v80, %v144
  %v149 = vmul.f32 %v81, %v144
  %v150 = vmul.f32 %v82, %v144
  %v151 = vmul.f32 %v83, %v144
  %v152 = vmul.f32 %v84, %v144
  %v153 = vmul.f32 %v85, %v144
  %v154 = vmul.f32 %v86, %v144
  %v155 = vmul.f32 %v87, %v144
  %v156 = vmul.f32 %v88, %v144
  %v157 = vmul.f32 %v89, %v144
  %v158 = vmul.f32 %v90, %v144
  %v159 = vmul.f32 %v91, %v144
  %v160 = vmul.f32 %v92, %v144
  %v161 = vmul.f32 %v93, %v144
  %v162 = vmul.f32 %v94, %v144
  %v163 = vmul.f32 %v95, %v144
  %v164 = vmul.f32 %v96, %v144
  %v165 = vmul.f32 %v97, %v144
  %v166 = vmul.f32 %v98, %v144
  %v167 = vmul.f32 %v99, %v144
  %v168 = vmul.f32 %v100, %v144
  %v169 = vmul.f32 %v101, %v144
  %v170 = vmul.f32 %v102, %v144
  %v171 = vmul.f32 %v103, %v144
  %v172 = vmul.f32 %v104, %v144
  %v173 = vmul.f32 %v105, %v144
  %v174 = vmul.f32 %v106, %v144
  %v175 = vmul.f32 %v107, %v144
  %v176 = vmul.f32 %v108, %v144
  %v177 = vmul.f32 %v109, %v144
  %v178 = vmul.f32 %v110, %v144
  %v179 = vmul.f32 %v111, %v144
  %v180 = vmul.f32 %v112, %v144
  %v181 = vmul.f32 %v113, %v144
  %v182 = vmul.f32 %v114, %v144
  %v183 = vmul.f32 %v115, %v144
  %v184 = vmul.f32 %v116, %v144
  %v185 = vmul.f32 %v117, %v144
  %v186 = vmul.f32 %v118, %v144
  %v187 = vmul.f32 %v119, %v144
  %v188 = vmul.f32 %v120, %v144
  %v189 = vmul.f32 %v121, %v144
  %v190 = vmul.f32 %v122, %v144
  %v191 = vmul.f32 %v123, %v144
  %v192 = vmul.f32 %v124, %v144
  %v193 = vmul.f32 %v125, %v144
  %v194 = vmul.f32 %v126, %v144
  %v195 = vmul.f32 %v127, %v144
  %v196 = vmul.f32 %v128, %v144
  %v197 = vmul.f32 %v129, %v144
  %v198 = vmul.f32 %v130, %v144
  %v199 = vmul.f32 %v131, %v144
  %v200 = vmul.f32 %v132, %v144
  %v201 = vmul.f32 %v133, %v144
  %v202 = vmul.f32 %v134, %v144
  %v203 = vmul.f32 %v135, %v144
  %v204 = vmul.f32 %v136, %v144
  %v205 = vmul.f32 %v137, %v144
  %v206 = vmul.f32 %v138, %v144
  %v207 = vmul.f32 %v139, %v144
  %v208 = vmul.f32 %v140, %v144
  %v209 = vmul.f32 %v141, %v144
  %v210 = vld [vmem:[%s2] sm:$0x1]
  %v212 = vperm.slane %v210, 0
  %v214 = vadd.f32 %v146, %v212
  %v215 = vadd.f32 %v147, %v212
  %v216 = vadd.f32 %v148, %v212
  %v217 = vadd.f32 %v149, %v212
  %v218 = vadd.f32 %v150, %v212
  %v219 = vadd.f32 %v151, %v212
  %v220 = vadd.f32 %v152, %v212
  %v221 = vadd.f32 %v153, %v212
  %v222 = vadd.f32 %v154, %v212
  %v223 = vadd.f32 %v155, %v212
  %v224 = vadd.f32 %v156, %v212
  %v225 = vadd.f32 %v157, %v212
  %v226 = vadd.f32 %v158, %v212
  %v227 = vadd.f32 %v159, %v212
  %v228 = vadd.f32 %v160, %v212
  %v229 = vadd.f32 %v161, %v212
  %v230 = vadd.f32 %v162, %v212
  %v231 = vadd.f32 %v163, %v212
  %v232 = vadd.f32 %v164, %v212
  %v233 = vadd.f32 %v165, %v212
  %v234 = vadd.f32 %v166, %v212
  %v235 = vadd.f32 %v167, %v212
  %v236 = vadd.f32 %v168, %v212
  %v237 = vadd.f32 %v169, %v212
  %v238 = vadd.f32 %v170, %v212
  %v239 = vadd.f32 %v171, %v212
  %v240 = vadd.f32 %v172, %v212
  %v241 = vadd.f32 %v173, %v212
  %v242 = vadd.f32 %v174, %v212
  %v243 = vadd.f32 %v175, %v212
  %v244 = vadd.f32 %v176, %v212
  %v245 = vadd.f32 %v177, %v212
  %v246 = vadd.f32 %v178, %v212
  %v247 = vadd.f32 %v179, %v212
  %v248 = vadd.f32 %v180, %v212
  %v249 = vadd.f32 %v181, %v212
  %v250 = vadd.f32 %v182, %v212
  %v251 = vadd.f32 %v183, %v212
  %v252 = vadd.f32 %v184, %v212
  %v253 = vadd.f32 %v185, %v212
  %v254 = vadd.f32 %v186, %v212
  %v255 = vadd.f32 %v187, %v212
  %v256 = vadd.f32 %v188, %v212
  %v257 = vadd.f32 %v189, %v212
  %v258 = vadd.f32 %v190, %v212
  %v259 = vadd.f32 %v191, %v212
  %v260 = vadd.f32 %v192, %v212
  %v261 = vadd.f32 %v193, %v212
  %v262 = vadd.f32 %v194, %v212
  %v263 = vadd.f32 %v195, %v212
  %v264 = vadd.f32 %v196, %v212
  %v265 = vadd.f32 %v197, %v212
  %v266 = vadd.f32 %v198, %v212
  %v267 = vadd.f32 %v199, %v212
  %v268 = vadd.f32 %v200, %v212
  %v269 = vadd.f32 %v201, %v212
  %v270 = vadd.f32 %v202, %v212
  %v271 = vadd.f32 %v203, %v212
  %v272 = vadd.f32 %v204, %v212
  %v273 = vadd.f32 %v205, %v212
  %v274 = vadd.f32 %v206, %v212
  %v275 = vadd.f32 %v207, %v212
  %v276 = vadd.f32 %v208, %v212
  %v277 = vadd.f32 %v209, %v212
  %v278 = vmax.f32 %v214, 0.0
  %v279 = vmax.f32 %v215, 0.0
  %v280 = vmax.f32 %v216, 0.0
  %v281 = vmax.f32 %v217, 0.0
  %v282 = vmax.f32 %v218, 0.0
  %v283 = vmax.f32 %v219, 0.0
  %v284 = vmax.f32 %v220, 0.0
  %v285 = vmax.f32 %v221, 0.0
  %v286 = vmax.f32 %v222, 0.0
  %v287 = vmax.f32 %v223, 0.0
  %v288 = vmax.f32 %v224, 0.0
  %v289 = vmax.f32 %v225, 0.0
  %v290 = vmax.f32 %v226, 0.0
  %v291 = vmax.f32 %v227, 0.0
  %v292 = vmax.f32 %v228, 0.0
  %v293 = vmax.f32 %v229, 0.0
  %v294 = vmax.f32 %v230, 0.0
  %v295 = vmax.f32 %v231, 0.0
  %v296 = vmax.f32 %v232, 0.0
  %v297 = vmax.f32 %v233, 0.0
  %v298 = vmax.f32 %v234, 0.0
  %v299 = vmax.f32 %v235, 0.0
  %v300 = vmax.f32 %v236, 0.0
  %v301 = vmax.f32 %v237, 0.0
  %v302 = vmax.f32 %v238, 0.0
  %v303 = vmax.f32 %v239, 0.0
  %v304 = vmax.f32 %v240, 0.0
  %v305 = vmax.f32 %v241, 0.0
  %v306 = vmax.f32 %v242, 0.0
  %v307 = vmax.f32 %v243, 0.0
  %v308 = vmax.f32 %v244, 0.0
  %v309 = vmax.f32 %v245, 0.0
  %v310 = vmax.f32 %v246, 0.0
  %v311 = vmax.f32 %v247, 0.0
  %v312 = vmax.f32 %v248, 0.0
  %v313 = vmax.f32 %v249, 0.0
  %v314 = vmax.f32 %v250, 0.0
  %v315 = vmax.f32 %v251, 0.0
  %v316 = vmax.f32 %v252, 0.0
  %v317 = vmax.f32 %v253, 0.0
  %v318 = vmax.f32 %v254, 0.0
  %v319 = vmax.f32 %v255, 0.0
  %v320 = vmax.f32 %v256, 0.0
  %v321 = vmax.f32 %v257, 0.0
  %v322 = vmax.f32 %v258, 0.0
  %v323 = vmax.f32 %v259, 0.0
  %v324 = vmax.f32 %v260, 0.0
  %v325 = vmax.f32 %v261, 0.0
  %v326 = vmax.f32 %v262, 0.0
  %v327 = vmax.f32 %v263, 0.0
  %v328 = vmax.f32 %v264, 0.0
  %v329 = vmax.f32 %v265, 0.0
  %v330 = vmax.f32 %v266, 0.0
  %v331 = vmax.f32 %v267, 0.0
  %v332 = vmax.f32 %v268, 0.0
  %v333 = vmax.f32 %v269, 0.0
  %v334 = vmax.f32 %v270, 0.0
  %v335 = vmax.f32 %v271, 0.0
  %v336 = vmax.f32 %v272, 0.0
  %v337 = vmax.f32 %v273, 0.0
  %v338 = vmax.f32 %v274, 0.0
  %v339 = vmax.f32 %v275, 0.0
  %v340 = vmax.f32 %v276, 0.0
  %v341 = vmax.f32 %v277, 0.0
  %v342 = vpack.c.bf16 %v278, %v278
  %v343 = vpack.c.bf16 %v279, %v279
  %v344 = vpack.c.bf16 %v280, %v280
  %v345 = vpack.c.bf16 %v281, %v281
  %v346 = vpack.c.bf16 %v282, %v282
  %v347 = vpack.c.bf16 %v283, %v283
  %v348 = vpack.c.bf16 %v284, %v284
  %v349 = vpack.c.bf16 %v285, %v285
  %v350 = vpack.c.bf16 %v286, %v286
  %v351 = vpack.c.bf16 %v287, %v287
  %v352 = vpack.c.bf16 %v288, %v288
  %v353 = vpack.c.bf16 %v289, %v289
  %v354 = vpack.c.bf16 %v290, %v290
  %v355 = vpack.c.bf16 %v291, %v291
  %v356 = vpack.c.bf16 %v292, %v292
  %v357 = vpack.c.bf16 %v293, %v293
  %v358 = vpack.c.bf16 %v294, %v294
  %v359 = vpack.c.bf16 %v295, %v295
  %v360 = vpack.c.bf16 %v296, %v296
  %v361 = vpack.c.bf16 %v297, %v297
  %v362 = vpack.c.bf16 %v298, %v298
  %v363 = vpack.c.bf16 %v299, %v299
  %v364 = vpack.c.bf16 %v300, %v300
  %v365 = vpack.c.bf16 %v301, %v301
  %v366 = vpack.c.bf16 %v302, %v302
  %v367 = vpack.c.bf16 %v303, %v303
  %v368 = vpack.c.bf16 %v304, %v304
  %v369 = vpack.c.bf16 %v305, %v305
  %v370 = vpack.c.bf16 %v306, %v306
  %v371 = vpack.c.bf16 %v307, %v307
  %v372 = vpack.c.bf16 %v308, %v308
  %v373 = vpack.c.bf16 %v309, %v309
  %v374 = vpack.c.bf16 %v310, %v310
  %v375 = vpack.c.bf16 %v311, %v311
  %v376 = vpack.c.bf16 %v312, %v312
  %v377 = vpack.c.bf16 %v313, %v313
  %v378 = vpack.c.bf16 %v314, %v314
  %v379 = vpack.c.bf16 %v315, %v315
  %v380 = vpack.c.bf16 %v316, %v316
  %v381 = vpack.c.bf16 %v317, %v317
  %v382 = vpack.c.bf16 %v318, %v318
  %v383 = vpack.c.bf16 %v319, %v319
  %v384 = vpack.c.bf16 %v320, %v320
  %v385 = vpack.c.bf16 %v321, %v321
  %v386 = vpack.c.bf16 %v322, %v322
  %v387 = vpack.c.bf16 %v323, %v323
  %v388 = vpack.c.bf16 %v324, %v324
  %v389 = vpack.c.bf16 %v325, %v325
  %v390 = vpack.c.bf16 %v326, %v326
  %v391 = vpack.c.bf16 %v327, %v327
  %v392 = vpack.c.bf16 %v328, %v328
  %v393 = vpack.c.bf16 %v329, %v329
  %v394 = vpack.c.bf16 %v330, %v330
  %v395 = vpack.c.bf16 %v331, %v331
  %v396 = vpack.c.bf16 %v332, %v332
  %v397 = vpack.c.bf16 %v333, %v333
  %v398 = vpack.c.bf16 %v334, %v334
  %v399 = vpack.c.bf16 %v335, %v335
  %v400 = vpack.c.bf16 %v336, %v336
  %v401 = vpack.c.bf16 %v337, %v337
  %v402 = vpack.c.bf16 %v338, %v338
  %v403 = vpack.c.bf16 %v339, %v339
  %v404 = vpack.c.bf16 %v340, %v340
  %v405 = vpack.c.bf16 %v341, %v341
  %406 = vst [vmem:[%s3] sm:$0xf] %v342
  %407 = vst [vmem:[%s3 + $0x4] sm:$0xf] %v343
  %408 = vst [vmem:[%s3 + $0x8] sm:$0xf] %v344
  %409 = vst [vmem:[%s3 + $0xc] sm:$0xf] %v345
  %410 = vst [vmem:[%s3 + $0x10] sm:$0xf] %v346
  %411 = vst [vmem:[%s3 + $0x14] sm:$0xf] %v347
  %412 = vst [vmem:[%s3 + $0x18] sm:$0xf] %v348
  %413 = vst [vmem:[%s3 + $0x1c] sm:$0xf] %v349
  %414 = vst [vmem:[%s3 + $0x20] sm:$0xf] %v350
  %415 = vst [vmem:[%s3 + $0x24] sm:$0xf] %v351
  %416 = vst [vmem:[%s3 + $0x28] sm:$0xf] %v352
  %417 = vst [vmem:[%s3 + $0x2c] sm:$0xf] %v353
  %418 = vst [vmem:[%s3 + $0x30] sm:$0xf] %v354
  %419 = vst [vmem:[%s3 + $0x34] sm:$0xf] %v355
  %420 = vst [vmem:[%s3 + $0x38] sm:$0xf] %v356
  %421 = vst [vmem:[%s3 + $0x3c] sm:$0xf] %v357
  %422 = vst [vmem:[%s3 + $0x40] sm:$0xf] %v358
  %423 = vst [vmem:[%s3 + $0x44] sm:$0xf] %v359
  %424 = vst [vmem:[%s3 + $0x48] sm:$0xf] %v360
  %425 = vst [vmem:[%s3 + $0x4c] sm:$0xf] %v361
  %426 = vst [vmem:[%s3 + $0x50] sm:$0xf] %v362
  %427 = vst [vmem:[%s3 + $0x54] sm:$0xf] %v363
  %428 = vst [vmem:[%s3 + $0x58] sm:$0xf] %v364
  %429 = vst [vmem:[%s3 + $0x5c] sm:$0xf] %v365
  %430 = vst [vmem:[%s3 + $0x60] sm:$0xf] %v366
  %431 = vst [vmem:[%s3 + $0x64] sm:$0xf] %v367
  %432 = vst [vmem:[%s3 + $0x68] sm:$0xf] %v368
  %433 = vst [vmem:[%s3 + $0x6c] sm:$0xf] %v369
  %434 = vst [vmem:[%s3 + $0x70] sm:$0xf] %v370
  %435 = vst [vmem:[%s3 + $0x74] sm:$0xf] %v371
  %436 = vst [vmem:[%s3 + $0x78] sm:$0xf] %v372
  %437 = vst [vmem:[%s3 + $0x7c] sm:$0xf] %v373
  %438 = vst [vmem:[%s3 + $0x80] sm:$0xf] %v374
  %439 = vst [vmem:[%s3 + $0x84] sm:$0xf] %v375
  %440 = vst [vmem:[%s3 + $0x88] sm:$0xf] %v376
  %441 = vst [vmem:[%s3 + $0x8c] sm:$0xf] %v377
  %442 = vst [vmem:[%s3 + $0x90] sm:$0xf] %v378
  %443 = vst [vmem:[%s3 + $0x94] sm:$0xf] %v379
  %444 = vst [vmem:[%s3 + $0x98] sm:$0xf] %v380
  %445 = vst [vmem:[%s3 + $0x9c] sm:$0xf] %v381
  %446 = vst [vmem:[%s3 + $0xa0] sm:$0xf] %v382
  %447 = vst [vmem:[%s3 + $0xa4] sm:$0xf] %v383
  %448 = vst [vmem:[%s3 + $0xa8] sm:$0xf] %v384
  %449 = vst [vmem:[%s3 + $0xac] sm:$0xf] %v385
  %450 = vst [vmem:[%s3 + $0xb0] sm:$0xf] %v386
  %451 = vst [vmem:[%s3 + $0xb4] sm:$0xf] %v387
  %452 = vst [vmem:[%s3 + $0xb8] sm:$0xf] %v388
  %453 = vst [vmem:[%s3 + $0xbc] sm:$0xf] %v389
  %454 = vst [vmem:[%s3 + $0xc0] sm:$0xf] %v390
  %455 = vst [vmem:[%s3 + $0xc4] sm:$0xf] %v391
  %456 = vst [vmem:[%s3 + $0xc8] sm:$0xf] %v392
  %457 = vst [vmem:[%s3 + $0xcc] sm:$0xf] %v393
  %458 = vst [vmem:[%s3 + $0xd0] sm:$0xf] %v394
  %459 = vst [vmem:[%s3 + $0xd4] sm:$0xf] %v395
  %460 = vst [vmem:[%s3 + $0xd8] sm:$0xf] %v396
  %461 = vst [vmem:[%s3 + $0xdc] sm:$0xf] %v397
  %462 = vst [vmem:[%s3 + $0xe0] sm:$0xf] %v398
  %463 = vst [vmem:[%s3 + $0xe4] sm:$0xf] %v399
  %464 = vst [vmem:[%s3 + $0xe8] sm:$0xf] %v400
  %465 = vst [vmem:[%s3 + $0xec] sm:$0xf] %v401
  %466 = vst [vmem:[%s3 + $0xf0] sm:$0xf] %v402
  %467 = vst [vmem:[%s3 + $0xf4] sm:$0xf] %v403
  %468 = vst [vmem:[%s3 + $0xf8] sm:$0xf] %v404
  %469 = vst [vmem:[%s3 + $0xfc] sm:$0xf] %v405
  // Predicated region
  $region14: #{basic_block_forward.5} parent=0 // pred_check
    _
  $region15: #{basic_block_forward.5} parent=0 // pred_check_branch
    %471 = sbr.rel (0) target = $region17
  $region16: #{basic_block_forward.5} parent=0 // pred_region
    _
  $region17: #{basic_block_forward.5} parent=0 // pred_fallthru
    _
  // Predicated region
  $region18: #{basic_block_forward.5} parent=0 // pred_check
    _
  $region19: #{basic_block_forward.5} parent=0 // pred_check_branch
    %473 = sbr.rel (0) target = $region21
  $region20: #{basic_block_forward.5} parent=0 // pred_region
    _
  $region21: #{basic_block_forward.5} parent=0 // pred_fallthru
    _

// kernel: basic_block_forward.4
$region0: #{basic_block_forward.4}
  #allocation0 [shape = 'u32[]', space=smem, size = 0x4, offset = 0x4, fixed_abs, tag = 'smem constant byte address 0x4 - core index']
  #allocation1 [shape = 'u32[72,128]{1,0:T(1,128)}', space=vmem, size = 0x9000, scoped, tag = 'internal scratch']
  %s0 = inlined_call_operand.vmem [shape: bf16[2,18,18,4], index: 0, kind: input, shape index: {}, may-alias: {0,1,2}]
  %s1 = inlined_call_operand.vmem [shape: bf16[2,18,18,4], index: 1, kind: input, shape index: {}, may-alias: {0,1,2}]
  %s2 = inlined_call_operand.vmem [shape: bf16[2,18,18,4], index: 2, kind: input, shape index: {}, may-alias: {0,1,2}]
  %s3 = inlined_call_operand.vmem [shape: bf16[36,128], index: 3, kind: input, shape index: {}]
  %s4 = inlined_call_operand.vmem [shape: f32[1,128], index: 4, kind: input, shape index: {}]
  %s5 = inlined_call_operand.vmem [shape: bf16[2,16,16,128], index: 5, kind: output, shape index: {0}]
  %s6 = inlined_call_operand.vmem [shape: f32[2,1,2,128], index: 6, kind: output, shape index: {1}]
  %7 = xla_tuple %s5, %s6
  %s8 = sld [smem:[#allocation0]]
  $region61: #{basic_block_forward.4} parent=0
    _
  %s10 = ssub.s32 1, %s8
  %s11 = scalar_select 0, %s10, %s8
  loop: start=0, step=1, limit=4
  $region2: #{basic_block_forward.4} parent=0 // loop_pre_header
    _
  $region3: #{basic_block_forward.4} parent=0 // loop_header
    %s13 = sphi 0, %s17
    %p14 = scmp.ge.s32.totalorder %s13, 4
    %s20 = sphi 0, %s32
    %s21 = sphi 0, %s28
    %s22 = sphi 0, %s20
    %s23 = sphi 0, %s21
    %s24 = sphi 0, %s22
    %s25 = sphi 0, %s23
    %s37 = sphi 0, %s39
    %s40 = sphi 0, %s37
    %s41 = sphi 0, %s40
    %s57 = sphi 0, %s41
    %s69 = sphi 0, %s71
    %s72 = sphi 0, %s69
    %s73 = sphi 0, %s72
    %s89 = sphi 0, %s73
    %s101 = sphi 0, %s103
    %s104 = sphi 0, %s101
    %s105 = sphi 0, %s104
    %s121 = sphi 0, %s105
    %s125 = sphi 0, %s125
    %s127 = sphi 0, %s125
    %s128 = sphi 0, %s127
    %s142 = sphi 0, %s128
    %s146 = sphi 0, %s146
    %s148 = sphi 0, %s146
    %s149 = sphi 0, %s148
    %s163 = sphi 0, %s149
    %s171 = sphi 0, %s173
    %s174 = sphi 0, %s171
    %s175 = sphi 0, %s174
    %s191 = sphi 0, %s175
    %s199 = sphi 0, %s201
    %s202 = sphi 0, %s199
    %s203 = sphi 0, %s202
    %s219 = sphi 0, %s203
  $region4: #{basic_block_forward.4} parent=0 // loop_header_branch
    %16 = sbr.rel (%p14) target = $region8
  $region5: #{basic_block_forward.4} parent=0 // loop_body
    %s18 = ssub.s32 %s13, 1
    %s19 = ssub.s32 %s13, 2
    %s26 = sadd.s32 1, %s21
    %p27 = scmp.ge.s32.totalorder %s26, 1
    %s28 = scalar_select %p27, 0, %s26
    %s29 = sadd.s32 1, %s20
    %s30 = scalar_select %p27, %s29, %s20
    %p31 = scmp.ge.s32.totalorder %s30, 2
    %s32 = scalar_select %p31, 0, %s30
    %s33 = ssub.s32 %s20, %s32
    %s34 = ssub.s32 %s21, %s28
    %s35 = sor.u32 %s33, %s34
    %p36 = scmp.eq.s32.totalorder %s35, 0
    %s38 = sadd.s32 %s37, 1
    %s39 = scalar_select %p36, %s37, %s38
    %p42 = pneg %p36
    %p43 = scmp.eq.s32.totalorder %s13, 1
    %p44 = por %p42, %p43
    %p45 = scmp.ne.s32.totalorder %s37, %s40
    %p46 = scmp.eq.s32.totalorder %s13, 0
    %p47 = por %p45, %p46
    %p48 = scmp.ne.s32.totalorder %s37, %s40
    %p49 = scmp.eq.s32.totalorder %s18, 1
    %p50 = por %p48, %p49
    %p51 = scmp.ne.s32.totalorder %s40, %s41
    %p52 = scmp.eq.s32.totalorder %s18, 0
    %p53 = por %p51, %p52
    %p54 = scmp.ne.s32.totalorder %s40, %s41
    %p55 = scmp.eq.s32.totalorder %s19, 1
    %p56 = por %p54, %p55
    %p58 = scmp.ne.s32.totalorder %s41, %s57
    %p59 = scmp.eq.s32.totalorder %s19, 0
    %p60 = por %p58, %p59
    %s61 = smul.u32 %s21, 16
    %s62 = sadd.s32 %s61, 16
    %s63 = smul.u32 %s28, 16
    %s64 = sadd.s32 %s63, 16
    %s65 = ssub.s32 %s20, %s32
    %s66 = ssub.s32 %s62, %s64
    %s67 = sor.u32 %s65, %s66
    %p68 = scmp.eq.s32.totalorder %s67, 0
    %s70 = sadd.s32 %s69, 1
    %s71 = scalar_select %p68, %s69, %s70
    %p74 = pneg %p68
    %p75 = scmp.eq.s32.totalorder %s13, 1
    %p76 = por %p74, %p75
    %p77 = scmp.ne.s32.totalorder %s69, %s72
    %p78 = scmp.eq.s32.totalorder %s13, 0
    %p79 = por %p77, %p78
    %p80 = scmp.ne.s32.totalorder %s69, %s72
    %p81 = scmp.eq.s32.totalorder %s18, 1
    %p82 = por %p80, %p81
    %p83 = scmp.ne.s32.totalorder %s72, %s73
    %p84 = scmp.eq.s32.totalorder %s18, 0
    %p85 = por %p83, %p84
    %p86 = scmp.ne.s32.totalorder %s72, %s73
    %p87 = scmp.eq.s32.totalorder %s19, 1
    %p88 = por %p86, %p87
    %p90 = scmp.ne.s32.totalorder %s73, %s89
    %p91 = scmp.eq.s32.totalorder %s19, 0
    %p92 = por %p90, %p91
    %s93 = smul.u32 %s21, 16
    %s94 = sadd.s32 %s93, 17
    %s95 = smul.u32 %s28, 16
    %s96 = sadd.s32 %s95, 17
    %s97 = ssub.s32 %s20, %s32
    %s98 = ssub.s32 %s94, %s96
    %s99 = sor.u32 %s97, %s98
    %p100 = scmp.eq.s32.totalorder %s99, 0
    %s102 = sadd.s32 %s101, 1
    %s103 = scalar_select %p100, %s101, %s102
    %p106 = pneg %p100
    %p107 = scmp.eq.s32.totalorder %s13, 1
    %p108 = por %p106, %p107
    %p109 = scmp.ne.s32.totalorder %s101, %s104
    %p110 = scmp.eq.s32.totalorder %s13, 0
    %p111 = por %p109, %p110
    %p112 = scmp.ne.s32.totalorder %s101, %s104
    %p113 = scmp.eq.s32.totalorder %s18, 1
    %p114 = por %p112, %p113
    %p115 = scmp.ne.s32.totalorder %s104, %s105
    %p116 = scmp.eq.s32.totalorder %s18, 0
    %p117 = por %p115, %p116
    %p118 = scmp.ne.s32.totalorder %s104, %s105
    %p119 = scmp.eq.s32.totalorder %s19, 1
    %p120 = por %p118, %p119
    %p122 = scmp.ne.s32.totalorder %s105, %s121
    %p123 = scmp.eq.s32.totalorder %s19, 0
    %p124 = por %p122, %p123
    %s126 = sadd.s32 %s125, 1
    %p129 = scmp.eq.s32.totalorder %s13, 1
    %p130 = scmp.ne.s32.totalorder %s125, %s127
    %p131 = scmp.eq.s32.totalorder %s13, 0
    %p132 = por %p130, %p131
    %p133 = scmp.ne.s32.totalorder %s125, %s127
    %p134 = scmp.eq.s32.totalorder %s18, 1
    %p135 = por %p133, %p134
    %p136 = scmp.ne.s32.totalorder %s127, %s128
    %p137 = scmp.eq.s32.totalorder %s18, 0
    %p138 = por %p136, %p137
    %p139 = scmp.ne.s32.totalorder %s127, %s128
    %p140 = scmp.eq.s32.totalorder %s19, 1
    %p141 = por %p139, %p140
    %p143 = scmp.ne.s32.totalorder %s128, %s142
    %p144 = scmp.eq.s32.totalorder %s19, 0
    %p145 = por %p143, %p144
    %s147 = sadd.s32 %s146, 1
    %p150 = scmp.eq.s32.totalorder %s13, 1
    %p151 = scmp.ne.s32.totalorder %s146, %s148
    %p152 = scmp.eq.s32.totalorder %s13, 0
    %p153 = por %p151, %p152
    %p154 = scmp.ne.s32.totalorder %s146, %s148
    %p155 = scmp.eq.s32.totalorder %s18, 1
    %p156 = por %p154, %p155
    %p157 = scmp.ne.s32.totalorder %s148, %s149
    %p158 = scmp.eq.s32.totalorder %s18, 0
    %p159 = por %p157, %p158
    %p160 = scmp.ne.s32.totalorder %s148, %s149
    %p161 = scmp.eq.s32.totalorder %s19, 1
    %p162 = por %p160, %p161
    %p164 = scmp.ne.s32.totalorder %s149, %s163
    %p165 = scmp.eq.s32.totalorder %s19, 0
    %p166 = por %p164, %p165
    %s167 = ssub.s32 %s20, %s32
    %s168 = ssub.s32 %s21, %s28
    %s169 = sor.u32 %s167, %s168
    %p170 = scmp.eq.s32.totalorder %s169, 0
    %s172 = sadd.s32 %s171, 1
    %s173 = scalar_select %p170, %s171, %s172
    %p176 = pneg %p170
    %p177 = scmp.eq.s32.totalorder %s13, 1
    %p178 = por %p176, %p177
    %p179 = scmp.ne.s32.totalorder %s171, %s174
    %p180 = scmp.eq.s32.totalorder %s13, 0
    %p181 = por %p179, %p180
    %p182 = scmp.ne.s32.totalorder %s171, %s174
    %p183 = scmp.eq.s32.totalorder %s18, 1
    %p184 = por %p182, %p183
    %p185 = scmp.ne.s32.totalorder %s174, %s175
    %p186 = scmp.eq.s32.totalorder %s18, 0
    %p187 = por %p185, %p186
    %p188 = scmp.ne.s32.totalorder %s174, %s175
    %p189 = scmp.eq.s32.totalorder %s19, 1
    %p190 = por %p188, %p189
    %p192 = scmp.ne.s32.totalorder %s175, %s191
    %p193 = scmp.eq.s32.totalorder %s19, 0
    %p194 = por %p192, %p193
    %s195 = ssub.s32 %s20, %s32
    %s196 = ssub.s32 %s21, %s28
    %s197 = sor.u32 %s195, %s196
    %p198 = scmp.eq.s32.totalorder %s197, 0
    %s200 = sadd.s32 %s199, 1
    %s201 = scalar_select %p198, %s199, %s200
    %p204 = pneg %p198
    %p205 = scmp.eq.s32.totalorder %s13, 1
    %p206 = por %p204, %p205
    %p207 = scmp.ne.s32.totalorder %s199, %s202
    %p208 = scmp.eq.s32.totalorder %s13, 0
    %p209 = por %p207, %p208
    %p210 = scmp.ne.s32.totalorder %s199, %s202
    %p211 = scmp.eq.s32.totalorder %s18, 1
    %p212 = por %p210, %p211
    %p213 = scmp.ne.s32.totalorder %s202, %s203
    %p214 = scmp.eq.s32.totalorder %s18, 0
    %p215 = por %p213, %p214
    %p216 = scmp.ne.s32.totalorder %s202, %s203
    %p217 = scmp.eq.s32.totalorder %s19, 1
    %p218 = por %p216, %p217
    %p220 = scmp.ne.s32.totalorder %s203, %s219
    %p221 = scmp.eq.s32.totalorder %s19, 0
    %p222 = por %p220, %p221
    %p223 = scmp.le.s32.totalorder 1, %s13
    %p224 = scmp.lt.s32.totalorder %s13, 3
    %p225 = pnand %p223, %p224
    %p226 = pneg %p225
    // Predicated region
    $region9: #{basic_block_forward.4} parent=5 // pred_check
      _
    $region10: #{basic_block_forward.4} parent=5 // pred_check_branch
      %228 = sbr.rel (%p225) target = $region12
    $region11: #{basic_block_forward.4} parent=5 // pred_region
      %s229 = ssub.s32 %s13, 1
      // Predicated region
      $region13: #{basic_block_forward.4} parent=11 // pred_check
        %p230 = pneg %p138
      $region14: #{basic_block_forward.4} parent=11 // pred_check_branch
        %232 = sbr.rel (%p230) target = $region16
      $region15: #{basic_block_forward.4} parent=11 // pred_region
        _
      $region16: #{basic_block_forward.4} parent=11 // pred_fallthru
        _
      // Predicated region
      $region17: #{basic_block_forward.4} parent=11 // pred_check
        %p233 = pneg %p159
      $region18: #{basic_block_forward.4} parent=11 // pred_check_branch
        %235 = sbr.rel (%p233) target = $region20
      $region19: #{basic_block_forward.4} parent=11 // pred_region
        _
      $region20: #{basic_block_forward.4} parent=11 // pred_fallthru
        _
    $region12: #{basic_block_forward.4} parent=5 // pred_fallthru
      _
    %p236 = scmp.lt.s32.totalorder %s13, 2
    // Predicated region
    $region21: #{basic_block_forward.4} parent=5 // pred_check
      %p237 = pneg %p236
    $region22: #{basic_block_forward.4} parent=5 // pred_check_branch
      %239 = sbr.rel (%p237) target = $region24
    $region23: #{basic_block_forward.4} parent=5 // pred_region
      // Predicated region
      $region25: #{basic_block_forward.4} parent=23 // pred_check
        %p240 = pneg %p47
      $region26: #{basic_block_forward.4} parent=23 // pred_check_branch
        %242 = sbr.rel (%p240) target = $region28
      $region27: #{basic_block_forward.4} parent=23 // pred_region
        %s243 = smul.u32 16, %s21
        %s244 = ssub.s32 18, %s243
        %p245 = scmp.lt.s32.totalorder %s244, 16
        %s246 = scalar_select %p245, %s244, 16
        %s247 = smul.u32 4, %s246
        %s248 = smul.u32 %s247, 3
        %p249 = scmp.lt.s32.totalorder %s20, 1
        %s250 = scalar_select %p249, %s20, 1
        %p251 = scmp.lt.s32.totalorder %s243, 17
        %s252 = scalar_select %p251, %s243, 17
        %s253 = smul.addr %s252, 3
        %s254 = smul.addr %s250, 54
        %s255 = sadd.s32 %s253, %s254
        %s256 = smul.addr %s255, 4
        %s257 = scalar_lea.vmem %s0, %s256
        %s258 = smul.u32 16, %s21
        %s259 = ssub.s32 18, %s258
        %p260 = scmp.lt.s32.totalorder %s259, 16
        %s261 = scalar_select %p260, %s259, 16
        %s262 = smul.u32 4, %s261
        %s263 = smul.u32 %s262, 3
      $region28: #{basic_block_forward.4} parent=23 // pred_fallthru
        _
      // Predicated region
      $region29: #{basic_block_forward.4} parent=23 // pred_check
        %p264 = pneg %p79
      $region30: #{basic_block_forward.4} parent=23 // pred_check_branch
        %266 = sbr.rel (%p264) target = $region32
      $region31: #{basic_block_forward.4} parent=23 // pred_region
        %s267 = smul.u32 %s21, 16
        %s268 = sadd.s32 %s267, 16
        %p269 = scmp.lt.s32.totalorder %s20, 1
        %s270 = scalar_select %p269, %s20, 1
        %p271 = scmp.lt.s32.totalorder %s268, 17
        %s272 = scalar_select %p271, %s268, 17
        %s273 = smul.addr %s272, 3
        %s274 = smul.addr %s270, 54
        %s275 = sadd.s32 %s273, %s274
        %s276 = smul.addr %s275, 4
        %s277 = scalar_lea.vmem %s1, %s276
        %s278 = smul.u32 %s21, 16
        %s279 = sadd.s32 %s278, 16
      $region32: #{basic_block_forward.4} parent=23 // pred_fallthru
        _
      // Predicated region
      $region33: #{basic_block_forward.4} parent=23 // pred_check
        %p280 = pneg %p111
      $region34: #{basic_block_forward.4} parent=23 // pred_check_branch
        %282 = sbr.rel (%p280) target = $region36
      $region35: #{basic_block_forward.4} parent=23 // pred_region
        %s283 = smul.u32 %s21, 16
        %s284 = sadd.s32 %s283, 17
        %p285 = scmp.lt.s32.totalorder %s20, 1
        %s286 = scalar_select %p285, %s20, 1
        %p287 = scmp.lt.s32.totalorder %s284, 17
        %s288 = scalar_select %p287, %s284, 17
        %s289 = smul.addr %s288, 3
        %s290 = smul.addr %s286, 54
        %s291 = sadd.s32 %s289, %s290
        %s292 = smul.addr %s291, 4
        %s293 = scalar_lea.vmem %s2, %s292
        %s294 = smul.u32 %s21, 16
        %s295 = sadd.s32 %s294, 17
      $region36: #{basic_block_forward.4} parent=23 // pred_fallthru
        _
    $region24: #{basic_block_forward.4} parent=5 // pred_fallthru
      _
    %p296 = scmp.le.s32.totalorder 1, %s13
    %p297 = scmp.lt.s32.totalorder %s13, 3
    %p298 = pnand %p296, %p297
    %p299 = pneg %p298
    // Predicated region
    $region37: #{basic_block_forward.4} parent=5 // pred_check
      _
    $region38: #{basic_block_forward.4} parent=5 // pred_check_branch
      %301 = sbr.rel (%p298) target = $region40
    $region39: #{basic_block_forward.4} parent=5 // pred_region
      %s302 = ssub.s32 %s13, 1
      %s303 = smul.u32 16, %s23
      %s304 = ssub.s32 18, %s303
      %p305 = scmp.lt.s32.totalorder %s304, 16
      %s306 = scalar_select %p305, %s304, 16
      %s307 = smul.u32 4, %s306
      %s308 = smul.u32 %s307, 3
      %p309 = scmp.lt.s32.totalorder %s22, 1
      %s310 = scalar_select %p309, %s22, 1
      %p311 = scmp.lt.s32.totalorder %s303, 17
      %s312 = scalar_select %p311, %s303, 17
      %s313 = smul.addr %s312, 3
      %s314 = smul.addr %s310, 54
      %s315 = sadd.s32 %s313, %s314
      %s316 = smul.addr %s315, 4
      %s317 = scalar_lea.vmem %s0, %s316
      %p318 = pneg %p53
      %p319 = pneg %p50
      %s320 = smul.u32 %s23, 16
      %s321 = sadd.s32 %s320, 16
      %p322 = scmp.lt.s32.totalorder %s22, 1
      %s323 = scalar_select %p322, %s22, 1
      %p324 = scmp.lt.s32.totalorder %s321, 17
      %s325 = scalar_select %p324, %s321, 17
      %s326 = smul.addr %s325, 3
      %s327 = smul.addr %s323, 54
      %s328 = sadd.s32 %s326, %s327
      %s329 = smul.addr %s328, 4
      %s330 = scalar_lea.vmem %s1, %s329
      %p331 = pneg %p85
      %p332 = pneg %p82
      %s333 = smul.u32 %s23, 16
      %s334 = sadd.s32 %s333, 17
      %p335 = scmp.lt.s32.totalorder %s22, 1
      %s336 = scalar_select %p335, %s22, 1
      %p337 = scmp.lt.s32.totalorder %s334, 17
      %s338 = scalar_select %p337, %s334, 17
      %s339 = smul.addr %s338, 3
      %s340 = smul.addr %s336, 54
      %s341 = sadd.s32 %s339, %s340
      %s342 = smul.addr %s341, 4
      %s343 = scalar_lea.vmem %s2, %s342
      %p344 = pneg %p117
      %p345 = pneg %p114
      %p346 = pneg %p138
      %p347 = pneg %p135
      %p348 = pneg %p159
      %p349 = pneg %p156
      %p350 = pneg %p187
      %p351 = pneg %p184
      %s352 = smul.u32 16, %s23
      %p353 = scmp.lt.s32.totalorder %s22, 1
      %s354 = scalar_select %p353, %s22, 1
      %p355 = scmp.lt.s32.totalorder %s352, 15
      %s356 = scalar_select %p355, %s352, 15
      %s357 = smul.addr %s356, 2
      %s358 = smul.addr %s354, 32
      %s359 = sadd.s32 %s357, %s358
      %s360 = smul.addr %s359, 4
      %s361 = scalar_lea.vmem %s5, %s360
      %p362 = pneg %p215
      %p363 = pneg %p212
      %p364 = scmp.lt.s32.totalorder %s22, 1
      %s365 = scalar_select %p364, %s22, 1
      %p366 = scmp.lt.s32.totalorder %s23, 0
      %s367 = scalar_select %p366, %s23, 0
      %s368 = sadd.s32 %s367, %s365
      %s369 = smul.addr %s368, 2
      %s370 = scalar_lea.vmem %s6, %s369
      %s371 = smul.u32 16, %s23
      %s372 = ssub.s32 18, %s371
      %p373 = scmp.lt.s32.totalorder %s372, 16
      %s374 = scalar_select %p373, %s372, 16
      %s375 = smul.u32 4, %s374
      %s376 = smul.u32 %s375, 3
      %p377 = scmp.lt.s32.totalorder %s22, 1
      %s378 = scalar_select %p377, %s22, 1
      %p379 = scmp.lt.s32.totalorder %s371, 17
      %s380 = scalar_select %p379, %s371, 17
      %s381 = smul.addr %s380, 3
      %s382 = smul.addr %s378, 54
      %s383 = sadd.s32 %s381, %s382
      %s384 = smul.addr %s383, 4
      %s385 = scalar_lea.vmem %s0, %s384
      %s386 = smul.u32 16, %s23
      %s387 = ssub.s32 18, %s386
      %p388 = scmp.lt.s32.totalorder %s387, 16
      %s389 = scalar_select %p388, %s387, 16
      %s390 = smul.u32 4, %s389
      %s391 = smul.u32 %s390, 3
      %s392 = smul.u32 %s23, 16
      %s393 = sadd.s32 %s392, 16
      %p394 = scmp.lt.s32.totalorder %s22, 1
      %s395 = scalar_select %p394, %s22, 1
      %p396 = scmp.lt.s32.totalorder %s393, 17
      %s397 = scalar_select %p396, %s393, 17
      %s398 = smul.addr %s397, 3
      %s399 = smul.addr %s395, 54
      %s400 = sadd.s32 %s398, %s399
      %s401 = smul.addr %s400, 4
      %s402 = scalar_lea.vmem %s1, %s401
      %s403 = smul.u32 %s23, 16
      %s404 = sadd.s32 %s403, 16
      %s405 = smul.u32 %s23, 16
      %s406 = sadd.s32 %s405, 17
      %p407 = scmp.lt.s32.totalorder %s22, 1
      %s408 = scalar_select %p407, %s22, 1
      %p409 = scmp.lt.s32.totalorder %s406, 17
      %s410 = scalar_select %p409, %s406, 17
      %s411 = smul.addr %s410, 3
      %s412 = smul.addr %s408, 54
      %s413 = sadd.s32 %s411, %s412
      %s414 = smul.addr %s413, 4
      %s415 = scalar_lea.vmem %s2, %s414
      %s416 = smul.u32 %s23, 16
      %s417 = sadd.s32 %s416, 17
      %s418 = smul.u32 16, %s23
      %p419 = scmp.lt.s32.totalorder %s22, 1
      %s420 = scalar_select %p419, %s22, 1
      %p421 = scmp.lt.s32.totalorder %s418, 15
      %s422 = scalar_select %p421, %s418, 15
      %s423 = smul.addr %s422, 2
      %s424 = smul.addr %s420, 32
      %s425 = sadd.s32 %s423, %s424
      %s426 = smul.addr %s425, 4
      %s427 = scalar_lea.vmem %s5, %s426
      %s428 = smul.u32 16, %s23
      %p429 = scmp.lt.s32.totalorder %s22, 1
      %s430 = scalar_select %p429, %s22, 1
      %p431 = scmp.lt.s32.totalorder %s23, 0
      %s432 = scalar_select %p431, %s23, 0
      %s433 = sadd.s32 %s432, %s430
      %s434 = smul.addr %s433, 2
      %s435 = scalar_lea.vmem %s6, %s434
      %v437 = vld [vmem:[%s385] sm:$0xf]
      %v438 = vld [vmem:[%s385 + $0x4] sm:$0xf]
      %v439 = vld [vmem:[%s385 + $0x8] sm:$0x1]
      %v440 = vld [vmem:[%s385 + $0xc] sm:$0xf]
      %v441 = vld [vmem:[%s385 + $0x10] sm:$0xf]
      %v442 = vld [vmem:[%s385 + $0x14] sm:$0x1]
      %v443 = vld [vmem:[%s385 + $0x18] sm:$0xf]
      %v444 = vld [vmem:[%s385 + $0x1c] sm:$0xf]
      %v445 = vld [vmem:[%s385 + $0x20] sm:$0x1]
      %v446 = vld [vmem:[%s385 + $0x24] sm:$0xf]
      %v447 = vld [vmem:[%s385 + $0x28] sm:$0xf]
      %v448 = vld [vmem:[%s385 + $0x2c] sm:$0x1]
      %v449 = vld [vmem:[%s385 + $0x30] sm:$0xf]
      %v450 = vld [vmem:[%s385 + $0x34] sm:$0xf]
      %v451 = vld [vmem:[%s385 + $0x38] sm:$0x1]
      %v452 = vld [vmem:[%s385 + $0x3c] sm:$0xf]
      %v453 = vld [vmem:[%s385 + $0x40] sm:$0xf]
      %v454 = vld [vmem:[%s385 + $0x44] sm:$0x1]
      %v455 = vld [vmem:[%s385 + $0x48] sm:$0xf]
      %v456 = vld [vmem:[%s385 + $0x4c] sm:$0xf]
      %v457 = vld [vmem:[%s385 + $0x50] sm:$0x1]
      %v458 = vld [vmem:[%s385 + $0x54] sm:$0xf]
      %v459 = vld [vmem:[%s385 + $0x58] sm:$0xf]
      %v460 = vld [vmem:[%s385 + $0x5c] sm:$0x1]
      %v461 = vld [vmem:[%s385 + $0x60] sm:$0xf]
      %v462 = vld [vmem:[%s385 + $0x64] sm:$0xf]
      %v463 = vld [vmem:[%s385 + $0x68] sm:$0x1]
      %v464 = vld [vmem:[%s385 + $0x6c] sm:$0xf]
      %v465 = vld [vmem:[%s385 + $0x70] sm:$0xf]
      %v466 = vld [vmem:[%s385 + $0x74] sm:$0x1]
      %v467 = vld [vmem:[%s385 + $0x78] sm:$0xf]
      %v468 = vld [vmem:[%s385 + $0x7c] sm:$0xf]
      %v469 = vld [vmem:[%s385 + $0x80] sm:$0x1]
      %v470 = vld [vmem:[%s385 + $0x84] sm:$0xf]
      %v471 = vld [vmem:[%s385 + $0x88] sm:$0xf]
      %v472 = vld [vmem:[%s385 + $0x8c] sm:$0x1]
      %v473 = vld [vmem:[%s385 + $0x90] sm:$0xf]
      %v474 = vld [vmem:[%s385 + $0x94] sm:$0xf]
      %v475 = vld [vmem:[%s385 + $0x98] sm:$0x1]
      %v476 = vld [vmem:[%s385 + $0x9c] sm:$0xf]
      %v477 = vld [vmem:[%s385 + $0xa0] sm:$0xf]
      %v478 = vld [vmem:[%s385 + $0xa4] sm:$0x1]
      %v479 = vld [vmem:[%s385 + $0xa8] sm:$0xf]
      %v480 = vld [vmem:[%s385 + $0xac] sm:$0xf]
      %v481 = vld [vmem:[%s385 + $0xb0] sm:$0x1]
      %v482 = vld [vmem:[%s385 + $0xb4] sm:$0xf]
      %v483 = vld [vmem:[%s385 + $0xb8] sm:$0xf]
      %v484 = vld [vmem:[%s385 + $0xbc] sm:$0x1]
      %v485 = vld [vmem:[%s402] sm:$0xf]
      %v486 = vld [vmem:[%s402 + $0x4] sm:$0xf]
      %v487 = vld [vmem:[%s402 + $0x8] sm:$0x1]
      %v488 = vld [vmem:[%s415] sm:$0xf]
      %v489 = vld [vmem:[%s415 + $0x4] sm:$0xf]
      %v490 = vld [vmem:[%s415 + $0x8] sm:$0x1]
      %v523 = vunpack.c.l.b16 %v437
      %v524 = vunpack.c.l.b16 %v438
      %v525 = vunpack.c.l.b16 %v440
      %v526 = vunpack.c.l.b16 %v441
      %v527 = vunpack.c.l.b16 %v443
      %v528 = vunpack.c.l.b16 %v444
      %v529 = vunpack.c.l.b16 %v446
      %v530 = vunpack.c.l.b16 %v447
      %v531 = vunpack.c.l.b16 %v449
      %v532 = vunpack.c.l.b16 %v450
      %v533 = vunpack.c.l.b16 %v452
      %v534 = vunpack.c.l.b16 %v453
      %v535 = vunpack.c.l.b16 %v455
      %v536 = vunpack.c.l.b16 %v456
      %v537 = vunpack.c.l.b16 %v458
      %v538 = vunpack.c.l.b16 %v459
      %v539 = vunpack.c.l.b16 %v461
      %v540 = vunpack.c.l.b16 %v462
      %v541 = vunpack.c.l.b16 %v464
      %v542 = vunpack.c.l.b16 %v465
      %v543 = vunpack.c.l.b16 %v467
      %v544 = vunpack.c.l.b16 %v468
      %v545 = vunpack.c.l.b16 %v470
      %v546 = vunpack.c.l.b16 %v471
      %v547 = vunpack.c.l.b16 %v473
      %v548 = vunpack.c.l.b16 %v474
      %v549 = vunpack.c.l.b16 %v476
      %v550 = vunpack.c.l.b16 %v477
      %v551 = vunpack.c.l.b16 %v479
      %v552 = vunpack.c.l.b16 %v480
      %v553 = vunpack.c.l.b16 %v482
      %v554 = vunpack.c.l.b16 %v483
      %v555 = vpack.c.b16 %v524, %v523
      %v556 = vpack.c.b16 %v526, %v525
      %v557 = vpack.c.b16 %v528, %v527
      %v558 = vpack.c.b16 %v530, %v529
      %v559 = vpack.c.b16 %v532, %v531
      %v560 = vpack.c.b16 %v534, %v533
      %v561 = vpack.c.b16 %v536, %v535
      %v562 = vpack.c.b16 %v538, %v537
      %v563 = vpack.c.b16 %v540, %v539
      %v564 = vpack.c.b16 %v542, %v541
      %v565 = vpack.c.b16 %v544, %v543
      %v566 = vpack.c.b16 %v546, %v545
      %v567 = vpack.c.b16 %v548, %v547
      %v568 = vpack.c.b16 %v550, %v549
      %v569 = vpack.c.b16 %v552, %v551
      %v570 = vpack.c.b16 %v554, %v553
      %v587 = vunpack.c.l.b16 %v439
      %v588 = vunpack.c.l.b16 %v442
      %v589 = vunpack.c.l.b16 %v445
      %v590 = vunpack.c.l.b16 %v448
      %v591 = vunpack.c.l.b16 %v451
      %v592 = vunpack.c.l.b16 %v454
      %v593 = vunpack.c.l.b16 %v457
      %v594 = vunpack.c.l.b16 %v460
      %v595 = vunpack.c.l.b16 %v463
      %v596 = vunpack.c.l.b16 %v466
      %v597 = vunpack.c.l.b16 %v469
      %v598 = vunpack.c.l.b16 %v472
      %v599 = vunpack.c.l.b16 %v475
      %v600 = vunpack.c.l.b16 %v478
      %v601 = vunpack.c.l.b16 %v481
      %v602 = vunpack.c.l.b16 %v484
      %v603 = vpack.c.b16 %v587, %v587
      %v604 = vpack.c.b16 %v588, %v588
      %v605 = vpack.c.b16 %v589, %v589
      %v606 = vpack.c.b16 %v590, %v590
      %v607 = vpack.c.b16 %v591, %v591
      %v608 = vpack.c.b16 %v592, %v592
      %v609 = vpack.c.b16 %v593, %v593
      %v610 = vpack.c.b16 %v594, %v594
      %v611 = vpack.c.b16 %v595, %v595
      %v612 = vpack.c.b16 %v596, %v596
      %v613 = vpack.c.b16 %v597, %v597
      %v614 = vpack.c.b16 %v598, %v598
      %v615 = vpack.c.b16 %v599, %v599
      %v616 = vpack.c.b16 %v600, %v600
      %v617 = vpack.c.b16 %v601, %v601
      %v618 = vpack.c.b16 %v602, %v602
      %vm619 = vsmask.f32 7424
      %v621 = vshrl.u32 %v555, 16
      %v623 = vshll.u32 %v555, 16
      %v625 = vrot.slane %v623, 1
      %v626 = vor.u32 %v621, %v625
      %v628 = vshll.u32 %v603, 16
      %v630 = vrot.slane %v628, 1
      %v631 = vsel %vm619, %v626, %v630
      %v633 = vshrl.u32 %v556, 16
      %v635 = vshll.u32 %v556, 16
      %v637 = vrot.slane %v635, 1
      %v638 = vor.u32 %v633, %v637
      %v640 = vshll.u32 %v604, 16
      %v642 = vrot.slane %v640, 1
      %v643 = vsel %vm619, %v638, %v642
      %v645 = vshrl.u32 %v557, 16
      %v647 = vshll.u32 %v557, 16
      %v649 = vrot.slane %v647, 1
      %v650 = vor.u32 %v645, %v649
      %v652 = vshll.u32 %v605, 16
      %v654 = vrot.slane %v652, 1
      %v655 = vsel %vm619, %v650, %v654
      %v657 = vshrl.u32 %v558, 16
      %v659 = vshll.u32 %v558, 16
      %v661 = vrot.slane %v659, 1
      %v662 = vor.u32 %v657, %v661
      %v664 = vshll.u32 %v606, 16
      %v666 = vrot.slane %v664, 1
      %v667 = vsel %vm619, %v662, %v666
      %v669 = vshrl.u32 %v559, 16
      %v671 = vshll.u32 %v559, 16
      %v673 = vrot.slane %v671, 1
      %v674 = vor.u32 %v669, %v673
      %v676 = vshll.u32 %v607, 16
      %v678 = vrot.slane %v676, 1
      %v679 = vsel %vm619, %v674, %v678
      %v681 = vshrl.u32 %v560, 16
      %v683 = vshll.u32 %v560, 16
      %v685 = vrot.slane %v683, 1
      %v686 = vor.u32 %v681, %v685
      %v688 = vshll.u32 %v608, 16
      %v690 = vrot.slane %v688, 1
      %v691 = vsel %vm619, %v686, %v690
      %v693 = vshrl.u32 %v561, 16
      %v695 = vshll.u32 %v561, 16
      %v697 = vrot.slane %v695, 1
      %v698 = vor.u32 %v693, %v697
      %v700 = vshll.u32 %v609, 16
      %v702 = vrot.slane %v700, 1
      %v703 = vsel %vm619, %v698, %v702
      %v705 = vshrl.u32 %v562, 16
      %v707 = vshll.u32 %v562, 16
      %v709 = vrot.slane %v707, 1
      %v710 = vor.u32 %v705, %v709
      %v712 = vshll.u32 %v610, 16
      %v714 = vrot.slane %v712, 1
      %v715 = vsel %vm619, %v710, %v714
      %v717 = vshrl.u32 %v563, 16
      %v719 = vshll.u32 %v563, 16
      %v721 = vrot.slane %v719, 1
      %v722 = vor.u32 %v717, %v721
      %v724 = vshll.u32 %v611, 16
      %v726 = vrot.slane %v724, 1
      %v727 = vsel %vm619, %v722, %v726
      %v729 = vshrl.u32 %v564, 16
      %v731 = vshll.u32 %v564, 16
      %v733 = vrot.slane %v731, 1
      %v734 = vor.u32 %v729, %v733
      %v736 = vshll.u32 %v612, 16
      %v738 = vrot.slane %v736, 1
      %v739 = vsel %vm619, %v734, %v738
      %v741 = vshrl.u32 %v565, 16
      %v743 = vshll.u32 %v565, 16
      %v745 = vrot.slane %v743, 1
      %v746 = vor.u32 %v741, %v745
      %v748 = vshll.u32 %v613, 16
      %v750 = vrot.slane %v748, 1
      %v751 = vsel %vm619, %v746, %v750
      %v753 = vshrl.u32 %v566, 16
      %v755 = vshll.u32 %v566, 16
      %v757 = vrot.slane %v755, 1
      %v758 = vor.u32 %v753, %v757
      %v760 = vshll.u32 %v614, 16
      %v762 = vrot.slane %v760, 1
      %v763 = vsel %vm619, %v758, %v762
      %v765 = vshrl.u32 %v567, 16
      %v767 = vshll.u32 %v567, 16
      %v769 = vrot.slane %v767, 1
      %v770 = vor.u32 %v765, %v769
      %v772 = vshll.u32 %v615, 16
      %v774 = vrot.slane %v772, 1
      %v775 = vsel %vm619, %v770, %v774
      %v777 = vshrl.u32 %v568, 16
      %v779 = vshll.u32 %v568, 16
      %v781 = vrot.slane %v779, 1
      %v782 = vor.u32 %v777, %v781
      %v784 = vshll.u32 %v616, 16
      %v786 = vrot.slane %v784, 1
      %v787 = vsel %vm619, %v782, %v786
      %v789 = vshrl.u32 %v569, 16
      %v791 = vshll.u32 %v569, 16
      %v793 = vrot.slane %v791, 1
      %v794 = vor.u32 %v789, %v793
      %v796 = vshll.u32 %v617, 16
      %v798 = vrot.slane %v796, 1
      %v799 = vsel %vm619, %v794, %v798
      %v801 = vshrl.u32 %v570, 16
      %v803 = vshll.u32 %v570, 16
      %v805 = vrot.slane %v803, 1
      %v806 = vor.u32 %v801, %v805
      %v808 = vshll.u32 %v618, 16
      %v810 = vrot.slane %v808, 1
      %v811 = vsel %vm619, %v806, %v810
      %812 = vrot.lane.b32.xlu0 %v631, 4
      %v813 = vpop.permute.xlu0 %812
      %814 = vrot.lane.b32.xlu0 %v643, 4
      %v815 = vpop.permute.xlu0 %814
      %816 = vrot.lane.b32.xlu0 %v655, 4
      %v817 = vpop.permute.xlu0 %816
      %818 = vrot.lane.b32.xlu0 %v667, 4
      %v819 = vpop.permute.xlu0 %818
      %820 = vrot.lane.b32.xlu0 %v679, 4
      %v821 = vpop.permute.xlu0 %820
      %822 = vrot.lane.b32.xlu0 %v691, 4
      %v823 = vpop.permute.xlu0 %822
      %824 = vrot.lane.b32.xlu0 %v703, 4
      %v825 = vpop.permute.xlu0 %824
      %826 = vrot.lane.b32.xlu0 %v715, 4
      %v827 = vpop.permute.xlu0 %826
      %828 = vrot.lane.b32.xlu0 %v727, 4
      %v829 = vpop.permute.xlu0 %828
      %830 = vrot.lane.b32.xlu0 %v739, 4
      %v831 = vpop.permute.xlu0 %830
      %832 = vrot.lane.b32.xlu0 %v751, 4
      %v833 = vpop.permute.xlu0 %832
      %834 = vrot.lane.b32.xlu0 %v763, 4
      %v835 = vpop.permute.xlu0 %834
      %836 = vrot.lane.b32.xlu0 %v775, 4
      %v837 = vpop.permute.xlu0 %836
      %838 = vrot.lane.b32.xlu0 %v787, 4
      %v839 = vpop.permute.xlu0 %838
      %840 = vrot.lane.b32.xlu0 %v799, 4
      %v841 = vpop.permute.xlu0 %840
      %842 = vrot.lane.b32.xlu0 %v811, 4
      %v843 = vpop.permute.xlu0 %842
      %vm844 = vcmask 1046528
      %v845 = vrot.slane %v555, 1
      %v846 = vrot.slane %v603, 1
      %v847 = vsel %vm844, %v845, %v846
      %v848 = vrot.slane %v556, 1
      %v849 = vrot.slane %v604, 1
      %v850 = vsel %vm844, %v848, %v849
      %v851 = vrot.slane %v557, 1
      %v852 = vrot.slane %v605, 1
      %v853 = vsel %vm844, %v851, %v852
      %v854 = vrot.slane %v558, 1
      %v855 = vrot.slane %v606, 1
      %v856 = vsel %vm844, %v854, %v855
      %v857 = vrot.slane %v559, 1
      %v858 = vrot.slane %v607, 1
      %v859 = vsel %vm844, %v857, %v858
      %v860 = vrot.slane %v560, 1
      %v861 = vrot.slane %v608, 1
      %v862 = vsel %vm844, %v860, %v861
      %v863 = vrot.slane %v561, 1
      %v864 = vrot.slane %v609, 1
      %v865 = vsel %vm844, %v863, %v864
      %v866 = vrot.slane %v562, 1
      %v867 = vrot.slane %v610, 1
      %v868 = vsel %vm844, %v866, %v867
      %v869 = vrot.slane %v563, 1
      %v870 = vrot.slane %v611, 1
      %v871 = vsel %vm844, %v869, %v870
      %v872 = vrot.slane %v564, 1
      %v873 = vrot.slane %v612, 1
      %v874 = vsel %vm844, %v872, %v873
      %v875 = vrot.slane %v565, 1
      %v876 = vrot.slane %v613, 1
      %v877 = vsel %vm844, %v875, %v876
      %v878 = vrot.slane %v566, 1
      %v879 = vrot.slane %v614, 1
      %v880 = vsel %vm844, %v878, %v879
      %v881 = vrot.slane %v567, 1
      %v882 = vrot.slane %v615, 1
      %v883 = vsel %vm844, %v881, %v882
      %v884 = vrot.slane %v568, 1
      %v885 = vrot.slane %v616, 1
      %v886 = vsel %vm844, %v884, %v885
      %v887 = vrot.slane %v569, 1
      %v888 = vrot.slane %v617, 1
      %v889 = vsel %vm844, %v887, %v888
      %v890 = vrot.slane %v570, 1
      %v891 = vrot.slane %v618, 1
      %v892 = vsel %vm844, %v890, %v891
      %893 = vrot.lane.b32.xlu0 %v847, 8
      %v894 = vpop.permute.xlu0 %893
      %895 = vrot.lane.b32.xlu0 %v850, 8
      %v896 = vpop.permute.xlu0 %895
      %897 = vrot.lane.b32.xlu0 %v853, 8
      %v898 = vpop.permute.xlu0 %897
      %899 = vrot.lane.b32.xlu0 %v856, 8
      %v900 = vpop.permute.xlu0 %899
      %901 = vrot.lane.b32.xlu0 %v859, 8
      %v902 = vpop.permute.xlu0 %901
      %903 = vrot.lane.b32.xlu0 %v862, 8
      %v904 = vpop.permute.xlu0 %903
      %905 = vrot.lane.b32.xlu0 %v865, 8
      %v906 = vpop.permute.xlu0 %905
      %907 = vrot.lane.b32.xlu0 %v868, 8
      %v908 = vpop.permute.xlu0 %907
      %909 = vrot.lane.b32.xlu0 %v871, 8
      %v910 = vpop.permute.xlu0 %909
      %911 = vrot.lane.b32.xlu0 %v874, 8
      %v912 = vpop.permute.xlu0 %911
      %913 = vrot.lane.b32.xlu0 %v877, 8
      %v914 = vpop.permute.xlu0 %913
      %915 = vrot.lane.b32.xlu0 %v880, 8
      %v916 = vpop.permute.xlu0 %915
      %917 = vrot.lane.b32.xlu0 %v883, 8
      %v918 = vpop.permute.xlu0 %917
      %919 = vrot.lane.b32.xlu0 %v886, 8
      %v920 = vpop.permute.xlu0 %919
      %921 = vrot.lane.b32.xlu0 %v889, 8
      %v922 = vpop.permute.xlu0 %921
      %923 = vrot.lane.b32.xlu0 %v892, 8
      %v924 = vpop.permute.xlu0 %923
      %v927 = vunpack.c.l.b16 %v485
      %v928 = vunpack.c.l.b16 %v486
      %v929 = vpack.c.b16 %v928, %v927
      %930 = vrot.lane.b32.xlu0 %v556, 12
      %v931 = vpop.permute.xlu0 %930
      %932 = vrot.lane.b32.xlu0 %v557, 12
      %v933 = vpop.permute.xlu0 %932
      %934 = vrot.lane.b32.xlu0 %v558, 12
      %v935 = vpop.permute.xlu0 %934
      %936 = vrot.lane.b32.xlu0 %v559, 12
      %v937 = vpop.permute.xlu0 %936
      %938 = vrot.lane.b32.xlu0 %v560, 12
      %v939 = vpop.permute.xlu0 %938
      %940 = vrot.lane.b32.xlu0 %v561, 12
      %v941 = vpop.permute.xlu0 %940
      %942 = vrot.lane.b32.xlu0 %v562, 12
      %v943 = vpop.permute.xlu0 %942
      %944 = vrot.lane.b32.xlu0 %v563, 12
      %v945 = vpop.permute.xlu0 %944
      %946 = vrot.lane.b32.xlu0 %v564, 12
      %v947 = vpop.permute.xlu0 %946
      %948 = vrot.lane.b32.xlu0 %v565, 12
      %v949 = vpop.permute.xlu0 %948
      %950 = vrot.lane.b32.xlu0 %v566, 12
      %v951 = vpop.permute.xlu0 %950
      %952 = vrot.lane.b32.xlu0 %v567, 12
      %v953 = vpop.permute.xlu0 %952
      %954 = vrot.lane.b32.xlu0 %v568, 12
      %v955 = vpop.permute.xlu0 %954
      %956 = vrot.lane.b32.xlu0 %v569, 12
      %v957 = vpop.permute.xlu0 %956
      %958 = vrot.lane.b32.xlu0 %v570, 12
      %v959 = vpop.permute.xlu0 %958
      %960 = vrot.lane.b32.xlu0 %v929, 12
      %v961 = vpop.permute.xlu0 %960
      %v963 = vunpack.c.l.b16 %v487
      %v964 = vpack.c.b16 %v963, %v963
      %v966 = vshrl.u32 %v929, 16
      %v968 = vshll.u32 %v929, 16
      %v970 = vrot.slane %v968, 1
      %v971 = vor.u32 %v966, %v970
      %v973 = vshll.u32 %v964, 16
      %v975 = vrot.slane %v973, 1
      %v976 = vsel %vm619, %v971, %v975
      %977 = vrot.lane.b32.xlu0 %v643, 16
      %v978 = vpop.permute.xlu0 %977
      %979 = vrot.lane.b32.xlu0 %v655, 16
      %v980 = vpop.permute.xlu0 %979
      %981 = vrot.lane.b32.xlu0 %v667, 16
      %v982 = vpop.permute.xlu0 %981
      %983 = vrot.lane.b32.xlu0 %v679, 16
      %v984 = vpop.permute.xlu0 %983
      %985 = vrot.lane.b32.xlu0 %v691, 16
      %v986 = vpop.permute.xlu0 %985
      %987 = vrot.lane.b32.xlu0 %v703, 16
      %v988 = vpop.permute.xlu0 %987
      %989 = vrot.lane.b32.xlu0 %v715, 16
      %v990 = vpop.permute.xlu0 %989
      %991 = vrot.lane.b32.xlu0 %v727, 16
      %v992 = vpop.permute.xlu0 %991
      %993 = vrot.lane.b32.xlu0 %v739, 16
      %v994 = vpop.permute.xlu0 %993
      %995 = vrot.lane.b32.xlu0 %v751, 16
      %v996 = vpop.permute.xlu0 %995
      %997 = vrot.lane.b32.xlu0 %v763, 16
      %v998 = vpop.permute.xlu0 %997
      %999 = vrot.lane.b32.xlu0 %v775, 16
      %v1000 = vpop.permute.xlu0 %999
      %1001 = vrot.lane.b32.xlu0 %v787, 16
      %v1002 = vpop.permute.xlu0 %1001
      %1003 = vrot.lane.b32.xlu0 %v799, 16
      %v1004 = vpop.permute.xlu0 %1003
      %1005 = vrot.lane.b32.xlu0 %v811, 16
      %v1006 = vpop.permute.xlu0 %1005
      %1007 = vrot.lane.b32.xlu0 %v976, 16
      %v1008 = vpop.permute.xlu0 %1007
      %v1009 = vrot.slane %v929, 1
      %v1010 = vrot.slane %v964, 1
      %v1011 = vsel %vm844, %v1009, %v1010
      %1012 = vrot.lane.b32.xlu0 %v850, 20
      %v1013 = vpop.permute.xlu0 %1012
      %1014 = vrot.lane.b32.xlu0 %v853, 20
      %v1015 = vpop.permute.xlu0 %1014
      %1016 = vrot.lane.b32.xlu0 %v856, 20
      %v1017 = vpop.permute.xlu0 %1016
      %1018 = vrot.lane.b32.xlu0 %v859, 20
      %v1019 = vpop.permute.xlu0 %1018
      %1020 = vrot.lane.b32.xlu0 %v862, 20
      %v1021 = vpop.permute.xlu0 %1020
      %1022 = vrot.lane.b32.xlu0 %v865, 20
      %v1023 = vpop.permute.xlu0 %1022
      %1024 = vrot.lane.b32.xlu0 %v868, 20
      %v1025 = vpop.permute.xlu0 %1024
      %1026 = vrot.lane.b32.xlu0 %v871, 20
      %v1027 = vpop.permute.xlu0 %1026
      %1028 = vrot.lane.b32.xlu0 %v874, 20
      %v1029 = vpop.permute.xlu0 %1028
      %1030 = vrot.lane.b32.xlu0 %v877, 20
      %v1031 = vpop.permute.xlu0 %1030
      %1032 = vrot.lane.b32.xlu0 %v880, 20
      %v1033 = vpop.permute.xlu0 %1032
      %1034 = vrot.lane.b32.xlu0 %v883, 20
      %v1035 = vpop.permute.xlu0 %1034
      %1036 = vrot.lane.b32.xlu0 %v886, 20
      %v1037 = vpop.permute.xlu0 %1036
      %1038 = vrot.lane.b32.xlu0 %v889, 20
      %v1039 = vpop.permute.xlu0 %1038
      %1040 = vrot.lane.b32.xlu0 %v892, 20
      %v1041 = vpop.permute.xlu0 %1040
      %1042 = vrot.lane.b32.xlu0 %v1011, 20
      %v1043 = vpop.permute.xlu0 %1042
      %v1046 = vunpack.c.l.b16 %v488
      %v1047 = vunpack.c.l.b16 %v489
      %v1048 = vpack.c.b16 %v1047, %v1046
      %1049 = vrot.lane.b32.xlu0 %v557, 24
      %v1050 = vpop.permute.xlu0 %1049
      %1051 = vrot.lane.b32.xlu0 %v558, 24
      %v1052 = vpop.permute.xlu0 %1051
      %1053 = vrot.lane.b32.xlu0 %v559, 24
      %v1054 = vpop.permute.xlu0 %1053
      %1055 = vrot.lane.b32.xlu0 %v560, 24
      %v1056 = vpop.permute.xlu0 %1055
      %1057 = vrot.lane.b32.xlu0 %v561, 24
      %v1058 = vpop.permute.xlu0 %1057
      %1059 = vrot.lane.b32.xlu0 %v562, 24
      %v1060 = vpop.permute.xlu0 %1059
      %1061 = vrot.lane.b32.xlu0 %v563, 24
      %v1062 = vpop.permute.xlu0 %1061
      %1063 = vrot.lane.b32.xlu0 %v564, 24
      %v1064 = vpop.permute.xlu0 %1063
      %1065 = vrot.lane.b32.xlu0 %v565, 24
      %v1066 = vpop.permute.xlu0 %1065
      %1067 = vrot.lane.b32.xlu0 %v566, 24
      %v1068 = vpop.permute.xlu0 %1067
      %1069 = vrot.lane.b32.xlu0 %v567, 24
      %v1070 = vpop.permute.xlu0 %1069
      %1071 = vrot.lane.b32.xlu0 %v568, 24
      %v1072 = vpop.permute.xlu0 %1071
      %1073 = vrot.lane.b32.xlu0 %v569, 24
      %v1074 = vpop.permute.xlu0 %1073
      %1075 = vrot.lane.b32.xlu0 %v570, 24
      %v1076 = vpop.permute.xlu0 %1075
      %1077 = vrot.lane.b32.xlu0 %v929, 24
      %v1078 = vpop.permute.xlu0 %1077
      %1079 = vrot.lane.b32.xlu0 %v1048, 24
      %v1080 = vpop.permute.xlu0 %1079
      %v1082 = vunpack.c.l.b16 %v490
      %v1083 = vpack.c.b16 %v1082, %v1082
      %v1085 = vshrl.u32 %v1048, 16
      %v1087 = vshll.u32 %v1048, 16
      %v1089 = vrot.slane %v1087, 1
      %v1090 = vor.u32 %v1085, %v1089
      %v1092 = vshll.u32 %v1083, 16
      %v1094 = vrot.slane %v1092, 1
      %v1095 = vsel %vm619, %v1090, %v1094
      %1096 = vrot.lane.b32.xlu0 %v655, 28
      %v1097 = vpop.permute.xlu0 %1096
      %1098 = vrot.lane.b32.xlu0 %v667, 28
      %v1099 = vpop.permute.xlu0 %1098
      %1100 = vrot.lane.b32.xlu0 %v679, 28
      %v1101 = vpop.permute.xlu0 %1100
      %1102 = vrot.lane.b32.xlu0 %v691, 28
      %v1103 = vpop.permute.xlu0 %1102
      %1104 = vrot.lane.b32.xlu0 %v703, 28
      %v1105 = vpop.permute.xlu0 %1104
      %1106 = vrot.lane.b32.xlu0 %v715, 28
      %v1107 = vpop.permute.xlu0 %1106
      %1108 = vrot.lane.b32.xlu0 %v727, 28
      %v1109 = vpop.permute.xlu0 %1108
      %1110 = vrot.lane.b32.xlu0 %v739, 28
      %v1111 = vpop.permute.xlu0 %1110
      %1112 = vrot.lane.b32.xlu0 %v751, 28
      %v1113 = vpop.permute.xlu0 %1112
      %1114 = vrot.lane.b32.xlu0 %v763, 28
      %v1115 = vpop.permute.xlu0 %1114
      %1116 = vrot.lane.b32.xlu0 %v775, 28
      %v1117 = vpop.permute.xlu0 %1116
      %1118 = vrot.lane.b32.xlu0 %v787, 28
      %v1119 = vpop.permute.xlu0 %1118
      %1120 = vrot.lane.b32.xlu0 %v799, 28
      %v1121 = vpop.permute.xlu0 %1120
      %1122 = vrot.lane.b32.xlu0 %v811, 28
      %v1123 = vpop.permute.xlu0 %1122
      %1124 = vrot.lane.b32.xlu0 %v976, 28
      %v1125 = vpop.permute.xlu0 %1124
      %1126 = vrot.lane.b32.xlu0 %v1095, 28
      %v1127 = vpop.permute.xlu0 %1126
      %v1128 = vrot.slane %v1048, 1
      %v1129 = vrot.slane %v1083, 1
      %v1130 = vsel %vm844, %v1128, %v1129
      %1131 = vrot.lane.b32.xlu0 %v853, 32
      %v1132 = vpop.permute.xlu0 %1131
      %1133 = vrot.lane.b32.xlu0 %v856, 32
      %v1134 = vpop.permute.xlu0 %1133
      %1135 = vrot.lane.b32.xlu0 %v859, 32
      %v1136 = vpop.permute.xlu0 %1135
      %1137 = vrot.lane.b32.xlu0 %v862, 32
      %v1138 = vpop.permute.xlu0 %1137
      %1139 = vrot.lane.b32.xlu0 %v865, 32
      %v1140 = vpop.permute.xlu0 %1139
      %1141 = vrot.lane.b32.xlu0 %v868, 32
      %v1142 = vpop.permute.xlu0 %1141
      %1143 = vrot.lane.b32.xlu0 %v871, 32
      %v1144 = vpop.permute.xlu0 %1143
      %1145 = vrot.lane.b32.xlu0 %v874, 32
      %v1146 = vpop.permute.xlu0 %1145
      %1147 = vrot.lane.b32.xlu0 %v877, 32
      %v1148 = vpop.permute.xlu0 %1147
      %1149 = vrot.lane.b32.xlu0 %v880, 32
      %v1150 = vpop.permute.xlu0 %1149
      %1151 = vrot.lane.b32.xlu0 %v883, 32
      %v1152 = vpop.permute.xlu0 %1151
      %1153 = vrot.lane.b32.xlu0 %v886, 32
      %v1154 = vpop.permute.xlu0 %1153
      %1155 = vrot.lane.b32.xlu0 %v889, 32
      %v1156 = vpop.permute.xlu0 %1155
      %1157 = vrot.lane.b32.xlu0 %v892, 32
      %v1158 = vpop.permute.xlu0 %1157
      %1159 = vrot.lane.b32.xlu0 %v1011, 32
      %v1160 = vpop.permute.xlu0 %1159
      %1161 = vrot.lane.b32.xlu0 %v1130, 32
      %v1162 = vpop.permute.xlu0 %1161
      %vm1163 = vcmask 31744
      %v1165 = vsel %vm1163, %v555, %v813
      %v1167 = vsel %vm1163, %v556, %v815
      %v1169 = vsel %vm1163, %v557, %v817
      %v1171 = vsel %vm1163, %v558, %v819
      %v1173 = vsel %vm1163, %v559, %v821
      %v1175 = vsel %vm1163, %v560, %v823
      %v1177 = vsel %vm1163, %v561, %v825
      %v1179 = vsel %vm1163, %v562, %v827
      %v1181 = vsel %vm1163, %v563, %v829
      %v1183 = vsel %vm1163, %v564, %v831
      %v1185 = vsel %vm1163, %v565, %v833
      %v1187 = vsel %vm1163, %v566, %v835
      %v1189 = vsel %vm1163, %v567, %v837
      %v1191 = vsel %vm1163, %v568, %v839
      %v1193 = vsel %vm1163, %v569, %v841
      %v1195 = vsel %vm1163, %v570, %v843
      %vm1196 = vcmask 64512
      %v1198 = vsel %vm1196, %v1165, %v894
      %v1200 = vsel %vm1196, %v1167, %v896
      %v1202 = vsel %vm1196, %v1169, %v898
      %v1204 = vsel %vm1196, %v1171, %v900
      %v1206 = vsel %vm1196, %v1173, %v902
      %v1208 = vsel %vm1196, %v1175, %v904
      %v1210 = vsel %vm1196, %v1177, %v906
      %v1212 = vsel %vm1196, %v1179, %v908
      %v1214 = vsel %vm1196, %v1181, %v910
      %v1216 = vsel %vm1196, %v1183, %v912
      %v1218 = vsel %vm1196, %v1185, %v914
      %v1220 = vsel %vm1196, %v1187, %v916
      %v1222 = vsel %vm1196, %v1189, %v918
      %v1224 = vsel %vm1196, %v1191, %v920
      %v1226 = vsel %vm1196, %v1193, %v922
      %v1228 = vsel %vm1196, %v1195, %v924
      %vm1229 = vcmask 97280
      %v1231 = vsel %vm1229, %v1198, %v931
      %v1233 = vsel %vm1229, %v1200, %v933
      %v1235 = vsel %vm1229, %v1202, %v935
      %v1237 = vsel %vm1229, %v1204, %v937
      %v1239 = vsel %vm1229, %v1206, %v939
      %v1241 = vsel %vm1229, %v1208, %v941
      %v1243 = vsel %vm1229, %v1210, %v943
      %v1245 = vsel %vm1229, %v1212, %v945
      %v1247 = vsel %vm1229, %v1214, %v947
      %v1249 = vsel %vm1229, %v1216, %v949
      %v1251 = vsel %vm1229, %v1218, %v951
      %v1253 = vsel %vm1229, %v1220, %v953
      %v1255 = vsel %vm1229, %v1222, %v955
      %v1257 = vsel %vm1229, %v1224, %v957
      %v1259 = vsel %vm1229, %v1226, %v959
      %v1261 = vsel %vm1229, %v1228, %v961
      %vm1262 = vcmask 130048
      %v1264 = vsel %vm1262, %v1231, %v978
      %v1266 = vsel %vm1262, %v1233, %v980
      %v1268 = vsel %vm1262, %v1235, %v982
      %v1270 = vsel %vm1262, %v1237, %v984
      %v1272 = vsel %vm1262, %v1239, %v986
      %v1274 = vsel %vm1262, %v1241, %v988
      %v1276 = vsel %vm1262, %v1243, %v990
      %v1278 = vsel %vm1262, %v1245, %v992
      %v1280 = vsel %vm1262, %v1247, %v994
      %v1282 = vsel %vm1262, %v1249, %v996
      %v1284 = vsel %vm1262, %v1251, %v998
      %v1286 = vsel %vm1262, %v1253, %v1000
      %v1288 = vsel %vm1262, %v1255, %v1002
      %v1290 = vsel %vm1262, %v1257, %v1004
      %v1292 = vsel %vm1262, %v1259, %v1006
      %v1294 = vsel %vm1262, %v1261, %v1008
      %vm1295 = vcmask 162816
      %v1297 = vsel %vm1295, %v1264, %v1013
      %v1299 = vsel %vm1295, %v1266, %v1015
      %v1301 = vsel %vm1295, %v1268, %v1017
      %v1303 = vsel %vm1295, %v1270, %v1019
      %v1305 = vsel %vm1295, %v1272, %v1021
      %v1307 = vsel %vm1295, %v1274, %v1023
      %v1309 = vsel %vm1295, %v1276, %v1025
      %v1311 = vsel %vm1295, %v1278, %v1027
      %v1313 = vsel %vm1295, %v1280, %v1029
      %v1315 = vsel %vm1295, %v1282, %v1031
      %v1317 = vsel %vm1295, %v1284, %v1033
      %v1319 = vsel %vm1295, %v1286, %v1035
      %v1321 = vsel %vm1295, %v1288, %v1037
      %v1323 = vsel %vm1295, %v1290, %v1039
      %v1325 = vsel %vm1295, %v1292, %v1041
      %v1327 = vsel %vm1295, %v1294, %v1043
      %vm1328 = vcmask 195584
      %v1330 = vsel %vm1328, %v1297, %v1050
      %v1332 = vsel %vm1328, %v1299, %v1052
      %v1334 = vsel %vm1328, %v1301, %v1054
      %v1336 = vsel %vm1328, %v1303, %v1056
      %v1338 = vsel %vm1328, %v1305, %v1058
      %v1340 = vsel %vm1328, %v1307, %v1060
      %v1342 = vsel %vm1328, %v1309, %v1062
      %v1344 = vsel %vm1328, %v1311, %v1064
      %v1346 = vsel %vm1328, %v1313, %v1066
      %v1348 = vsel %vm1328, %v1315, %v1068
      %v1350 = vsel %vm1328, %v1317, %v1070
      %v1352 = vsel %vm1328, %v1319, %v1072
      %v1354 = vsel %vm1328, %v1321, %v1074
      %v1356 = vsel %vm1328, %v1323, %v1076
      %v1358 = vsel %vm1328, %v1325, %v1078
      %v1360 = vsel %vm1328, %v1327, %v1080
      %vm1361 = vcmask 228352
      %v1363 = vsel %vm1361, %v1330, %v1097
      %v1365 = vsel %vm1361, %v1332, %v1099
      %v1367 = vsel %vm1361, %v1334, %v1101
      %v1369 = vsel %vm1361, %v1336, %v1103
      %v1371 = vsel %vm1361, %v1338, %v1105
      %v1373 = vsel %vm1361, %v1340, %v1107
      %v1375 = vsel %vm1361, %v1342, %v1109
      %v1377 = vsel %vm1361, %v1344, %v1111
      %v1379 = vsel %vm1361, %v1346, %v1113
      %v1381 = vsel %vm1361, %v1348, %v1115
      %v1383 = vsel %vm1361, %v1350, %v1117
      %v1385 = vsel %vm1361, %v1352, %v1119
      %v1387 = vsel %vm1361, %v1354, %v1121
      %v1389 = vsel %vm1361, %v1356, %v1123
      %v1391 = vsel %vm1361, %v1358, %v1125
      %v1393 = vsel %vm1361, %v1360, %v1127
      %vm1394 = vcmask 261120
      %v1396 = vsel %vm1394, %v1363, %v1132
      %v1398 = vsel %vm1394, %v1365, %v1134
      %v1400 = vsel %vm1394, %v1367, %v1136
      %v1402 = vsel %vm1394, %v1369, %v1138
      %v1404 = vsel %vm1394, %v1371, %v1140
      %v1406 = vsel %vm1394, %v1373, %v1142
      %v1408 = vsel %vm1394, %v1375, %v1144
      %v1410 = vsel %vm1394, %v1377, %v1146
      %v1412 = vsel %vm1394, %v1379, %v1148
      %v1414 = vsel %vm1394, %v1381, %v1150
      %v1416 = vsel %vm1394, %v1383, %v1152
      %v1418 = vsel %vm1394, %v1385, %v1154
      %v1420 = vsel %vm1394, %v1387, %v1156
      %v1422 = vsel %vm1394, %v1389, %v1158
      %v1424 = vsel %vm1394, %v1391, %v1160
      %v1426 = vsel %vm1394, %v1393, %v1162
      %v1427 = vld [vmem:[%s3] sm:$0xf]
      %v1428 = vld [vmem:[%s3 + $0x4] sm:$0xf]
      %v1429 = vld [vmem:[%s3 + $0x8] sm:$0xf]
      %v1430 = vld [vmem:[%s3 + $0xc] sm:$0xf]
      %v1431 = vld [vmem:[%s3 + $0x10] sm:$0x3]
      %v1432 = vld [vmem:[%s4] sm:$0x1]
      %v1434 = vperm.slane %v1432, 0
      %v1441 = vunpack.c.l.b16 %v1427
      %v1442 = vunpack.c.l.b16 %v1428
      %v1443 = vunpack.c.l.b16 %v1429
      %v1444 = vunpack.c.l.b16 %v1430
      %v1445 = vunpack.c.l.b16 %v1431
      %v1446 = vpack.c.b16 %v1442, %v1441
      %v1447 = vpack.c.b16 %v1444, %v1443
      %v1448 = vpack.c.b16 %v1445, %v1445
      %vm1451 = vcmask 293888
      %v1452 = vsel %vm1451, %v1396, 0
      %v1454 = vsel %vm1451, %v1398, 0
      %v1456 = vsel %vm1451, %v1400, 0
      %v1458 = vsel %vm1451, %v1402, 0
      %v1460 = vsel %vm1451, %v1404, 0
      %v1462 = vsel %vm1451, %v1406, 0
      %v1464 = vsel %vm1451, %v1408, 0
      %v1466 = vsel %vm1451, %v1410, 0
      %v1468 = vsel %vm1451, %v1412, 0
      %v1470 = vsel %vm1451, %v1414, 0
      %v1472 = vsel %vm1451, %v1416, 0
      %v1474 = vsel %vm1451, %v1418, 0
      %v1476 = vsel %vm1451, %v1420, 0
      %v1478 = vsel %vm1451, %v1422, 0
      %v1480 = vsel %vm1451, %v1424, 0
      %v1482 = vsel %vm1451, %v1426, 0
      %vm1484 = vcmask 1041408
      %v1486 = vsel %vm1484, %v1448, 0
      %1488 = vmatpush.bf16.msra.mxu0 0
      %1489 = vmatpush.bf16.msra.mxu0 0
      %1490 = vmatpush.bf16.msra.mxu0 0
      %1491 = vmatpush.bf16.msra.mxu0 0
      %1492 = vmatpush.bf16.msra.mxu0 0
      %1493 = vmatpush.bf16.msra.mxu0 %v1486
      %1494 = vmatpush.bf16.msra.mxu0 %v1447
      %1495 = vmatpush.bf16.msra.mxu0 %v1446
      %1496 = vmatmul.bf16.gmra.mxu0 %v1452
      %v1497 = vpop.f32.mrf.mxu0
      %v1498 = vadd.f32 %v1434, %v1497
      %v1499 = vpop.f32.mrf.mxu0
      %v1500 = vadd.f32 %v1434, %v1499
      %1501 = vmatmul.bf16.gmra.mxu0 %v1454
      %v1502 = vpop.f32.mrf.mxu0
      %v1503 = vadd.f32 %v1434, %v1502
      %v1504 = vpop.f32.mrf.mxu0
      %v1505 = vadd.f32 %v1434, %v1504
      %1506 = vmatmul.bf16.gmra.mxu0 %v1456
      %v1507 = vpop.f32.mrf.mxu0
      %v1508 = vadd.f32 %v1434, %v1507
      %v1509 = vpop.f32.mrf.mxu0
      %v1510 = vadd.f32 %v1434, %v1509
      %1511 = vmatmul.bf16.gmra.mxu0 %v1458
      %v1512 = vpop.f32.mrf.mxu0
      %v1513 = vadd.f32 %v1434, %v1512
      %v1514 = vpop.f32.mrf.mxu0
      %v1515 = vadd.f32 %v1434, %v1514
      %1516 = vmatmul.bf16.gmra.mxu0 %v1460
      %v1517 = vpop.f32.mrf.mxu0
      %v1518 = vadd.f32 %v1434, %v1517
      %v1519 = vpop.f32.mrf.mxu0
      %v1520 = vadd.f32 %v1434, %v1519
      %1521 = vmatmul.bf16.gmra.mxu0 %v1462
      %v1522 = vpop.f32.mrf.mxu0
      %v1523 = vadd.f32 %v1434, %v1522
      %v1524 = vpop.f32.mrf.mxu0
      %v1525 = vadd.f32 %v1434, %v1524
      %1526 = vmatmul.bf16.gmra.mxu0 %v1464
      %v1527 = vpop.f32.mrf.mxu0
      %v1528 = vadd.f32 %v1434, %v1527
      %v1529 = vpop.f32.mrf.mxu0
      %v1530 = vadd.f32 %v1434, %v1529
      %1531 = vmatmul.bf16.gmra.mxu0 %v1466
      %v1532 = vpop.f32.mrf.mxu0
      %v1533 = vadd.f32 %v1434, %v1532
      %v1534 = vpop.f32.mrf.mxu0
      %v1535 = vadd.f32 %v1434, %v1534
      %1536 = vmatmul.bf16.gmra.mxu0 %v1468
      %v1537 = vpop.f32.mrf.mxu0
      %v1538 = vadd.f32 %v1434, %v1537
      %v1539 = vpop.f32.mrf.mxu0
      %v1540 = vadd.f32 %v1434, %v1539
      %1541 = vmatmul.bf16.gmra.mxu0 %v1470
      %v1542 = vpop.f32.mrf.mxu0
      %v1543 = vadd.f32 %v1434, %v1542
      %v1544 = vpop.f32.mrf.mxu0
      %v1545 = vadd.f32 %v1434, %v1544
      %1546 = vmatmul.bf16.gmra.mxu0 %v1472
      %v1547 = vpop.f32.mrf.mxu0
      %v1548 = vadd.f32 %v1434, %v1547
      %v1549 = vpop.f32.mrf.mxu0
      %v1550 = vadd.f32 %v1434, %v1549
      %1551 = vmatmul.bf16.gmra.mxu0 %v1474
      %v1552 = vpop.f32.mrf.mxu0
      %v1553 = vadd.f32 %v1434, %v1552
      %v1554 = vpop.f32.mrf.mxu0
      %v1555 = vadd.f32 %v1434, %v1554
      %1556 = vmatmul.bf16.gmra.mxu0 %v1476
      %v1557 = vpop.f32.mrf.mxu0
      %v1558 = vadd.f32 %v1434, %v1557
      %v1559 = vpop.f32.mrf.mxu0
      %v1560 = vadd.f32 %v1434, %v1559
      %1561 = vmatmul.bf16.gmra.mxu0 %v1478
      %v1562 = vpop.f32.mrf.mxu0
      %v1563 = vadd.f32 %v1434, %v1562
      %v1564 = vpop.f32.mrf.mxu0
      %v1565 = vadd.f32 %v1434, %v1564
      %1566 = vmatmul.bf16.gmra.mxu0 %v1480
      %v1567 = vpop.f32.mrf.mxu0
      %v1568 = vadd.f32 %v1434, %v1567
      %v1569 = vpop.f32.mrf.mxu0
      %v1570 = vadd.f32 %v1434, %v1569
      %1571 = vmatmul.bf16.gmra.mxu0 %v1482
      %v1572 = vpop.f32.mrf.mxu0
      %v1573 = vadd.f32 %v1434, %v1572
      %v1574 = vpop.f32.mrf.mxu0
      %v1575 = vadd.f32 %v1434, %v1574
      %1576 = vdwg.mxu0
      %v1577 = vpack.c.bf16 %v1498, %v1498
      %v1578 = vpack.c.bf16 %v1500, %v1500
      %v1579 = vpack.c.bf16 %v1503, %v1503
      %v1580 = vpack.c.bf16 %v1505, %v1505
      %v1581 = vpack.c.bf16 %v1508, %v1508
      %v1582 = vpack.c.bf16 %v1510, %v1510
      %v1583 = vpack.c.bf16 %v1513, %v1513
      %v1584 = vpack.c.bf16 %v1515, %v1515
      %v1585 = vpack.c.bf16 %v1518, %v1518
      %v1586 = vpack.c.bf16 %v1520, %v1520
      %v1587 = vpack.c.bf16 %v1523, %v1523
      %v1588 = vpack.c.bf16 %v1525, %v1525
      %v1589 = vpack.c.bf16 %v1528, %v1528
      %v1590 = vpack.c.bf16 %v1530, %v1530
      %v1591 = vpack.c.bf16 %v1533, %v1533
      %v1592 = vpack.c.bf16 %v1535, %v1535
      %v1593 = vpack.c.bf16 %v1538, %v1538
      %v1594 = vpack.c.bf16 %v1540, %v1540
      %v1595 = vpack.c.bf16 %v1543, %v1543
      %v1596 = vpack.c.bf16 %v1545, %v1545
      %v1597 = vpack.c.bf16 %v1548, %v1548
      %v1598 = vpack.c.bf16 %v1550, %v1550
      %v1599 = vpack.c.bf16 %v1553, %v1553
      %v1600 = vpack.c.bf16 %v1555, %v1555
      %v1601 = vpack.c.bf16 %v1558, %v1558
      %v1602 = vpack.c.bf16 %v1560, %v1560
      %v1603 = vpack.c.bf16 %v1563, %v1563
      %v1604 = vpack.c.bf16 %v1565, %v1565
      %v1605 = vpack.c.bf16 %v1568, %v1568
      %v1606 = vpack.c.bf16 %v1570, %v1570
      %v1607 = vpack.c.bf16 %v1573, %v1573
      %v1608 = vpack.c.bf16 %v1575, %v1575
      %1609 = vst [vmem:[%s427] sm:$0xf] %v1577
      %1610 = vst [vmem:[%s427 + $0x4] sm:$0xf] %v1578
      %1611 = vst [vmem:[%s427 + $0x8] sm:$0xf] %v1579
      %1612 = vst [vmem:[%s427 + $0xc] sm:$0xf] %v1580
      %1613 = vst [vmem:[%s427 + $0x10] sm:$0xf] %v1581
      %1614 = vst [vmem:[%s427 + $0x14] sm:$0xf] %v1582
      %1615 = vst [vmem:[%s427 + $0x18] sm:$0xf] %v1583
      %1616 = vst [vmem:[%s427 + $0x1c] sm:$0xf] %v1584
      %1617 = vst [vmem:[%s427 + $0x20] sm:$0xf] %v1585
      %1618 = vst [vmem:[%s427 + $0x24] sm:$0xf] %v1586
      %1619 = vst [vmem:[%s427 + $0x28] sm:$0xf] %v1587
      %1620 = vst [vmem:[%s427 + $0x2c] sm:$0xf] %v1588
      %1621 = vst [vmem:[%s427 + $0x30] sm:$0xf] %v1589
      %1622 = vst [vmem:[%s427 + $0x34] sm:$0xf] %v1590
      %1623 = vst [vmem:[%s427 + $0x38] sm:$0xf] %v1591
      %1624 = vst [vmem:[%s427 + $0x3c] sm:$0xf] %v1592
      %1625 = vst [vmem:[%s427 + $0x40] sm:$0xf] %v1593
      %1626 = vst [vmem:[%s427 + $0x44] sm:$0xf] %v1594
      %1627 = vst [vmem:[%s427 + $0x48] sm:$0xf] %v1595
      %1628 = vst [vmem:[%s427 + $0x4c] sm:$0xf] %v1596
      %1629 = vst [vmem:[%s427 + $0x50] sm:$0xf] %v1597
      %1630 = vst [vmem:[%s427 + $0x54] sm:$0xf] %v1598
      %1631 = vst [vmem:[%s427 + $0x58] sm:$0xf] %v1599
      %1632 = vst [vmem:[%s427 + $0x5c] sm:$0xf] %v1600
      %1633 = vst [vmem:[%s427 + $0x60] sm:$0xf] %v1601
      %1634 = vst [vmem:[%s427 + $0x64] sm:$0xf] %v1602
      %1635 = vst [vmem:[%s427 + $0x68] sm:$0xf] %v1603
      %1636 = vst [vmem:[%s427 + $0x6c] sm:$0xf] %v1604
      %1637 = vst [vmem:[%s427 + $0x70] sm:$0xf] %v1605
      %1638 = vst [vmem:[%s427 + $0x74] sm:$0xf] %v1606
      %1639 = vst [vmem:[%s427 + $0x78] sm:$0xf] %v1607
      %1640 = vst [vmem:[%s427 + $0x7c] sm:$0xf] %v1608
      %v1641 = vadd.f32 %v1498, %v1500
      %v1642 = vadd.f32 %v1641, %v1503
      %v1643 = vadd.f32 %v1642, %v1505
      %v1644 = vadd.f32 %v1643, %v1508
      %v1645 = vadd.f32 %v1644, %v1510
      %v1646 = vadd.f32 %v1645, %v1513
      %v1647 = vadd.f32 %v1646, %v1515
      %v1648 = vadd.f32 %v1647, %v1518
      %v1649 = vadd.f32 %v1648, %v1520
      %v1650 = vadd.f32 %v1649, %v1523
      %v1651 = vadd.f32 %v1650, %v1525
      %v1652 = vadd.f32 %v1651, %v1528
      %v1653 = vadd.f32 %v1652, %v1530
      %v1654 = vadd.f32 %v1653, %v1533
      %v1655 = vadd.f32 %v1654, %v1535
      %v1656 = vadd.f32 %v1655, %v1538
      %v1657 = vadd.f32 %v1656, %v1540
      %v1658 = vadd.f32 %v1657, %v1543
      %v1659 = vadd.f32 %v1658, %v1545
      %v1660 = vadd.f32 %v1659, %v1548
      %v1661 = vadd.f32 %v1660, %v1550
      %v1662 = vadd.f32 %v1661, %v1553
      %v1663 = vadd.f32 %v1662, %v1555
      %v1664 = vadd.f32 %v1663, %v1558
      %v1665 = vadd.f32 %v1664, %v1560
      %v1666 = vadd.f32 %v1665, %v1563
      %v1667 = vadd.f32 %v1666, %v1565
      %v1668 = vadd.f32 %v1667, %v1568
      %v1669 = vadd.f32 %v1668, %v1570
      %v1670 = vadd.f32 %v1669, %v1573
      %v1671 = vadd.f32 %v1670, %v1575
      %v1672 = vrot.slane %v1671, 4
      %v1673 = vadd.f32 %v1671, %v1672
      %v1674 = vrot.slane %v1673, 2
      %v1675 = vadd.f32 %v1673, %v1674
      %v1676 = vrot.slane %v1675, 1
      %v1677 = vadd.f32 %v1675, %v1676
      %v1678 = vmul.f32 %v1498, %v1498
      %v1679 = vmul.f32 %v1500, %v1500
      %v1680 = vmul.f32 %v1503, %v1503
      %v1681 = vmul.f32 %v1505, %v1505
      %v1682 = vmul.f32 %v1508, %v1508
      %v1683 = vmul.f32 %v1510, %v1510
      %v1684 = vmul.f32 %v1513, %v1513
      %v1685 = vmul.f32 %v1515, %v1515
      %v1686 = vmul.f32 %v1518, %v1518
      %v1687 = vmul.f32 %v1520, %v1520
      %v1688 = vmul.f32 %v1523, %v1523
      %v1689 = vmul.f32 %v1525, %v1525
      %v1690 = vmul.f32 %v1528, %v1528
      %v1691 = vmul.f32 %v1530, %v1530
      %v1692 = vmul.f32 %v1533, %v1533
      %v1693 = vmul.f32 %v1535, %v1535
      %v1694 = vmul.f32 %v1538, %v1538
      %v1695 = vmul.f32 %v1540, %v1540
      %v1696 = vmul.f32 %v1543, %v1543
      %v1697 = vmul.f32 %v1545, %v1545
      %v1698 = vmul.f32 %v1548, %v1548
      %v1699 = vmul.f32 %v1550, %v1550
      %v1700 = vmul.f32 %v1553, %v1553
      %v1701 = vmul.f32 %v1555, %v1555
      %v1702 = vmul.f32 %v1558, %v1558
      %v1703 = vmul.f32 %v1560, %v1560
      %v1704 = vmul.f32 %v1563, %v1563
      %v1705 = vmul.f32 %v1565, %v1565
      %v1706 = vmul.f32 %v1568, %v1568
      %v1707 = vmul.f32 %v1570, %v1570
      %v1708 = vmul.f32 %v1573, %v1573
      %v1709 = vmul.f32 %v1575, %v1575
      %v1710 = vadd.f32 %v1678, %v1679
      %v1711 = vadd.f32 %v1710, %v1680
      %v1712 = vadd.f32 %v1711, %v1681
      %v1713 = vadd.f32 %v1712, %v1682
      %v1714 = vadd.f32 %v1713, %v1683
      %v1715 = vadd.f32 %v1714, %v1684
      %v1716 = vadd.f32 %v1715, %v1685
      %v1717 = vadd.f32 %v1716, %v1686
      %v1718 = vadd.f32 %v1717, %v1687
      %v1719 = vadd.f32 %v1718, %v1688
      %v1720 = vadd.f32 %v1719, %v1689
      %v1721 = vadd.f32 %v1720, %v1690
      %v1722 = vadd.f32 %v1721, %v1691
      %v1723 = vadd.f32 %v1722, %v1692
      %v1724 = vadd.f32 %v1723, %v1693
      %v1725 = vadd.f32 %v1724, %v1694
      %v1726 = vadd.f32 %v1725, %v1695
      %v1727 = vadd.f32 %v1726, %v1696
      %v1728 = vadd.f32 %v1727, %v1697
      %v1729 = vadd.f32 %v1728, %v1698
      %v1730 = vadd.f32 %v1729, %v1699
      %v1731 = vadd.f32 %v1730, %v1700
      %v1732 = vadd.f32 %v1731, %v1701
      %v1733 = vadd.f32 %v1732, %v1702
      %v1734 = vadd.f32 %v1733, %v1703
      %v1735 = vadd.f32 %v1734, %v1704
      %v1736 = vadd.f32 %v1735, %v1705
      %v1737 = vadd.f32 %v1736, %v1706
      %v1738 = vadd.f32 %v1737, %v1707
      %v1739 = vadd.f32 %v1738, %v1708
      %v1740 = vadd.f32 %v1739, %v1709
      %v1741 = vrot.slane %v1740, 4
      %v1742 = vadd.f32 %v1740, %v1741
      %v1743 = vrot.slane %v1742, 2
      %v1744 = vadd.f32 %v1742, %v1743
      %v1745 = vrot.slane %v1744, 1
      %v1746 = vadd.f32 %v1744, %v1745
      %vm1747 = vcmask 1040384
      %v1748 = vsel %vm1747, %v1677, %v1746
      %1749 = vst [vmem:[%s435] sm:$0x3] %v1748
      %s1750 = smul.u32 16, %s23
      %p1751 = scmp.lt.s32.totalorder %s22, 1
      %s1752 = scalar_select %p1751, %s22, 1
      %p1753 = scmp.lt.s32.totalorder %s1750, 15
      %s1754 = scalar_select %p1753, %s1750, 15
      %s1755 = smul.addr %s1754, 2
      %s1756 = smul.addr %s1752, 32
      %s1757 = sadd.s32 %s1755, %s1756
      %s1758 = smul.addr %s1757, 4
      %s1759 = scalar_lea.vmem %s5, %s1758
      %p1760 = scmp.lt.s32.totalorder %s22, 1
      %s1761 = scalar_select %p1760, %s22, 1
      %p1762 = scmp.lt.s32.totalorder %s23, 0
      %s1763 = scalar_select %p1762, %s23, 0
      %s1764 = sadd.s32 %s1763, %s1761
      %s1765 = smul.addr %s1764, 2
      %s1766 = scalar_lea.vmem %s6, %s1765
      // Predicated region
      $region41: #{basic_block_forward.4} parent=39 // pred_check
        %p1767 = pneg %p184
      $region42: #{basic_block_forward.4} parent=39 // pred_check_branch
        %1769 = sbr.rel (%p1767) target = $region44
      $region43: #{basic_block_forward.4} parent=39 // pred_region
        %s1770 = smul.u32 16, %s23
      $region44: #{basic_block_forward.4} parent=39 // pred_fallthru
        _
      // Predicated region
      $region45: #{basic_block_forward.4} parent=39 // pred_check
        %p1771 = pneg %p212
      $region46: #{basic_block_forward.4} parent=39 // pred_check_branch
        %1773 = sbr.rel (%p1771) target = $region48
      $region47: #{basic_block_forward.4} parent=39 // pred_region
        _
      $region48: #{basic_block_forward.4} parent=39 // pred_fallthru
        _
    $region40: #{basic_block_forward.4} parent=5 // pred_fallthru
      _
    %p1774 = scmp.le.s32.totalorder 2, %s13
    // Predicated region
    $region49: #{basic_block_forward.4} parent=5 // pred_check
      %p1775 = pneg %p1774
    $region50: #{basic_block_forward.4} parent=5 // pred_check_branch
      %1777 = sbr.rel (%p1775) target = $region52
    $region51: #{basic_block_forward.4} parent=5 // pred_region
      %s1778 = ssub.s32 %s13, 2
      // Predicated region
      $region53: #{basic_block_forward.4} parent=51 // pred_check
        %p1779 = pneg %p190
      $region54: #{basic_block_forward.4} parent=51 // pred_check_branch
        %1781 = sbr.rel (%p1779) target = $region56
      $region55: #{basic_block_forward.4} parent=51 // pred_region
        %s1782 = smul.u32 16, %s25
        %p1783 = scmp.lt.s32.totalorder %s24, 1
        %s1784 = scalar_select %p1783, %s24, 1
        %p1785 = scmp.lt.s32.totalorder %s1782, 15
        %s1786 = scalar_select %p1785, %s1782, 15
        %s1787 = smul.addr %s1786, 2
        %s1788 = smul.addr %s1784, 32
        %s1789 = sadd.s32 %s1787, %s1788
        %s1790 = smul.addr %s1789, 4
        %s1791 = scalar_lea.vmem %s5, %s1790
      $region56: #{basic_block_forward.4} parent=51 // pred_fallthru
        _
      // Predicated region
      $region57: #{basic_block_forward.4} parent=51 // pred_check
        %p1792 = pneg %p218
      $region58: #{basic_block_forward.4} parent=51 // pred_check_branch
        %1794 = sbr.rel (%p1792) target = $region60
      $region59: #{basic_block_forward.4} parent=51 // pred_region
        %p1795 = scmp.lt.s32.totalorder %s24, 1
        %s1796 = scalar_select %p1795, %s24, 1
        %p1797 = scmp.lt.s32.totalorder %s25, 0
        %s1798 = scalar_select %p1797, %s25, 0
        %s1799 = sadd.s32 %s1798, %s1796
        %s1800 = smul.addr %s1799, 2
        %s1801 = scalar_lea.vmem %s6, %s1800
      $region60: #{basic_block_forward.4} parent=51 // pred_fallthru
        _
    $region52: #{basic_block_forward.4} parent=5 // pred_fallthru
      _
  $region6: #{basic_block_forward.4} parent=0 // loop_footer
    %s17 = sadd.s32 1, %s13
  $region7: #{basic_block_forward.4} parent=0 // loop_footer_branch
    %12 = sbr.rel target = $region3
  $region8: #{basic_block_forward.4} parent=0 // loop_exit
    _

// kernel: basic_block_forward.7
$region0: #{basic_block_forward.7}
  #allocation0 [shape = 'u32[]', space=smem, size = 0x4, offset = 0x4, fixed_abs, tag = 'smem constant byte address 0x4 - core index']
  #allocation1 [shape = 'u32[72,128]{1,0:T(1,128)}', space=vmem, size = 0x9000, scoped, tag = 'internal scratch']
  %s0 = inlined_call_operand.vmem [shape: bf16[512,128], index: 0, kind: input, shape index: {}]
  %s1 = inlined_call_operand.vmem [shape: f32[1,128], index: 1, kind: input, shape index: {}]
  %s2 = inlined_call_operand.vmem [shape: f32[1,128], index: 2, kind: input, shape index: {}]
  %s3 = inlined_call_operand.vmem [shape: f32[512,128], index: 3, kind: output, shape index: {}]
  %s4 = sld [smem:[#allocation0]]
  $region22: #{basic_block_forward.7} parent=0
    _
  %s6 = ssub.s32 1, %s4
  %s7 = scalar_select 0, %s6, %s4
  // Predicated region
  $region2: #{basic_block_forward.7} parent=0 // pred_check
    _
  $region3: #{basic_block_forward.7} parent=0 // pred_check_branch
    %9 = sbr.rel (0) target = $region5
  $region4: #{basic_block_forward.7} parent=0 // pred_region
    _
  $region5: #{basic_block_forward.7} parent=0 // pred_fallthru
    _
  // Predicated region
  $region6: #{basic_block_forward.7} parent=0 // pred_check
    _
  $region7: #{basic_block_forward.7} parent=0 // pred_check_branch
    %11 = sbr.rel (0) target = $region9
  $region8: #{basic_block_forward.7} parent=0 // pred_region
    _
  $region9: #{basic_block_forward.7} parent=0 // pred_fallthru
    _
  // Predicated region
  $region10: #{basic_block_forward.7} parent=0 // pred_check
    _
  $region11: #{basic_block_forward.7} parent=0 // pred_check_branch
    %13 = sbr.rel (0) target = $region13
  $region12: #{basic_block_forward.7} parent=0 // pred_region
    _
  $region13: #{basic_block_forward.7} parent=0 // pred_fallthru
    _
  %v14 = vld [vmem:[%s0] sm:$0xf]
  %v15 = vld [vmem:[%s0 + $0x4] sm:$0xf]
  %v16 = vld [vmem:[%s0 + $0x8] sm:$0xf]
  %v17 = vld [vmem:[%s0 + $0xc] sm:$0xf]
  %v18 = vld [vmem:[%s0 + $0x10] sm:$0xf]
  %v19 = vld [vmem:[%s0 + $0x14] sm:$0xf]
  %v20 = vld [vmem:[%s0 + $0x18] sm:$0xf]
  %v21 = vld [vmem:[%s0 + $0x1c] sm:$0xf]
  %v22 = vld [vmem:[%s0 + $0x20] sm:$0xf]
  %v23 = vld [vmem:[%s0 + $0x24] sm:$0xf]
  %v24 = vld [vmem:[%s0 + $0x28] sm:$0xf]
  %v25 = vld [vmem:[%s0 + $0x2c] sm:$0xf]
  %v26 = vld [vmem:[%s0 + $0x30] sm:$0xf]
  %v27 = vld [vmem:[%s0 + $0x34] sm:$0xf]
  %v28 = vld [vmem:[%s0 + $0x38] sm:$0xf]
  %v29 = vld [vmem:[%s0 + $0x3c] sm:$0xf]
  %v30 = vld [vmem:[%s0 + $0x40] sm:$0xf]
  %v31 = vld [vmem:[%s0 + $0x44] sm:$0xf]
  %v32 = vld [vmem:[%s0 + $0x48] sm:$0xf]
  %v33 = vld [vmem:[%s0 + $0x4c] sm:$0xf]
  %v34 = vld [vmem:[%s0 + $0x50] sm:$0xf]
  %v35 = vld [vmem:[%s0 + $0x54] sm:$0xf]
  %v36 = vld [vmem:[%s0 + $0x58] sm:$0xf]
  %v37 = vld [vmem:[%s0 + $0x5c] sm:$0xf]
  %v38 = vld [vmem:[%s0 + $0x60] sm:$0xf]
  %v39 = vld [vmem:[%s0 + $0x64] sm:$0xf]
  %v40 = vld [vmem:[%s0 + $0x68] sm:$0xf]
  %v41 = vld [vmem:[%s0 + $0x6c] sm:$0xf]
  %v42 = vld [vmem:[%s0 + $0x70] sm:$0xf]
  %v43 = vld [vmem:[%s0 + $0x74] sm:$0xf]
  %v44 = vld [vmem:[%s0 + $0x78] sm:$0xf]
  %v45 = vld [vmem:[%s0 + $0x7c] sm:$0xf]
  %v46 = vld [vmem:[%s0 + $0x80] sm:$0xf]
  %v47 = vld [vmem:[%s0 + $0x84] sm:$0xf]
  %v48 = vld [vmem:[%s0 + $0x88] sm:$0xf]
  %v49 = vld [vmem:[%s0 + $0x8c] sm:$0xf]
  %v50 = vld [vmem:[%s0 + $0x90] sm:$0xf]
  %v51 = vld [vmem:[%s0 + $0x94] sm:$0xf]
  %v52 = vld [vmem:[%s0 + $0x98] sm:$0xf]
  %v53 = vld [vmem:[%s0 + $0x9c] sm:$0xf]
  %v54 = vld [vmem:[%s0 + $0xa0] sm:$0xf]
  %v55 = vld [vmem:[%s0 + $0xa4] sm:$0xf]
  %v56 = vld [vmem:[%s0 + $0xa8] sm:$0xf]
  %v57 = vld [vmem:[%s0 + $0xac] sm:$0xf]
  %v58 = vld [vmem:[%s0 + $0xb0] sm:$0xf]
  %v59 = vld [vmem:[%s0 + $0xb4] sm:$0xf]
  %v60 = vld [vmem:[%s0 + $0xb8] sm:$0xf]
  %v61 = vld [vmem:[%s0 + $0xbc] sm:$0xf]
  %v62 = vld [vmem:[%s0 + $0xc0] sm:$0xf]
  %v63 = vld [vmem:[%s0 + $0xc4] sm:$0xf]
  %v64 = vld [vmem:[%s0 + $0xc8] sm:$0xf]
  %v65 = vld [vmem:[%s0 + $0xcc] sm:$0xf]
  %v66 = vld [vmem:[%s0 + $0xd0] sm:$0xf]
  %v67 = vld [vmem:[%s0 + $0xd4] sm:$0xf]
  %v68 = vld [vmem:[%s0 + $0xd8] sm:$0xf]
  %v69 = vld [vmem:[%s0 + $0xdc] sm:$0xf]
  %v70 = vld [vmem:[%s0 + $0xe0] sm:$0xf]
  %v71 = vld [vmem:[%s0 + $0xe4] sm:$0xf]
  %v72 = vld [vmem:[%s0 + $0xe8] sm:$0xf]
  %v73 = vld [vmem:[%s0 + $0xec] sm:$0xf]
  %v74 = vld [vmem:[%s0 + $0xf0] sm:$0xf]
  %v75 = vld [vmem:[%s0 + $0xf4] sm:$0xf]
  %v76 = vld [vmem:[%s0 + $0xf8] sm:$0xf]
  %v77 = vld [vmem:[%s0 + $0xfc] sm:$0xf]
  %v78 = vunpack.c.l.bf16 %v14
  %v79 = vunpack.c.l.bf16 %v15
  %v80 = vunpack.c.l.bf16 %v16
  %v81 = vunpack.c.l.bf16 %v17
  %v82 = vunpack.c.l.bf16 %v18
  %v83 = vunpack.c.l.bf16 %v19
  %v84 = vunpack.c.l.bf16 %v20
  %v85 = vunpack.c.l.bf16 %v21
  %v86 = vunpack.c.l.bf16 %v22
  %v87 = vunpack.c.l.bf16 %v23
  %v88 = vunpack.c.l.bf16 %v24
  %v89 = vunpack.c.l.bf16 %v25
  %v90 = vunpack.c.l.bf16 %v26
  %v91 = vunpack.c.l.bf16 %v27
  %v92 = vunpack.c.l.bf16 %v28
  %v93 = vunpack.c.l.bf16 %v29
  %v94 = vunpack.c.l.bf16 %v30
  %v95 = vunpack.c.l.bf16 %v31
  %v96 = vunpack.c.l.bf16 %v32
  %v97 = vunpack.c.l.bf16 %v33
  %v98 = vunpack.c.l.bf16 %v34
  %v99 = vunpack.c.l.bf16 %v35
  %v100 = vunpack.c.l.bf16 %v36
  %v101 = vunpack.c.l.bf16 %v37
  %v102 = vunpack.c.l.bf16 %v38
  %v103 = vunpack.c.l.bf16 %v39
  %v104 = vunpack.c.l.bf16 %v40
  %v105 = vunpack.c.l.bf16 %v41
  %v106 = vunpack.c.l.bf16 %v42
  %v107 = vunpack.c.l.bf16 %v43
  %v108 = vunpack.c.l.bf16 %v44
  %v109 = vunpack.c.l.bf16 %v45
  %v110 = vunpack.c.l.bf16 %v46
  %v111 = vunpack.c.l.bf16 %v47
  %v112 = vunpack.c.l.bf16 %v48
  %v113 = vunpack.c.l.bf16 %v49
  %v114 = vunpack.c.l.bf16 %v50
  %v115 = vunpack.c.l.bf16 %v51
  %v116 = vunpack.c.l.bf16 %v52
  %v117 = vunpack.c.l.bf16 %v53
  %v118 = vunpack.c.l.bf16 %v54
  %v119 = vunpack.c.l.bf16 %v55
  %v120 = vunpack.c.l.bf16 %v56
  %v121 = vunpack.c.l.bf16 %v57
  %v122 = vunpack.c.l.bf16 %v58
  %v123 = vunpack.c.l.bf16 %v59
  %v124 = vunpack.c.l.bf16 %v60
  %v125 = vunpack.c.l.bf16 %v61
  %v126 = vunpack.c.l.bf16 %v62
  %v127 = vunpack.c.l.bf16 %v63
  %v128 = vunpack.c.l.bf16 %v64
  %v129 = vunpack.c.l.bf16 %v65
  %v130 = vunpack.c.l.bf16 %v66
  %v131 = vunpack.c.l.bf16 %v67
  %v132 = vunpack.c.l.bf16 %v68
  %v133 = vunpack.c.l.bf16 %v69
  %v134 = vunpack.c.l.bf16 %v70
  %v135 = vunpack.c.l.bf16 %v71
  %v136 = vunpack.c.l.bf16 %v72
  %v137 = vunpack.c.l.bf16 %v73
  %v138 = vunpack.c.l.bf16 %v74
  %v139 = vunpack.c.l.bf16 %v75
  %v140 = vunpack.c.l.bf16 %v76
  %v141 = vunpack.c.l.bf16 %v77
  %v142 = vld [vmem:[%s1] sm:$0x1]
  %v144 = vperm.slane %v142, 0
  %v146 = vmul.f32 %v78, %v144
  %v147 = vmul.f32 %v79, %v144
  %v148 = vmul.f32 %v80, %v144
  %v149 = vmul.f32 %v81, %v144
  %v150 = vmul.f32 %v82, %v144
  %v151 = vmul.f32 %v83, %v144
  %v152 = vmul.f32 %v84, %v144
  %v153 = vmul.f32 %v85, %v144
  %v154 = vmul.f32 %v86, %v144
  %v155 = vmul.f32 %v87, %v144
  %v156 = vmul.f32 %v88, %v144
  %v157 = vmul.f32 %v89, %v144
  %v158 = vmul.f32 %v90, %v144
  %v159 = vmul.f32 %v91, %v144
  %v160 = vmul.f32 %v92, %v144
  %v161 = vmul.f32 %v93, %v144
  %v162 = vmul.f32 %v94, %v144
  %v163 = vmul.f32 %v95, %v144
  %v164 = vmul.f32 %v96, %v144
  %v165 = vmul.f32 %v97, %v144
  %v166 = vmul.f32 %v98, %v144
  %v167 = vmul.f32 %v99, %v144
  %v168 = vmul.f32 %v100, %v144
  %v169 = vmul.f32 %v101, %v144
  %v170 = vmul.f32 %v102, %v144
  %v171 = vmul.f32 %v103, %v144
  %v172 = vmul.f32 %v104, %v144
  %v173 = vmul.f32 %v105, %v144
  %v174 = vmul.f32 %v106, %v144
  %v175 = vmul.f32 %v107, %v144
  %v176 = vmul.f32 %v108, %v144
  %v177 = vmul.f32 %v109, %v144
  %v178 = vmul.f32 %v110, %v144
  %v179 = vmul.f32 %v111, %v144
  %v180 = vmul.f32 %v112, %v144
  %v181 = vmul.f32 %v113, %v144
  %v182 = vmul.f32 %v114, %v144
  %v183 = vmul.f32 %v115, %v144
  %v184 = vmul.f32 %v116, %v144
  %v185 = vmul.f32 %v117, %v144
  %v186 = vmul.f32 %v118, %v144
  %v187 = vmul.f32 %v119, %v144
  %v188 = vmul.f32 %v120, %v144
  %v189 = vmul.f32 %v121, %v144
  %v190 = vmul.f32 %v122, %v144
  %v191 = vmul.f32 %v123, %v144
  %v192 = vmul.f32 %v124, %v144
  %v193 = vmul.f32 %v125, %v144
  %v194 = vmul.f32 %v126, %v144
  %v195 = vmul.f32 %v127, %v144
  %v196 = vmul.f32 %v128, %v144
  %v197 = vmul.f32 %v129, %v144
  %v198 = vmul.f32 %v130, %v144
  %v199 = vmul.f32 %v131, %v144
  %v200 = vmul.f32 %v132, %v144
  %v201 = vmul.f32 %v133, %v144
  %v202 = vmul.f32 %v134, %v144
  %v203 = vmul.f32 %v135, %v144
  %v204 = vmul.f32 %v136, %v144
  %v205 = vmul.f32 %v137, %v144
  %v206 = vmul.f32 %v138, %v144
  %v207 = vmul.f32 %v139, %v144
  %v208 = vmul.f32 %v140, %v144
  %v209 = vmul.f32 %v141, %v144
  %v210 = vld [vmem:[%s2] sm:$0x1]
  %v212 = vperm.slane %v210, 0
  %v214 = vadd.f32 %v146, %v212
  %v215 = vadd.f32 %v147, %v212
  %v216 = vadd.f32 %v148, %v212
  %v217 = vadd.f32 %v149, %v212
  %v218 = vadd.f32 %v150, %v212
  %v219 = vadd.f32 %v151, %v212
  %v220 = vadd.f32 %v152, %v212
  %v221 = vadd.f32 %v153, %v212
  %v222 = vadd.f32 %v154, %v212
  %v223 = vadd.f32 %v155, %v212
  %v224 = vadd.f32 %v156, %v212
  %v225 = vadd.f32 %v157, %v212
  %v226 = vadd.f32 %v158, %v212
  %v227 = vadd.f32 %v159, %v212
  %v228 = vadd.f32 %v160, %v212
  %v229 = vadd.f32 %v161, %v212
  %v230 = vadd.f32 %v162, %v212
  %v231 = vadd.f32 %v163, %v212
  %v232 = vadd.f32 %v164, %v212
  %v233 = vadd.f32 %v165, %v212
  %v234 = vadd.f32 %v166, %v212
  %v235 = vadd.f32 %v167, %v212
  %v236 = vadd.f32 %v168, %v212
  %v237 = vadd.f32 %v169, %v212
  %v238 = vadd.f32 %v170, %v212
  %v239 = vadd.f32 %v171, %v212
  %v240 = vadd.f32 %v172, %v212
  %v241 = vadd.f32 %v173, %v212
  %v242 = vadd.f32 %v174, %v212
  %v243 = vadd.f32 %v175, %v212
  %v244 = vadd.f32 %v176, %v212
  %v245 = vadd.f32 %v177, %v212
  %v246 = vadd.f32 %v178, %v212
  %v247 = vadd.f32 %v179, %v212
  %v248 = vadd.f32 %v180, %v212
  %v249 = vadd.f32 %v181, %v212
  %v250 = vadd.f32 %v182, %v212
  %v251 = vadd.f32 %v183, %v212
  %v252 = vadd.f32 %v184, %v212
  %v253 = vadd.f32 %v185, %v212
  %v254 = vadd.f32 %v186, %v212
  %v255 = vadd.f32 %v187, %v212
  %v256 = vadd.f32 %v188, %v212
  %v257 = vadd.f32 %v189, %v212
  %v258 = vadd.f32 %v190, %v212
  %v259 = vadd.f32 %v191, %v212
  %v260 = vadd.f32 %v192, %v212
  %v261 = vadd.f32 %v193, %v212
  %v262 = vadd.f32 %v194, %v212
  %v263 = vadd.f32 %v195, %v212
  %v264 = vadd.f32 %v196, %v212
  %v265 = vadd.f32 %v197, %v212
  %v266 = vadd.f32 %v198, %v212
  %v267 = vadd.f32 %v199, %v212
  %v268 = vadd.f32 %v200, %v212
  %v269 = vadd.f32 %v201, %v212
  %v270 = vadd.f32 %v202, %v212
  %v271 = vadd.f32 %v203, %v212
  %v272 = vadd.f32 %v204, %v212
  %v273 = vadd.f32 %v205, %v212
  %v274 = vadd.f32 %v206, %v212
  %v275 = vadd.f32 %v207, %v212
  %v276 = vadd.f32 %v208, %v212
  %v277 = vadd.f32 %v209, %v212
  %v278 = vmax.f32 %v214, 0.0
  %v279 = vmax.f32 %v215, 0.0
  %v280 = vmax.f32 %v216, 0.0
  %v281 = vmax.f32 %v217, 0.0
  %v282 = vmax.f32 %v218, 0.0
  %v283 = vmax.f32 %v219, 0.0
  %v284 = vmax.f32 %v220, 0.0
  %v285 = vmax.f32 %v221, 0.0
  %v286 = vmax.f32 %v222, 0.0
  %v287 = vmax.f32 %v223, 0.0
  %v288 = vmax.f32 %v224, 0.0
  %v289 = vmax.f32 %v225, 0.0
  %v290 = vmax.f32 %v226, 0.0
  %v291 = vmax.f32 %v227, 0.0
  %v292 = vmax.f32 %v228, 0.0
  %v293 = vmax.f32 %v229, 0.0
  %v294 = vmax.f32 %v230, 0.0
  %v295 = vmax.f32 %v231, 0.0
  %v296 = vmax.f32 %v232, 0.0
  %v297 = vmax.f32 %v233, 0.0
  %v298 = vmax.f32 %v234, 0.0
  %v299 = vmax.f32 %v235, 0.0
  %v300 = vmax.f32 %v236, 0.0
  %v301 = vmax.f32 %v237, 0.0
  %v302 = vmax.f32 %v238, 0.0
  %v303 = vmax.f32 %v239, 0.0
  %v304 = vmax.f32 %v240, 0.0
  %v305 = vmax.f32 %v241, 0.0
  %v306 = vmax.f32 %v242, 0.0
  %v307 = vmax.f32 %v243, 0.0
  %v308 = vmax.f32 %v244, 0.0
  %v309 = vmax.f32 %v245, 0.0
  %v310 = vmax.f32 %v246, 0.0
  %v311 = vmax.f32 %v247, 0.0
  %v312 = vmax.f32 %v248, 0.0
  %v313 = vmax.f32 %v249, 0.0
  %v314 = vmax.f32 %v250, 0.0
  %v315 = vmax.f32 %v251, 0.0
  %v316 = vmax.f32 %v252, 0.0
  %v317 = vmax.f32 %v253, 0.0
  %v318 = vmax.f32 %v254, 0.0
  %v319 = vmax.f32 %v255, 0.0
  %v320 = vmax.f32 %v256, 0.0
  %v321 = vmax.f32 %v257, 0.0
  %v322 = vmax.f32 %v258, 0.0
  %v323 = vmax.f32 %v259, 0.0
  %v324 = vmax.f32 %v260, 0.0
  %v325 = vmax.f32 %v261, 0.0
  %v326 = vmax.f32 %v262, 0.0
  %v327 = vmax.f32 %v263, 0.0
  %v328 = vmax.f32 %v264, 0.0
  %v329 = vmax.f32 %v265, 0.0
  %v330 = vmax.f32 %v266, 0.0
  %v331 = vmax.f32 %v267, 0.0
  %v332 = vmax.f32 %v268, 0.0
  %v333 = vmax.f32 %v269, 0.0
  %v334 = vmax.f32 %v270, 0.0
  %v335 = vmax.f32 %v271, 0.0
  %v336 = vmax.f32 %v272, 0.0
  %v337 = vmax.f32 %v273, 0.0
  %v338 = vmax.f32 %v274, 0.0
  %v339 = vmax.f32 %v275, 0.0
  %v340 = vmax.f32 %v276, 0.0
  %v341 = vmax.f32 %v277, 0.0
  %342 = vst [vmem:[%s3] sm:$0xff] %v278
  %343 = vst [vmem:[%s3 + $0x8] sm:$0xff] %v279
  %344 = vst [vmem:[%s3 + $0x10] sm:$0xff] %v280
  %345 = vst [vmem:[%s3 + $0x18] sm:$0xff] %v281
  %346 = vst [vmem:[%s3 + $0x20] sm:$0xff] %v282
  %347 = vst [vmem:[%s3 + $0x28] sm:$0xff] %v283
  %348 = vst [vmem:[%s3 + $0x30] sm:$0xff] %v284
  %349 = vst [vmem:[%s3 + $0x38] sm:$0xff] %v285
  %350 = vst [vmem:[%s3 + $0x40] sm:$0xff] %v286
  %351 = vst [vmem:[%s3 + $0x48] sm:$0xff] %v287
  %352 = vst [vmem:[%s3 + $0x50] sm:$0xff] %v288
  %353 = vst [vmem:[%s3 + $0x58] sm:$0xff] %v289
  %354 = vst [vmem:[%s3 + $0x60] sm:$0xff] %v290
  %355 = vst [vmem:[%s3 + $0x68] sm:$0xff] %v291
  %356 = vst [vmem:[%s3 + $0x70] sm:$0xff] %v292
  %357 = vst [vmem:[%s3 + $0x78] sm:$0xff] %v293
  %358 = vst [vmem:[%s3 + $0x80] sm:$0xff] %v294
  %359 = vst [vmem:[%s3 + $0x88] sm:$0xff] %v295
  %360 = vst [vmem:[%s3 + $0x90] sm:$0xff] %v296
  %361 = vst [vmem:[%s3 + $0x98] sm:$0xff] %v297
  %362 = vst [vmem:[%s3 + $0xa0] sm:$0xff] %v298
  %363 = vst [vmem:[%s3 + $0xa8] sm:$0xff] %v299
  %364 = vst [vmem:[%s3 + $0xb0] sm:$0xff] %v300
  %365 = vst [vmem:[%s3 + $0xb8] sm:$0xff] %v301
  %366 = vst [vmem:[%s3 + $0xc0] sm:$0xff] %v302
  %367 = vst [vmem:[%s3 + $0xc8] sm:$0xff] %v303
  %368 = vst [vmem:[%s3 + $0xd0] sm:$0xff] %v304
  %369 = vst [vmem:[%s3 + $0xd8] sm:$0xff] %v305
  %370 = vst [vmem:[%s3 + $0xe0] sm:$0xff] %v306
  %371 = vst [vmem:[%s3 + $0xe8] sm:$0xff] %v307
  %372 = vst [vmem:[%s3 + $0xf0] sm:$0xff] %v308
  %373 = vst [vmem:[%s3 + $0xf8] sm:$0xff] %v309
  %374 = vst [vmem:[%s3 + $0x100] sm:$0xff] %v310
  %375 = vst [vmem:[%s3 + $0x108] sm:$0xff] %v311
  %376 = vst [vmem:[%s3 + $0x110] sm:$0xff] %v312
  %377 = vst [vmem:[%s3 + $0x118] sm:$0xff] %v313
  %378 = vst [vmem:[%s3 + $0x120] sm:$0xff] %v314
  %379 = vst [vmem:[%s3 + $0x128] sm:$0xff] %v315
  %380 = vst [vmem:[%s3 + $0x130] sm:$0xff] %v316
  %381 = vst [vmem:[%s3 + $0x138] sm:$0xff] %v317
  %382 = vst [vmem:[%s3 + $0x140] sm:$0xff] %v318
  %383 = vst [vmem:[%s3 + $0x148] sm:$0xff] %v319
  %384 = vst [vmem:[%s3 + $0x150] sm:$0xff] %v320
  %385 = vst [vmem:[%s3 + $0x158] sm:$0xff] %v321
  %386 = vst [vmem:[%s3 + $0x160] sm:$0xff] %v322
  %387 = vst [vmem:[%s3 + $0x168] sm:$0xff] %v323
  %388 = vst [vmem:[%s3 + $0x170] sm:$0xff] %v324
  %389 = vst [vmem:[%s3 + $0x178] sm:$0xff] %v325
  %390 = vst [vmem:[%s3 + $0x180] sm:$0xff] %v326
  %391 = vst [vmem:[%s3 + $0x188] sm:$0xff] %v327
  %392 = vst [vmem:[%s3 + $0x190] sm:$0xff] %v328
  %393 = vst [vmem:[%s3 + $0x198] sm:$0xff] %v329
  %394 = vst [vmem:[%s3 + $0x1a0] sm:$0xff] %v330
  %395 = vst [vmem:[%s3 + $0x1a8] sm:$0xff] %v331
  %396 = vst [vmem:[%s3 + $0x1b0] sm:$0xff] %v332
  %397 = vst [vmem:[%s3 + $0x1b8] sm:$0xff] %v333
  %398 = vst [vmem:[%s3 + $0x1c0] sm:$0xff] %v334
  %399 = vst [vmem:[%s3 + $0x1c8] sm:$0xff] %v335
  %400 = vst [vmem:[%s3 + $0x1d0] sm:$0xff] %v336
  %401 = vst [vmem:[%s3 + $0x1d8] sm:$0xff] %v337
  %402 = vst [vmem:[%s3 + $0x1e0] sm:$0xff] %v338
  %403 = vst [vmem:[%s3 + $0x1e8] sm:$0xff] %v339
  %404 = vst [vmem:[%s3 + $0x1f0] sm:$0xff] %v340
  %405 = vst [vmem:[%s3 + $0x1f8] sm:$0xff] %v341
  // Predicated region
  $region14: #{basic_block_forward.7} parent=0 // pred_check
    _
  $region15: #{basic_block_forward.7} parent=0 // pred_check_branch
    %407 = sbr.rel (0) target = $region17
  $region16: #{basic_block_forward.7} parent=0 // pred_region
    _
  $region17: #{basic_block_forward.7} parent=0 // pred_fallthru
    _
  // Predicated region
  $region18: #{basic_block_forward.7} parent=0 // pred_check
    _
  $region19: #{basic_block_forward.7} parent=0 // pred_check_branch
    %409 = sbr.rel (0) target = $region21
  $region20: #{basic_block_forward.7} parent=0 // pred_region
    _
  $region21: #{basic_block_forward.7} parent=0 // pred_fallthru
    _

// kernel: basic_block_forward.6
$region0: #{basic_block_forward.6}
  #allocation0 [shape = 'u32[]', space=smem, size = 0x4, offset = 0x4, fixed_abs, tag = 'smem constant byte address 0x4 - core index']
  #allocation1 [shape = 'u32[72,128]{1,0:T(1,128)}', space=vmem, size = 0x9000, scoped, tag = 'internal scratch']
  %s0 = inlined_call_operand.vmem [shape: bf16[2,18,18,128], index: 0, kind: input, shape index: {}, may-alias: {0,1,2}]
  %s1 = inlined_call_operand.vmem [shape: bf16[2,18,18,128], index: 1, kind: input, shape index: {}, may-alias: {0,1,2}]
  %s2 = inlined_call_operand.vmem [shape: bf16[2,18,18,128], index: 2, kind: input, shape index: {}, may-alias: {0,1,2}]
  %s3 = inlined_call_operand.vmem [shape: bf16[1152,128], index: 3, kind: input, shape index: {}]
  %s4 = inlined_call_operand.vmem [shape: f32[1,128], index: 4, kind: input, shape index: {}]
  %s5 = inlined_call_operand.vmem [shape: bf16[2,16,16,128], index: 5, kind: output, shape index: {0}]
  %s6 = inlined_call_operand.vmem [shape: f32[2,1,2,128], index: 6, kind: output, shape index: {1}]
  %7 = xla_tuple %s5, %s6
  %s8 = sld [smem:[#allocation0]]
  $region61: #{basic_block_forward.6} parent=0
    _
  %s10 = ssub.s32 1, %s8
  %s11 = scalar_select 0, %s10, %s8
  loop: start=0, step=1, limit=4
  $region2: #{basic_block_forward.6} parent=0 // loop_pre_header
    _
  $region3: #{basic_block_forward.6} parent=0 // loop_header
    %s13 = sphi 0, %s17
    %p14 = scmp.ge.s32.totalorder %s13, 4
    %s20 = sphi 0, %s32
    %s21 = sphi 0, %s28
    %s22 = sphi 0, %s20
    %s23 = sphi 0, %s21
    %s24 = sphi 0, %s22
    %s25 = sphi 0, %s23
    %s37 = sphi 0, %s39
    %s40 = sphi 0, %s37
    %s41 = sphi 0, %s40
    %s57 = sphi 0, %s41
    %s69 = sphi 0, %s71
    %s72 = sphi 0, %s69
    %s73 = sphi 0, %s72
    %s89 = sphi 0, %s73
    %s101 = sphi 0, %s103
    %s104 = sphi 0, %s101
    %s105 = sphi 0, %s104
    %s121 = sphi 0, %s105
    %s125 = sphi 0, %s125
    %s127 = sphi 0, %s125
    %s128 = sphi 0, %s127
    %s142 = sphi 0, %s128
    %s146 = sphi 0, %s146
    %s148 = sphi 0, %s146
    %s149 = sphi 0, %s148
    %s163 = sphi 0, %s149
    %s171 = sphi 0, %s173
    %s174 = sphi 0, %s171
    %s175 = sphi 0, %s174
    %s191 = sphi 0, %s175
    %s199 = sphi 0, %s201
    %s202 = sphi 0, %s199
    %s203 = sphi 0, %s202
    %s219 = sphi 0, %s203
  $region4: #{basic_block_forward.6} parent=0 // loop_header_branch
    %16 = sbr.rel (%p14) target = $region8
  $region5: #{basic_block_forward.6} parent=0 // loop_body
    %s18 = ssub.s32 %s13, 1
    %s19 = ssub.s32 %s13, 2
    %s26 = sadd.s32 1, %s21
    %p27 = scmp.ge.s32.totalorder %s26, 1
    %s28 = scalar_select %p27, 0, %s26
    %s29 = sadd.s32 1, %s20
    %s30 = scalar_select %p27, %s29, %s20
    %p31 = scmp.ge.s32.totalorder %s30, 2
    %s32 = scalar_select %p31, 0, %s30
    %s33 = ssub.s32 %s20, %s32
    %s34 = ssub.s32 %s21, %s28
    %s35 = sor.u32 %s33, %s34
    %p36 = scmp.eq.s32.totalorder %s35, 0
    %s38 = sadd.s32 %s37, 1
    %s39 = scalar_select %p36, %s37, %s38
    %p42 = pneg %p36
    %p43 = scmp.eq.s32.totalorder %s13, 1
    %p44 = por %p42, %p43
    %p45 = scmp.ne.s32.totalorder %s37, %s40
    %p46 = scmp.eq.s32.totalorder %s13, 0
    %p47 = por %p45, %p46
    %p48 = scmp.ne.s32.totalorder %s37, %s40
    %p49 = scmp.eq.s32.totalorder %s18, 1
    %p50 = por %p48, %p49
    %p51 = scmp.ne.s32.totalorder %s40, %s41
    %p52 = scmp.eq.s32.totalorder %s18, 0
    %p53 = por %p51, %p52
    %p54 = scmp.ne.s32.totalorder %s40, %s41
    %p55 = scmp.eq.s32.totalorder %s19, 1
    %p56 = por %p54, %p55
    %p58 = scmp.ne.s32.totalorder %s41, %s57
    %p59 = scmp.eq.s32.totalorder %s19, 0
    %p60 = por %p58, %p59
    %s61 = smul.u32 %s21, 16
    %s62 = sadd.s32 %s61, 16
    %s63 = smul.u32 %s28, 16
    %s64 = sadd.s32 %s63, 16
    %s65 = ssub.s32 %s20, %s32
    %s66 = ssub.s32 %s62, %s64
    %s67 = sor.u32 %s65, %s66
    %p68 = scmp.eq.s32.totalorder %s67, 0
    %s70 = sadd.s32 %s69, 1
    %s71 = scalar_select %p68, %s69, %s70
    %p74 = pneg %p68
    %p75 = scmp.eq.s32.totalorder %s13, 1
    %p76 = por %p74, %p75
    %p77 = scmp.ne.s32.totalorder %s69, %s72
    %p78 = scmp.eq.s32.totalorder %s13, 0
    %p79 = por %p77, %p78
    %p80 = scmp.ne.s32.totalorder %s69, %s72
    %p81 = scmp.eq.s32.totalorder %s18, 1
    %p82 = por %p80, %p81
    %p83 = scmp.ne.s32.totalorder %s72, %s73
    %p84 = scmp.eq.s32.totalorder %s18, 0
    %p85 = por %p83, %p84
    %p86 = scmp.ne.s32.totalorder %s72, %s73
    %p87 = scmp.eq.s32.totalorder %s19, 1
    %p88 = por %p86, %p87
    %p90 = scmp.ne.s32.totalorder %s73, %s89
    %p91 = scmp.eq.s32.totalorder %s19, 0
    %p92 = por %p90, %p91
    %s93 = smul.u32 %s21, 16
    %s94 = sadd.s32 %s93, 17
    %s95 = smul.u32 %s28, 16
    %s96 = sadd.s32 %s95, 17
    %s97 = ssub.s32 %s20, %s32
    %s98 = ssub.s32 %s94, %s96
    %s99 = sor.u32 %s97, %s98
    %p100 = scmp.eq.s32.totalorder %s99, 0
    %s102 = sadd.s32 %s101, 1
    %s103 = scalar_select %p100, %s101, %s102
    %p106 = pneg %p100
    %p107 = scmp.eq.s32.totalorder %s13, 1
    %p108 = por %p106, %p107
    %p109 = scmp.ne.s32.totalorder %s101, %s104
    %p110 = scmp.eq.s32.totalorder %s13, 0
    %p111 = por %p109, %p110
    %p112 = scmp.ne.s32.totalorder %s101, %s104
    %p113 = scmp.eq.s32.totalorder %s18, 1
    %p114 = por %p112, %p113
    %p115 = scmp.ne.s32.totalorder %s104, %s105
    %p116 = scmp.eq.s32.totalorder %s18, 0
    %p117 = por %p115, %p116
    %p118 = scmp.ne.s32.totalorder %s104, %s105
    %p119 = scmp.eq.s32.totalorder %s19, 1
    %p120 = por %p118, %p119
    %p122 = scmp.ne.s32.totalorder %s105, %s121
    %p123 = scmp.eq.s32.totalorder %s19, 0
    %p124 = por %p122, %p123
    %s126 = sadd.s32 %s125, 1
    %p129 = scmp.eq.s32.totalorder %s13, 1
    %p130 = scmp.ne.s32.totalorder %s125, %s127
    %p131 = scmp.eq.s32.totalorder %s13, 0
    %p132 = por %p130, %p131
    %p133 = scmp.ne.s32.totalorder %s125, %s127
    %p134 = scmp.eq.s32.totalorder %s18, 1
    %p135 = por %p133, %p134
    %p136 = scmp.ne.s32.totalorder %s127, %s128
    %p137 = scmp.eq.s32.totalorder %s18, 0
    %p138 = por %p136, %p137
    %p139 = scmp.ne.s32.totalorder %s127, %s128
    %p140 = scmp.eq.s32.totalorder %s19, 1
    %p141 = por %p139, %p140
    %p143 = scmp.ne.s32.totalorder %s128, %s142
    %p144 = scmp.eq.s32.totalorder %s19, 0
    %p145 = por %p143, %p144
    %s147 = sadd.s32 %s146, 1
    %p150 = scmp.eq.s32.totalorder %s13, 1
    %p151 = scmp.ne.s32.totalorder %s146, %s148
    %p152 = scmp.eq.s32.totalorder %s13, 0
    %p153 = por %p151, %p152
    %p154 = scmp.ne.s32.totalorder %s146, %s148
    %p155 = scmp.eq.s32.totalorder %s18, 1
    %p156 = por %p154, %p155
    %p157 = scmp.ne.s32.totalorder %s148, %s149
    %p158 = scmp.eq.s32.totalorder %s18, 0
    %p159 = por %p157, %p158
    %p160 = scmp.ne.s32.totalorder %s148, %s149
    %p161 = scmp.eq.s32.totalorder %s19, 1
    %p162 = por %p160, %p161
    %p164 = scmp.ne.s32.totalorder %s149, %s163
    %p165 = scmp.eq.s32.totalorder %s19, 0
    %p166 = por %p164, %p165
    %s167 = ssub.s32 %s20, %s32
    %s168 = ssub.s32 %s21, %s28
    %s169 = sor.u32 %s167, %s168
    %p170 = scmp.eq.s32.totalorder %s169, 0
    %s172 = sadd.s32 %s171, 1
    %s173 = scalar_select %p170, %s171, %s172
    %p176 = pneg %p170
    %p177 = scmp.eq.s32.totalorder %s13, 1
    %p178 = por %p176, %p177
    %p179 = scmp.ne.s32.totalorder %s171, %s174
    %p180 = scmp.eq.s32.totalorder %s13, 0
    %p181 = por %p179, %p180
    %p182 = scmp.ne.s32.totalorder %s171, %s174
    %p183 = scmp.eq.s32.totalorder %s18, 1
    %p184 = por %p182, %p183
    %p185 = scmp.ne.s32.totalorder %s174, %s175
    %p186 = scmp.eq.s32.totalorder %s18, 0
    %p187 = por %p185, %p186
    %p188 = scmp.ne.s32.totalorder %s174, %s175
    %p189 = scmp.eq.s32.totalorder %s19, 1
    %p190 = por %p188, %p189
    %p192 = scmp.ne.s32.totalorder %s175, %s191
    %p193 = scmp.eq.s32.totalorder %s19, 0
    %p194 = por %p192, %p193
    %s195 = ssub.s32 %s20, %s32
    %s196 = ssub.s32 %s21, %s28
    %s197 = sor.u32 %s195, %s196
    %p198 = scmp.eq.s32.totalorder %s197, 0
    %s200 = sadd.s32 %s199, 1
    %s201 = scalar_select %p198, %s199, %s200
    %p204 = pneg %p198
    %p205 = scmp.eq.s32.totalorder %s13, 1
    %p206 = por %p204, %p205
    %p207 = scmp.ne.s32.totalorder %s199, %s202
    %p208 = scmp.eq.s32.totalorder %s13, 0
    %p209 = por %p207, %p208
    %p210 = scmp.ne.s32.totalorder %s199, %s202
    %p211 = scmp.eq.s32.totalorder %s18, 1
    %p212 = por %p210, %p211
    %p213 = scmp.ne.s32.totalorder %s202, %s203
    %p214 = scmp.eq.s32.totalorder %s18, 0
    %p215 = por %p213, %p214
    %p216 = scmp.ne.s32.totalorder %s202, %s203
    %p217 = scmp.eq.s32.totalorder %s19, 1
    %p218 = por %p216, %p217
    %p220 = scmp.ne.s32.totalorder %s203, %s219
    %p221 = scmp.eq.s32.totalorder %s19, 0
    %p222 = por %p220, %p221
    %p223 = scmp.le.s32.totalorder 1, %s13
    %p224 = scmp.lt.s32.totalorder %s13, 3
    %p225 = pnand %p223, %p224
    %p226 = pneg %p225
    // Predicated region
    $region9: #{basic_block_forward.6} parent=5 // pred_check
      _
    $region10: #{basic_block_forward.6} parent=5 // pred_check_branch
      %228 = sbr.rel (%p225) target = $region12
    $region11: #{basic_block_forward.6} parent=5 // pred_region
      %s229 = ssub.s32 %s13, 1
      // Predicated region
      $region13: #{basic_block_forward.6} parent=11 // pred_check
        %p230 = pneg %p138
      $region14: #{basic_block_forward.6} parent=11 // pred_check_branch
        %232 = sbr.rel (%p230) target = $region16
      $region15: #{basic_block_forward.6} parent=11 // pred_region
        _
      $region16: #{basic_block_forward.6} parent=11 // pred_fallthru
        _
      // Predicated region
      $region17: #{basic_block_forward.6} parent=11 // pred_check
        %p233 = pneg %p159
      $region18: #{basic_block_forward.6} parent=11 // pred_check_branch
        %235 = sbr.rel (%p233) target = $region20
      $region19: #{basic_block_forward.6} parent=11 // pred_region
        _
      $region20: #{basic_block_forward.6} parent=11 // pred_fallthru
        _
    $region12: #{basic_block_forward.6} parent=5 // pred_fallthru
      _
    %p236 = scmp.lt.s32.totalorder %s13, 2
    // Predicated region
    $region21: #{basic_block_forward.6} parent=5 // pred_check
      %p237 = pneg %p236
    $region22: #{basic_block_forward.6} parent=5 // pred_check_branch
      %239 = sbr.rel (%p237) target = $region24
    $region23: #{basic_block_forward.6} parent=5 // pred_region
      // Predicated region
      $region25: #{basic_block_forward.6} parent=23 // pred_check
        %p240 = pneg %p47
      $region26: #{basic_block_forward.6} parent=23 // pred_check_branch
        %242 = sbr.rel (%p240) target = $region28
      $region27: #{basic_block_forward.6} parent=23 // pred_region
        %s243 = smul.u32 16, %s21
        %s244 = ssub.s32 18, %s243
        %p245 = scmp.lt.s32.totalorder %s244, 16
        %s246 = scalar_select %p245, %s244, 16
        %s247 = smul.u32 4, %s246
        %s248 = smul.u32 %s247, 3
        %p249 = scmp.lt.s32.totalorder %s20, 1
        %s250 = scalar_select %p249, %s20, 1
        %p251 = scmp.lt.s32.totalorder %s243, 17
        %s252 = scalar_select %p251, %s243, 17
        %s253 = smul.addr %s252, 3
        %s254 = smul.addr %s250, 54
        %s255 = sadd.s32 %s253, %s254
        %s256 = smul.addr %s255, 4
        %s257 = scalar_lea.vmem %s0, %s256
        %s258 = smul.u32 16, %s21
        %s259 = ssub.s32 18, %s258
        %p260 = scmp.lt.s32.totalorder %s259, 16
        %s261 = scalar_select %p260, %s259, 16
        %s262 = smul.u32 4, %s261
        %s263 = smul.u32 %s262, 3
      $region28: #{basic_block_forward.6} parent=23 // pred_fallthru
        _
      // Predicated region
      $region29: #{basic_block_forward.6} parent=23 // pred_check
        %p264 = pneg %p79
      $region30: #{basic_block_forward.6} parent=23 // pred_check_branch
        %266 = sbr.rel (%p264) target = $region32
      $region31: #{basic_block_forward.6} parent=23 // pred_region
        %s267 = smul.u32 %s21, 16
        %s268 = sadd.s32 %s267, 16
        %p269 = scmp.lt.s32.totalorder %s20, 1
        %s270 = scalar_select %p269, %s20, 1
        %p271 = scmp.lt.s32.totalorder %s268, 17
        %s272 = scalar_select %p271, %s268, 17
        %s273 = smul.addr %s272, 3
        %s274 = smul.addr %s270, 54
        %s275 = sadd.s32 %s273, %s274
        %s276 = smul.addr %s275, 4
        %s277 = scalar_lea.vmem %s1, %s276
        %s278 = smul.u32 %s21, 16
        %s279 = sadd.s32 %s278, 16
      $region32: #{basic_block_forward.6} parent=23 // pred_fallthru
        _
      // Predicated region
      $region33: #{basic_block_forward.6} parent=23 // pred_check
        %p280 = pneg %p111
      $region34: #{basic_block_forward.6} parent=23 // pred_check_branch
        %282 = sbr.rel (%p280) target = $region36
      $region35: #{basic_block_forward.6} parent=23 // pred_region
        %s283 = smul.u32 %s21, 16
        %s284 = sadd.s32 %s283, 17
        %p285 = scmp.lt.s32.totalorder %s20, 1
        %s286 = scalar_select %p285, %s20, 1
        %p287 = scmp.lt.s32.totalorder %s284, 17
        %s288 = scalar_select %p287, %s284, 17
        %s289 = smul.addr %s288, 3
        %s290 = smul.addr %s286, 54
        %s291 = sadd.s32 %s289, %s290
        %s292 = smul.addr %s291, 4
        %s293 = scalar_lea.vmem %s2, %s292
        %s294 = smul.u32 %s21, 16
        %s295 = sadd.s32 %s294, 17
      $region36: #{basic_block_forward.6} parent=23 // pred_fallthru
        _
    $region24: #{basic_block_forward.6} parent=5 // pred_fallthru
      _
    %p296 = scmp.le.s32.totalorder 1, %s13
    %p297 = scmp.lt.s32.totalorder %s13, 3
    %p298 = pnand %p296, %p297
    %p299 = pneg %p298
    // Predicated region
    $region37: #{basic_block_forward.6} parent=5 // pred_check
      _
    $region38: #{basic_block_forward.6} parent=5 // pred_check_branch
      %301 = sbr.rel (%p298) target = $region40
    $region39: #{basic_block_forward.6} parent=5 // pred_region
      %s302 = ssub.s32 %s13, 1
      %s303 = smul.u32 16, %s23
      %s304 = ssub.s32 18, %s303
      %p305 = scmp.lt.s32.totalorder %s304, 16
      %s306 = scalar_select %p305, %s304, 16
      %s307 = smul.u32 4, %s306
      %s308 = smul.u32 %s307, 3
      %p309 = scmp.lt.s32.totalorder %s22, 1
      %s310 = scalar_select %p309, %s22, 1
      %p311 = scmp.lt.s32.totalorder %s303, 17
      %s312 = scalar_select %p311, %s303, 17
      %s313 = smul.addr %s312, 3
      %s314 = smul.addr %s310, 54
      %s315 = sadd.s32 %s313, %s314
      %s316 = smul.addr %s315, 4
      %s317 = scalar_lea.vmem %s0, %s316
      %p318 = pneg %p53
      %p319 = pneg %p50
      %s320 = smul.u32 %s23, 16
      %s321 = sadd.s32 %s320, 16
      %p322 = scmp.lt.s32.totalorder %s22, 1
      %s323 = scalar_select %p322, %s22, 1
      %p324 = scmp.lt.s32.totalorder %s321, 17
      %s325 = scalar_select %p324, %s321, 17
      %s326 = smul.addr %s325, 3
      %s327 = smul.addr %s323, 54
      %s328 = sadd.s32 %s326, %s327
      %s329 = smul.addr %s328, 4
      %s330 = scalar_lea.vmem %s1, %s329
      %p331 = pneg %p85
      %p332 = pneg %p82
      %s333 = smul.u32 %s23, 16
      %s334 = sadd.s32 %s333, 17
      %p335 = scmp.lt.s32.totalorder %s22, 1
      %s336 = scalar_select %p335, %s22, 1
      %p337 = scmp.lt.s32.totalorder %s334, 17
      %s338 = scalar_select %p337, %s334, 17
      %s339 = smul.addr %s338, 3
      %s340 = smul.addr %s336, 54
      %s341 = sadd.s32 %s339, %s340
      %s342 = smul.addr %s341, 4
      %s343 = scalar_lea.vmem %s2, %s342
      %p344 = pneg %p117
      %p345 = pneg %p114
      %p346 = pneg %p138
      %p347 = pneg %p135
      %p348 = pneg %p159
      %p349 = pneg %p156
      %p350 = pneg %p187
      %p351 = pneg %p184
      %s352 = smul.u32 16, %s23
      %p353 = scmp.lt.s32.totalorder %s22, 1
      %s354 = scalar_select %p353, %s22, 1
      %p355 = scmp.lt.s32.totalorder %s352, 15
      %s356 = scalar_select %p355, %s352, 15
      %s357 = smul.addr %s356, 2
      %s358 = smul.addr %s354, 32
      %s359 = sadd.s32 %s357, %s358
      %s360 = smul.addr %s359, 4
      %s361 = scalar_lea.vmem %s5, %s360
      %p362 = pneg %p215
      %p363 = pneg %p212
      %p364 = scmp.lt.s32.totalorder %s22, 1
      %s365 = scalar_select %p364, %s22, 1
      %p366 = scmp.lt.s32.totalorder %s23, 0
      %s367 = scalar_select %p366, %s23, 0
      %s368 = sadd.s32 %s367, %s365
      %s369 = smul.addr %s368, 2
      %s370 = scalar_lea.vmem %s6, %s369
      %s371 = smul.u32 16, %s23
      %s372 = ssub.s32 18, %s371
      %p373 = scmp.lt.s32.totalorder %s372, 16
      %s374 = scalar_select %p373, %s372, 16
      %s375 = smul.u32 4, %s374
      %s376 = smul.u32 %s375, 3
      %p377 = scmp.lt.s32.totalorder %s22, 1
      %s378 = scalar_select %p377, %s22, 1
      %p379 = scmp.lt.s32.totalorder %s371, 17
      %s380 = scalar_select %p379, %s371, 17
      %s381 = smul.addr %s380, 3
      %s382 = smul.addr %s378, 54
      %s383 = sadd.s32 %s381, %s382
      %s384 = smul.addr %s383, 4
      %s385 = scalar_lea.vmem %s0, %s384
      %s386 = smul.u32 16, %s23
      %s387 = ssub.s32 18, %s386
      %p388 = scmp.lt.s32.totalorder %s387, 16
      %s389 = scalar_select %p388, %s387, 16
      %s390 = smul.u32 4, %s389
      %s391 = smul.u32 %s390, 3
      %s392 = smul.u32 %s23, 16
      %s393 = sadd.s32 %s392, 16
      %p394 = scmp.lt.s32.totalorder %s22, 1
      %s395 = scalar_select %p394, %s22, 1
      %p396 = scmp.lt.s32.totalorder %s393, 17
      %s397 = scalar_select %p396, %s393, 17
      %s398 = smul.addr %s397, 3
      %s399 = smul.addr %s395, 54
      %s400 = sadd.s32 %s398, %s399
      %s401 = smul.addr %s400, 4
      %s402 = scalar_lea.vmem %s1, %s401
      %s403 = smul.u32 %s23, 16
      %s404 = sadd.s32 %s403, 16
      %s405 = smul.u32 %s23, 16
      %s406 = sadd.s32 %s405, 17
      %p407 = scmp.lt.s32.totalorder %s22, 1
      %s408 = scalar_select %p407, %s22, 1
      %p409 = scmp.lt.s32.totalorder %s406, 17
      %s410 = scalar_select %p409, %s406, 17
      %s411 = smul.addr %s410, 3
      %s412 = smul.addr %s408, 54
      %s413 = sadd.s32 %s411, %s412
      %s414 = smul.addr %s413, 4
      %s415 = scalar_lea.vmem %s2, %s414
      %s416 = smul.u32 %s23, 16
      %s417 = sadd.s32 %s416, 17
      %s418 = smul.u32 16, %s23
      %p419 = scmp.lt.s32.totalorder %s22, 1
      %s420 = scalar_select %p419, %s22, 1
      %p421 = scmp.lt.s32.totalorder %s418, 15
      %s422 = scalar_select %p421, %s418, 15
      %s423 = smul.addr %s422, 2
      %s424 = smul.addr %s420, 32
      %s425 = sadd.s32 %s423, %s424
      %s426 = smul.addr %s425, 4
      %s427 = scalar_lea.vmem %s5, %s426
      %s428 = smul.u32 16, %s23
      %p429 = scmp.lt.s32.totalorder %s22, 1
      %s430 = scalar_select %p429, %s22, 1
      %p431 = scmp.lt.s32.totalorder %s23, 0
      %s432 = scalar_select %p431, %s23, 0
      %s433 = sadd.s32 %s432, %s430
      %s434 = smul.addr %s433, 2
      %s435 = scalar_lea.vmem %s6, %s434
      %v436 = vld [vmem:[%s385] sm:$0xf]
      %v437 = vld [vmem:[%s385 + $0x4] sm:$0xf]
      %v438 = vld [vmem:[%s385 + $0x8] sm:$0x1]
      %v439 = vld [vmem:[%s385 + $0xc] sm:$0xf]
      %v440 = vld [vmem:[%s385 + $0x10] sm:$0xf]
      %v441 = vld [vmem:[%s385 + $0x14] sm:$0x1]
      %v442 = vld [vmem:[%s385 + $0x18] sm:$0xf]
      %v443 = vld [vmem:[%s385 + $0x1c] sm:$0xf]
      %v444 = vld [vmem:[%s385 + $0x20] sm:$0x1]
      %v445 = vld [vmem:[%s385 + $0x24] sm:$0xf]
      %v446 = vld [vmem:[%s385 + $0x28] sm:$0xf]
      %v447 = vld [vmem:[%s385 + $0x2c] sm:$0x1]
      %v448 = vld [vmem:[%s385 + $0x30] sm:$0xf]
      %v449 = vld [vmem:[%s385 + $0x34] sm:$0xf]
      %v450 = vld [vmem:[%s385 + $0x38] sm:$0x1]
      %v451 = vld [vmem:[%s385 + $0x3c] sm:$0xf]
      %v452 = vld [vmem:[%s385 + $0x40] sm:$0xf]
      %v453 = vld [vmem:[%s385 + $0x44] sm:$0x1]
      %v454 = vld [vmem:[%s385 + $0x48] sm:$0xf]
      %v455 = vld [vmem:[%s385 + $0x4c] sm:$0xf]
      %v456 = vld [vmem:[%s385 + $0x50] sm:$0x1]
      %v457 = vld [vmem:[%s385 + $0x54] sm:$0xf]
      %v458 = vld [vmem:[%s385 + $0x58] sm:$0xf]
      %v459 = vld [vmem:[%s385 + $0x5c] sm:$0x1]
      %v460 = vld [vmem:[%s385 + $0x60] sm:$0xf]
      %v461 = vld [vmem:[%s385 + $0x64] sm:$0xf]
      %v462 = vld [vmem:[%s385 + $0x68] sm:$0x1]
      %v463 = vld [vmem:[%s385 + $0x6c] sm:$0xf]
      %v464 = vld [vmem:[%s385 + $0x70] sm:$0xf]
      %v465 = vld [vmem:[%s385 + $0x74] sm:$0x1]
      %v466 = vld [vmem:[%s385 + $0x78] sm:$0xf]
      %v467 = vld [vmem:[%s385 + $0x7c] sm:$0xf]
      %v468 = vld [vmem:[%s385 + $0x80] sm:$0x1]
      %v469 = vld [vmem:[%s385 + $0x84] sm:$0xf]
      %v470 = vld [vmem:[%s385 + $0x88] sm:$0xf]
      %v471 = vld [vmem:[%s385 + $0x8c] sm:$0x1]
      %v472 = vld [vmem:[%s385 + $0x90] sm:$0xf]
      %v473 = vld [vmem:[%s385 + $0x94] sm:$0xf]
      %v474 = vld [vmem:[%s385 + $0x98] sm:$0x1]
      %v475 = vld [vmem:[%s385 + $0x9c] sm:$0xf]
      %v476 = vld [vmem:[%s385 + $0xa0] sm:$0xf]
      %v477 = vld [vmem:[%s385 + $0xa4] sm:$0x1]
      %v478 = vld [vmem:[%s385 + $0xa8] sm:$0xf]
      %v479 = vld [vmem:[%s385 + $0xac] sm:$0xf]
      %v480 = vld [vmem:[%s385 + $0xb0] sm:$0x1]
      %v481 = vld [vmem:[%s385 + $0xb4] sm:$0xf]
      %v482 = vld [vmem:[%s385 + $0xb8] sm:$0xf]
      %v483 = vld [vmem:[%s385 + $0xbc] sm:$0x1]
      %v484 = vld [vmem:[%s402] sm:$0xf]
      %v485 = vld [vmem:[%s402 + $0x4] sm:$0xf]
      %v486 = vld [vmem:[%s402 + $0x8] sm:$0x1]
      %v487 = vld [vmem:[%s415] sm:$0xf]
      %v488 = vld [vmem:[%s415 + $0x4] sm:$0xf]
      %v489 = vld [vmem:[%s415 + $0x8] sm:$0x1]
      %v522 = vunpack.c.l.b16 %v436
      %v523 = vunpack.c.l.b16 %v437
      %v524 = vunpack.c.l.b16 %v439
      %v525 = vunpack.c.l.b16 %v440
      %v526 = vunpack.c.l.b16 %v442
      %v527 = vunpack.c.l.b16 %v443
      %v528 = vunpack.c.l.b16 %v445
      %v529 = vunpack.c.l.b16 %v446
      %v530 = vunpack.c.l.b16 %v448
      %v531 = vunpack.c.l.b16 %v449
      %v532 = vunpack.c.l.b16 %v451
      %v533 = vunpack.c.l.b16 %v452
      %v534 = vunpack.c.l.b16 %v454
      %v535 = vunpack.c.l.b16 %v455
      %v536 = vunpack.c.l.b16 %v457
      %v537 = vunpack.c.l.b16 %v458
      %v538 = vunpack.c.l.b16 %v460
      %v539 = vunpack.c.l.b16 %v461
      %v540 = vunpack.c.l.b16 %v463
      %v541 = vunpack.c.l.b16 %v464
      %v542 = vunpack.c.l.b16 %v466
      %v543 = vunpack.c.l.b16 %v467
      %v544 = vunpack.c.l.b16 %v469
      %v545 = vunpack.c.l.b16 %v470
      %v546 = vunpack.c.l.b16 %v472
      %v547 = vunpack.c.l.b16 %v473
      %v548 = vunpack.c.l.b16 %v475
      %v549 = vunpack.c.l.b16 %v476
      %v550 = vunpack.c.l.b16 %v478
      %v551 = vunpack.c.l.b16 %v479
      %v552 = vunpack.c.l.b16 %v481
      %v553 = vunpack.c.l.b16 %v482
      %v554 = vpack.c.b16 %v523, %v522
      %v555 = vpack.c.b16 %v525, %v524
      %v556 = vpack.c.b16 %v527, %v526
      %v557 = vpack.c.b16 %v529, %v528
      %v558 = vpack.c.b16 %v531, %v530
      %v559 = vpack.c.b16 %v533, %v532
      %v560 = vpack.c.b16 %v535, %v534
      %v561 = vpack.c.b16 %v537, %v536
      %v562 = vpack.c.b16 %v539, %v538
      %v563 = vpack.c.b16 %v541, %v540
      %v564 = vpack.c.b16 %v543, %v542
      %v565 = vpack.c.b16 %v545, %v544
      %v566 = vpack.c.b16 %v547, %v546
      %v567 = vpack.c.b16 %v549, %v548
      %v568 = vpack.c.b16 %v551, %v550
      %v569 = vpack.c.b16 %v553, %v552
      %v602 = vunpack.c.l.b16 %v438
      %v603 = vunpack.c.l.b16 %v441
      %v604 = vunpack.c.l.b16 %v444
      %v605 = vunpack.c.l.b16 %v447
      %v606 = vunpack.c.l.b16 %v450
      %v607 = vunpack.c.l.b16 %v453
      %v608 = vunpack.c.l.b16 %v456
      %v609 = vunpack.c.l.b16 %v459
      %v610 = vunpack.c.l.b16 %v462
      %v611 = vunpack.c.l.b16 %v465
      %v612 = vunpack.c.l.b16 %v468
      %v613 = vunpack.c.l.b16 %v471
      %v614 = vunpack.c.l.b16 %v474
      %v615 = vunpack.c.l.b16 %v477
      %v616 = vunpack.c.l.b16 %v480
      %v617 = vunpack.c.l.b16 %v483
      %v618 = vpack.c.b16 %v602, %v602
      %v619 = vpack.c.b16 %v603, %v603
      %v620 = vpack.c.b16 %v604, %v604
      %v621 = vpack.c.b16 %v605, %v605
      %v622 = vpack.c.b16 %v606, %v606
      %v623 = vpack.c.b16 %v607, %v607
      %v624 = vpack.c.b16 %v608, %v608
      %v625 = vpack.c.b16 %v609, %v609
      %v626 = vpack.c.b16 %v610, %v610
      %v627 = vpack.c.b16 %v611, %v611
      %v628 = vpack.c.b16 %v612, %v612
      %v629 = vpack.c.b16 %v613, %v613
      %v630 = vpack.c.b16 %v614, %v614
      %v631 = vpack.c.b16 %v615, %v615
      %v632 = vpack.c.b16 %v616, %v616
      %v633 = vpack.c.b16 %v617, %v617
      %vm634 = vsmask.f32 7424
      %v636 = vshrl.u32 %v554, 16
      %v638 = vshll.u32 %v554, 16
      %v640 = vrot.slane %v638, 1
      %v641 = vor.u32 %v636, %v640
      %v643 = vshll.u32 %v618, 16
      %v645 = vrot.slane %v643, 1
      %v646 = vsel %vm634, %v641, %v645
      %v648 = vshrl.u32 %v555, 16
      %v650 = vshll.u32 %v555, 16
      %v652 = vrot.slane %v650, 1
      %v653 = vor.u32 %v648, %v652
      %v655 = vshll.u32 %v619, 16
      %v657 = vrot.slane %v655, 1
      %v658 = vsel %vm634, %v653, %v657
      %v660 = vshrl.u32 %v556, 16
      %v662 = vshll.u32 %v556, 16
      %v664 = vrot.slane %v662, 1
      %v665 = vor.u32 %v660, %v664
      %v667 = vshll.u32 %v620, 16
      %v669 = vrot.slane %v667, 1
      %v670 = vsel %vm634, %v665, %v669
      %v672 = vshrl.u32 %v557, 16
      %v674 = vshll.u32 %v557, 16
      %v676 = vrot.slane %v674, 1
      %v677 = vor.u32 %v672, %v676
      %v679 = vshll.u32 %v621, 16
      %v681 = vrot.slane %v679, 1
      %v682 = vsel %vm634, %v677, %v681
      %v684 = vshrl.u32 %v558, 16
      %v686 = vshll.u32 %v558, 16
      %v688 = vrot.slane %v686, 1
      %v689 = vor.u32 %v684, %v688
      %v691 = vshll.u32 %v622, 16
      %v693 = vrot.slane %v691, 1
      %v694 = vsel %vm634, %v689, %v693
      %v696 = vshrl.u32 %v559, 16
      %v698 = vshll.u32 %v559, 16
      %v700 = vrot.slane %v698, 1
      %v701 = vor.u32 %v696, %v700
      %v703 = vshll.u32 %v623, 16
      %v705 = vrot.slane %v703, 1
      %v706 = vsel %vm634, %v701, %v705
      %v708 = vshrl.u32 %v560, 16
      %v710 = vshll.u32 %v560, 16
      %v712 = vrot.slane %v710, 1
      %v713 = vor.u32 %v708, %v712
      %v715 = vshll.u32 %v624, 16
      %v717 = vrot.slane %v715, 1
      %v718 = vsel %vm634, %v713, %v717
      %v720 = vshrl.u32 %v561, 16
      %v722 = vshll.u32 %v561, 16
      %v724 = vrot.slane %v722, 1
      %v725 = vor.u32 %v720, %v724
      %v727 = vshll.u32 %v625, 16
      %v729 = vrot.slane %v727, 1
      %v730 = vsel %vm634, %v725, %v729
      %v732 = vshrl.u32 %v562, 16
      %v734 = vshll.u32 %v562, 16
      %v736 = vrot.slane %v734, 1
      %v737 = vor.u32 %v732, %v736
      %v739 = vshll.u32 %v626, 16
      %v741 = vrot.slane %v739, 1
      %v742 = vsel %vm634, %v737, %v741
      %v744 = vshrl.u32 %v563, 16
      %v746 = vshll.u32 %v563, 16
      %v748 = vrot.slane %v746, 1
      %v749 = vor.u32 %v744, %v748
      %v751 = vshll.u32 %v627, 16
      %v753 = vrot.slane %v751, 1
      %v754 = vsel %vm634, %v749, %v753
      %v756 = vshrl.u32 %v564, 16
      %v758 = vshll.u32 %v564, 16
      %v760 = vrot.slane %v758, 1
      %v761 = vor.u32 %v756, %v760
      %v763 = vshll.u32 %v628, 16
      %v765 = vrot.slane %v763, 1
      %v766 = vsel %vm634, %v761, %v765
      %v768 = vshrl.u32 %v565, 16
      %v770 = vshll.u32 %v565, 16
      %v772 = vrot.slane %v770, 1
      %v773 = vor.u32 %v768, %v772
      %v775 = vshll.u32 %v629, 16
      %v777 = vrot.slane %v775, 1
      %v778 = vsel %vm634, %v773, %v777
      %v780 = vshrl.u32 %v566, 16
      %v782 = vshll.u32 %v566, 16
      %v784 = vrot.slane %v782, 1
      %v785 = vor.u32 %v780, %v784
      %v787 = vshll.u32 %v630, 16
      %v789 = vrot.slane %v787, 1
      %v790 = vsel %vm634, %v785, %v789
      %v792 = vshrl.u32 %v567, 16
      %v794 = vshll.u32 %v567, 16
      %v796 = vrot.slane %v794, 1
      %v797 = vor.u32 %v792, %v796
      %v799 = vshll.u32 %v631, 16
      %v801 = vrot.slane %v799, 1
      %v802 = vsel %vm634, %v797, %v801
      %v804 = vshrl.u32 %v568, 16
      %v806 = vshll.u32 %v568, 16
      %v808 = vrot.slane %v806, 1
      %v809 = vor.u32 %v804, %v808
      %v811 = vshll.u32 %v632, 16
      %v813 = vrot.slane %v811, 1
      %v814 = vsel %vm634, %v809, %v813
      %v816 = vshrl.u32 %v569, 16
      %v818 = vshll.u32 %v569, 16
      %v820 = vrot.slane %v818, 1
      %v821 = vor.u32 %v816, %v820
      %v823 = vshll.u32 %v633, 16
      %v825 = vrot.slane %v823, 1
      %v826 = vsel %vm634, %v821, %v825
      %vm843 = vcmask 1046528
      %v844 = vrot.slane %v554, 1
      %v845 = vrot.slane %v618, 1
      %v846 = vsel %vm843, %v844, %v845
      %v847 = vrot.slane %v555, 1
      %v848 = vrot.slane %v619, 1
      %v849 = vsel %vm843, %v847, %v848
      %v850 = vrot.slane %v556, 1
      %v851 = vrot.slane %v620, 1
      %v852 = vsel %vm843, %v850, %v851
      %v853 = vrot.slane %v557, 1
      %v854 = vrot.slane %v621, 1
      %v855 = vsel %vm843, %v853, %v854
      %v856 = vrot.slane %v558, 1
      %v857 = vrot.slane %v622, 1
      %v858 = vsel %vm843, %v856, %v857
      %v859 = vrot.slane %v559, 1
      %v860 = vrot.slane %v623, 1
      %v861 = vsel %vm843, %v859, %v860
      %v862 = vrot.slane %v560, 1
      %v863 = vrot.slane %v624, 1
      %v864 = vsel %vm843, %v862, %v863
      %v865 = vrot.slane %v561, 1
      %v866 = vrot.slane %v625, 1
      %v867 = vsel %vm843, %v865, %v866
      %v868 = vrot.slane %v562, 1
      %v869 = vrot.slane %v626, 1
      %v870 = vsel %vm843, %v868, %v869
      %v871 = vrot.slane %v563, 1
      %v872 = vrot.slane %v627, 1
      %v873 = vsel %vm843, %v871, %v872
      %v874 = vrot.slane %v564, 1
      %v875 = vrot.slane %v628, 1
      %v876 = vsel %vm843, %v874, %v875
      %v877 = vrot.slane %v565, 1
      %v878 = vrot.slane %v629, 1
      %v879 = vsel %vm843, %v877, %v878
      %v880 = vrot.slane %v566, 1
      %v881 = vrot.slane %v630, 1
      %v882 = vsel %vm843, %v880, %v881
      %v883 = vrot.slane %v567, 1
      %v884 = vrot.slane %v631, 1
      %v885 = vsel %vm843, %v883, %v884
      %v886 = vrot.slane %v568, 1
      %v887 = vrot.slane %v632, 1
      %v888 = vsel %vm843, %v886, %v887
      %v889 = vrot.slane %v569, 1
      %v890 = vrot.slane %v633, 1
      %v891 = vsel %vm843, %v889, %v890
      %v910 = vunpack.c.l.b16 %v484
      %v911 = vunpack.c.l.b16 %v485
      %v912 = vpack.c.b16 %v911, %v910
      %v915 = vunpack.c.l.b16 %v486
      %v916 = vpack.c.b16 %v915, %v915
      %v918 = vshrl.u32 %v912, 16
      %v920 = vshll.u32 %v912, 16
      %v922 = vrot.slane %v920, 1
      %v923 = vor.u32 %v918, %v922
      %v925 = vshll.u32 %v916, 16
      %v927 = vrot.slane %v925, 1
      %v928 = vsel %vm634, %v923, %v927
      %v930 = vrot.slane %v912, 1
      %v931 = vrot.slane %v916, 1
      %v932 = vsel %vm843, %v930, %v931
      %v936 = vunpack.c.l.b16 %v487
      %v937 = vunpack.c.l.b16 %v488
      %v938 = vpack.c.b16 %v937, %v936
      %v941 = vunpack.c.l.b16 %v489
      %v942 = vpack.c.b16 %v941, %v941
      %v944 = vshrl.u32 %v938, 16
      %v946 = vshll.u32 %v938, 16
      %v948 = vrot.slane %v946, 1
      %v949 = vor.u32 %v944, %v948
      %v951 = vshll.u32 %v942, 16
      %v953 = vrot.slane %v951, 1
      %v954 = vsel %vm634, %v949, %v953
      %v956 = vrot.slane %v938, 1
      %v957 = vrot.slane %v942, 1
      %v958 = vsel %vm843, %v956, %v957
      %v960 = vld [vmem:[%s3] sm:$0xf]
      %v961 = vld [vmem:[%s3 + $0x4] sm:$0xf]
      %v962 = vld [vmem:[%s3 + $0x8] sm:$0xf]
      %v963 = vld [vmem:[%s3 + $0xc] sm:$0xf]
      %v964 = vld [vmem:[%s3 + $0x10] sm:$0xf]
      %v965 = vld [vmem:[%s3 + $0x14] sm:$0xf]
      %v966 = vld [vmem:[%s3 + $0x18] sm:$0xf]
      %v967 = vld [vmem:[%s3 + $0x1c] sm:$0xf]
      %v968 = vld [vmem:[%s3 + $0x20] sm:$0xf]
      %v969 = vld [vmem:[%s3 + $0x24] sm:$0xf]
      %v970 = vld [vmem:[%s3 + $0x28] sm:$0xf]
      %v971 = vld [vmem:[%s3 + $0x2c] sm:$0xf]
      %v972 = vld [vmem:[%s3 + $0x30] sm:$0xf]
      %v973 = vld [vmem:[%s3 + $0x34] sm:$0xf]
      %v974 = vld [vmem:[%s3 + $0x38] sm:$0xf]
      %v975 = vld [vmem:[%s3 + $0x3c] sm:$0xf]
      %v976 = vld [vmem:[%s3 + $0x40] sm:$0xf]
      %v977 = vld [vmem:[%s3 + $0x44] sm:$0xf]
      %v978 = vld [vmem:[%s3 + $0x48] sm:$0xf]
      %v979 = vld [vmem:[%s3 + $0x4c] sm:$0xf]
      %v980 = vld [vmem:[%s3 + $0x50] sm:$0xf]
      %v981 = vld [vmem:[%s3 + $0x54] sm:$0xf]
      %v982 = vld [vmem:[%s3 + $0x58] sm:$0xf]
      %v983 = vld [vmem:[%s3 + $0x5c] sm:$0xf]
      %v984 = vld [vmem:[%s3 + $0x60] sm:$0xf]
      %v985 = vld [vmem:[%s3 + $0x64] sm:$0xf]
      %v986 = vld [vmem:[%s3 + $0x68] sm:$0xf]
      %v987 = vld [vmem:[%s3 + $0x6c] sm:$0xf]
      %v988 = vld [vmem:[%s3 + $0x70] sm:$0xf]
      %v989 = vld [vmem:[%s3 + $0x74] sm:$0xf]
      %v990 = vld [vmem:[%s3 + $0x78] sm:$0xf]
      %v991 = vld [vmem:[%s3 + $0x7c] sm:$0xf]
      %v992 = vld [vmem:[%s3 + $0x80] sm:$0xf]
      %v993 = vld [vmem:[%s3 + $0x84] sm:$0xf]
      %v994 = vld [vmem:[%s3 + $0x88] sm:$0xf]
      %v995 = vld [vmem:[%s3 + $0x8c] sm:$0xf]
      %v996 = vld [vmem:[%s3 + $0x90] sm:$0xf]
      %v997 = vld [vmem:[%s3 + $0x94] sm:$0xf]
      %v998 = vld [vmem:[%s3 + $0x98] sm:$0xf]
      %v999 = vld [vmem:[%s3 + $0x9c] sm:$0xf]
      %v1000 = vld [vmem:[%s3 + $0xa0] sm:$0xf]
      %v1001 = vld [vmem:[%s3 + $0xa4] sm:$0xf]
      %v1002 = vld [vmem:[%s3 + $0xa8] sm:$0xf]
      %v1003 = vld [vmem:[%s3 + $0xac] sm:$0xf]
      %v1004 = vld [vmem:[%s3 + $0xb0] sm:$0xf]
      %v1005 = vld [vmem:[%s3 + $0xb4] sm:$0xf]
      %v1006 = vld [vmem:[%s3 + $0xb8] sm:$0xf]
      %v1007 = vld [vmem:[%s3 + $0xbc] sm:$0xf]
      %v1008 = vld [vmem:[%s3 + $0xc0] sm:$0xf]
      %v1009 = vld [vmem:[%s3 + $0xc4] sm:$0xf]
      %v1010 = vld [vmem:[%s3 + $0xc8] sm:$0xf]
      %v1011 = vld [vmem:[%s3 + $0xcc] sm:$0xf]
      %v1012 = vld [vmem:[%s3 + $0xd0] sm:$0xf]
      %v1013 = vld [vmem:[%s3 + $0xd4] sm:$0xf]
      %v1014 = vld [vmem:[%s3 + $0xd8] sm:$0xf]
      %v1015 = vld [vmem:[%s3 + $0xdc] sm:$0xf]
      %v1016 = vld [vmem:[%s3 + $0xe0] sm:$0xf]
      %v1017 = vld [vmem:[%s3 + $0xe4] sm:$0xf]
      %v1018 = vld [vmem:[%s3 + $0xe8] sm:$0xf]
      %v1019 = vld [vmem:[%s3 + $0xec] sm:$0xf]
      %v1020 = vld [vmem:[%s3 + $0xf0] sm:$0xf]
      %v1021 = vld [vmem:[%s3 + $0xf4] sm:$0xf]
      %v1022 = vld [vmem:[%s3 + $0xf8] sm:$0xf]
      %v1023 = vld [vmem:[%s3 + $0xfc] sm:$0xf]
      %v1024 = vld [vmem:[%s3 + $0x100] sm:$0xf]
      %v1025 = vld [vmem:[%s3 + $0x104] sm:$0xf]
      %v1026 = vld [vmem:[%s3 + $0x108] sm:$0xf]
      %v1027 = vld [vmem:[%s3 + $0x10c] sm:$0xf]
      %v1028 = vld [vmem:[%s3 + $0x110] sm:$0xf]
      %v1029 = vld [vmem:[%s3 + $0x114] sm:$0xf]
      %v1030 = vld [vmem:[%s3 + $0x118] sm:$0xf]
      %v1031 = vld [vmem:[%s3 + $0x11c] sm:$0xf]
      %v1032 = vld [vmem:[%s3 + $0x120] sm:$0xf]
      %v1033 = vld [vmem:[%s3 + $0x124] sm:$0xf]
      %v1034 = vld [vmem:[%s3 + $0x128] sm:$0xf]
      %v1035 = vld [vmem:[%s3 + $0x12c] sm:$0xf]
      %v1036 = vld [vmem:[%s3 + $0x130] sm:$0xf]
      %v1037 = vld [vmem:[%s3 + $0x134] sm:$0xf]
      %v1038 = vld [vmem:[%s3 + $0x138] sm:$0xf]
      %v1039 = vld [vmem:[%s3 + $0x13c] sm:$0xf]
      %v1040 = vld [vmem:[%s3 + $0x140] sm:$0xf]
      %v1041 = vld [vmem:[%s3 + $0x144] sm:$0xf]
      %v1042 = vld [vmem:[%s3 + $0x148] sm:$0xf]
      %v1043 = vld [vmem:[%s3 + $0x14c] sm:$0xf]
      %v1044 = vld [vmem:[%s3 + $0x150] sm:$0xf]
      %v1045 = vld [vmem:[%s3 + $0x154] sm:$0xf]
      %v1046 = vld [vmem:[%s3 + $0x158] sm:$0xf]
      %v1047 = vld [vmem:[%s3 + $0x15c] sm:$0xf]
      %v1048 = vld [vmem:[%s3 + $0x160] sm:$0xf]
      %v1049 = vld [vmem:[%s3 + $0x164] sm:$0xf]
      %v1050 = vld [vmem:[%s3 + $0x168] sm:$0xf]
      %v1051 = vld [vmem:[%s3 + $0x16c] sm:$0xf]
      %v1052 = vld [vmem:[%s3 + $0x170] sm:$0xf]
      %v1053 = vld [vmem:[%s3 + $0x174] sm:$0xf]
      %v1054 = vld [vmem:[%s3 + $0x178] sm:$0xf]
      %v1055 = vld [vmem:[%s3 + $0x17c] sm:$0xf]
      %v1056 = vld [vmem:[%s3 + $0x180] sm:$0xf]
      %v1057 = vld [vmem:[%s3 + $0x184] sm:$0xf]
      %v1058 = vld [vmem:[%s3 + $0x188] sm:$0xf]
      %v1059 = vld [vmem:[%s3 + $0x18c] sm:$0xf]
      %v1060 = vld [vmem:[%s3 + $0x190] sm:$0xf]
      %v1061 = vld [vmem:[%s3 + $0x194] sm:$0xf]
      %v1062 = vld [vmem:[%s3 + $0x198] sm:$0xf]
      %v1063 = vld [vmem:[%s3 + $0x19c] sm:$0xf]
      %v1064 = vld [vmem:[%s3 + $0x1a0] sm:$0xf]
      %v1065 = vld [vmem:[%s3 + $0x1a4] sm:$0xf]
      %v1066 = vld [vmem:[%s3 + $0x1a8] sm:$0xf]
      %v1067 = vld [vmem:[%s3 + $0x1ac] sm:$0xf]
      %v1068 = vld [vmem:[%s3 + $0x1b0] sm:$0xf]
      %v1069 = vld [vmem:[%s3 + $0x1b4] sm:$0xf]
      %v1070 = vld [vmem:[%s3 + $0x1b8] sm:$0xf]
      %v1071 = vld [vmem:[%s3 + $0x1bc] sm:$0xf]
      %v1072 = vld [vmem:[%s3 + $0x1c0] sm:$0xf]
      %v1073 = vld [vmem:[%s3 + $0x1c4] sm:$0xf]
      %v1074 = vld [vmem:[%s3 + $0x1c8] sm:$0xf]
      %v1075 = vld [vmem:[%s3 + $0x1cc] sm:$0xf]
      %v1076 = vld [vmem:[%s3 + $0x1d0] sm:$0xf]
      %v1077 = vld [vmem:[%s3 + $0x1d4] sm:$0xf]
      %v1078 = vld [vmem:[%s3 + $0x1d8] sm:$0xf]
      %v1079 = vld [vmem:[%s3 + $0x1dc] sm:$0xf]
      %v1080 = vld [vmem:[%s3 + $0x1e0] sm:$0xf]
      %v1081 = vld [vmem:[%s3 + $0x1e4] sm:$0xf]
      %v1082 = vld [vmem:[%s3 + $0x1e8] sm:$0xf]
      %v1083 = vld [vmem:[%s3 + $0x1ec] sm:$0xf]
      %v1084 = vld [vmem:[%s3 + $0x1f0] sm:$0xf]
      %v1085 = vld [vmem:[%s3 + $0x1f4] sm:$0xf]
      %v1086 = vld [vmem:[%s3 + $0x1f8] sm:$0xf]
      %v1087 = vld [vmem:[%s3 + $0x1fc] sm:$0xf]
      %v1088 = vld [vmem:[%s3 + $0x200] sm:$0xf]
      %v1089 = vld [vmem:[%s3 + $0x204] sm:$0xf]
      %v1090 = vld [vmem:[%s3 + $0x208] sm:$0xf]
      %v1091 = vld [vmem:[%s3 + $0x20c] sm:$0xf]
      %v1092 = vld [vmem:[%s3 + $0x210] sm:$0xf]
      %v1093 = vld [vmem:[%s3 + $0x214] sm:$0xf]
      %v1094 = vld [vmem:[%s3 + $0x218] sm:$0xf]
      %v1095 = vld [vmem:[%s3 + $0x21c] sm:$0xf]
      %v1096 = vld [vmem:[%s3 + $0x220] sm:$0xf]
      %v1097 = vld [vmem:[%s3 + $0x224] sm:$0xf]
      %v1098 = vld [vmem:[%s3 + $0x228] sm:$0xf]
      %v1099 = vld [vmem:[%s3 + $0x22c] sm:$0xf]
      %v1100 = vld [vmem:[%s3 + $0x230] sm:$0xf]
      %v1101 = vld [vmem:[%s3 + $0x234] sm:$0xf]
      %v1102 = vld [vmem:[%s3 + $0x238] sm:$0xf]
      %v1103 = vld [vmem:[%s3 + $0x23c] sm:$0xf]
      %v1104 = vld [vmem:[%s4] sm:$0x1]
      %v1106 = vperm.slane %v1104, 0
      %v1252 = vunpack.c.l.b16 %v960
      %v1253 = vunpack.c.l.b16 %v961
      %v1254 = vunpack.c.l.b16 %v962
      %v1255 = vunpack.c.l.b16 %v963
      %v1256 = vunpack.c.l.b16 %v964
      %v1257 = vunpack.c.l.b16 %v965
      %v1258 = vunpack.c.l.b16 %v966
      %v1259 = vunpack.c.l.b16 %v967
      %v1260 = vunpack.c.l.b16 %v968
      %v1261 = vunpack.c.l.b16 %v969
      %v1262 = vunpack.c.l.b16 %v970
      %v1263 = vunpack.c.l.b16 %v971
      %v1264 = vunpack.c.l.b16 %v972
      %v1265 = vunpack.c.l.b16 %v973
      %v1266 = vunpack.c.l.b16 %v974
      %v1267 = vunpack.c.l.b16 %v975
      %v1268 = vunpack.c.l.b16 %v976
      %v1269 = vunpack.c.l.b16 %v977
      %v1270 = vunpack.c.l.b16 %v978
      %v1271 = vunpack.c.l.b16 %v979
      %v1272 = vunpack.c.l.b16 %v980
      %v1273 = vunpack.c.l.b16 %v981
      %v1274 = vunpack.c.l.b16 %v982
      %v1275 = vunpack.c.l.b16 %v983
      %v1276 = vunpack.c.l.b16 %v984
      %v1277 = vunpack.c.l.b16 %v985
      %v1278 = vunpack.c.l.b16 %v986
      %v1279 = vunpack.c.l.b16 %v987
      %v1280 = vunpack.c.l.b16 %v988
      %v1281 = vunpack.c.l.b16 %v989
      %v1282 = vunpack.c.l.b16 %v990
      %v1283 = vunpack.c.l.b16 %v991
      %v1284 = vunpack.c.l.b16 %v992
      %v1285 = vunpack.c.l.b16 %v993
      %v1286 = vunpack.c.l.b16 %v994
      %v1287 = vunpack.c.l.b16 %v995
      %v1288 = vunpack.c.l.b16 %v996
      %v1289 = vunpack.c.l.b16 %v997
      %v1290 = vunpack.c.l.b16 %v998
      %v1291 = vunpack.c.l.b16 %v999
      %v1292 = vunpack.c.l.b16 %v1000
      %v1293 = vunpack.c.l.b16 %v1001
      %v1294 = vunpack.c.l.b16 %v1002
      %v1295 = vunpack.c.l.b16 %v1003
      %v1296 = vunpack.c.l.b16 %v1004
      %v1297 = vunpack.c.l.b16 %v1005
      %v1298 = vunpack.c.l.b16 %v1006
      %v1299 = vunpack.c.l.b16 %v1007
      %v1300 = vunpack.c.l.b16 %v1008
      %v1301 = vunpack.c.l.b16 %v1009
      %v1302 = vunpack.c.l.b16 %v1010
      %v1303 = vunpack.c.l.b16 %v1011
      %v1304 = vunpack.c.l.b16 %v1012
      %v1305 = vunpack.c.l.b16 %v1013
      %v1306 = vunpack.c.l.b16 %v1014
      %v1307 = vunpack.c.l.b16 %v1015
      %v1308 = vunpack.c.l.b16 %v1016
      %v1309 = vunpack.c.l.b16 %v1017
      %v1310 = vunpack.c.l.b16 %v1018
      %v1311 = vunpack.c.l.b16 %v1019
      %v1312 = vunpack.c.l.b16 %v1020
      %v1313 = vunpack.c.l.b16 %v1021
      %v1314 = vunpack.c.l.b16 %v1022
      %v1315 = vunpack.c.l.b16 %v1023
      %v1316 = vunpack.c.l.b16 %v1024
      %v1317 = vunpack.c.l.b16 %v1025
      %v1318 = vunpack.c.l.b16 %v1026
      %v1319 = vunpack.c.l.b16 %v1027
      %v1320 = vunpack.c.l.b16 %v1028
      %v1321 = vunpack.c.l.b16 %v1029
      %v1322 = vunpack.c.l.b16 %v1030
      %v1323 = vunpack.c.l.b16 %v1031
      %v1324 = vunpack.c.l.b16 %v1032
      %v1325 = vunpack.c.l.b16 %v1033
      %v1326 = vunpack.c.l.b16 %v1034
      %v1327 = vunpack.c.l.b16 %v1035
      %v1328 = vunpack.c.l.b16 %v1036
      %v1329 = vunpack.c.l.b16 %v1037
      %v1330 = vunpack.c.l.b16 %v1038
      %v1331 = vunpack.c.l.b16 %v1039
      %v1332 = vunpack.c.l.b16 %v1040
      %v1333 = vunpack.c.l.b16 %v1041
      %v1334 = vunpack.c.l.b16 %v1042
      %v1335 = vunpack.c.l.b16 %v1043
      %v1336 = vunpack.c.l.b16 %v1044
      %v1337 = vunpack.c.l.b16 %v1045
      %v1338 = vunpack.c.l.b16 %v1046
      %v1339 = vunpack.c.l.b16 %v1047
      %v1340 = vunpack.c.l.b16 %v1048
      %v1341 = vunpack.c.l.b16 %v1049
      %v1342 = vunpack.c.l.b16 %v1050
      %v1343 = vunpack.c.l.b16 %v1051
      %v1344 = vunpack.c.l.b16 %v1052
      %v1345 = vunpack.c.l.b16 %v1053
      %v1346 = vunpack.c.l.b16 %v1054
      %v1347 = vunpack.c.l.b16 %v1055
      %v1348 = vunpack.c.l.b16 %v1056
      %v1349 = vunpack.c.l.b16 %v1057
      %v1350 = vunpack.c.l.b16 %v1058
      %v1351 = vunpack.c.l.b16 %v1059
      %v1352 = vunpack.c.l.b16 %v1060
      %v1353 = vunpack.c.l.b16 %v1061
      %v1354 = vunpack.c.l.b16 %v1062
      %v1355 = vunpack.c.l.b16 %v1063
      %v1356 = vunpack.c.l.b16 %v1064
      %v1357 = vunpack.c.l.b16 %v1065
      %v1358 = vunpack.c.l.b16 %v1066
      %v1359 = vunpack.c.l.b16 %v1067
      %v1360 = vunpack.c.l.b16 %v1068
      %v1361 = vunpack.c.l.b16 %v1069
      %v1362 = vunpack.c.l.b16 %v1070
      %v1363 = vunpack.c.l.b16 %v1071
      %v1364 = vunpack.c.l.b16 %v1072
      %v1365 = vunpack.c.l.b16 %v1073
      %v1366 = vunpack.c.l.b16 %v1074
      %v1367 = vunpack.c.l.b16 %v1075
      %v1368 = vunpack.c.l.b16 %v1076
      %v1369 = vunpack.c.l.b16 %v1077
      %v1370 = vunpack.c.l.b16 %v1078
      %v1371 = vunpack.c.l.b16 %v1079
      %v1372 = vunpack.c.l.b16 %v1080
      %v1373 = vunpack.c.l.b16 %v1081
      %v1374 = vunpack.c.l.b16 %v1082
      %v1375 = vunpack.c.l.b16 %v1083
      %v1376 = vunpack.c.l.b16 %v1084
      %v1377 = vunpack.c.l.b16 %v1085
      %v1378 = vunpack.c.l.b16 %v1086
      %v1379 = vunpack.c.l.b16 %v1087
      %v1380 = vunpack.c.l.b16 %v1088
      %v1381 = vunpack.c.l.b16 %v1089
      %v1382 = vunpack.c.l.b16 %v1090
      %v1383 = vunpack.c.l.b16 %v1091
      %v1384 = vunpack.c.l.b16 %v1092
      %v1385 = vunpack.c.l.b16 %v1093
      %v1386 = vunpack.c.l.b16 %v1094
      %v1387 = vunpack.c.l.b16 %v1095
      %v1388 = vunpack.c.l.b16 %v1096
      %v1389 = vunpack.c.l.b16 %v1097
      %v1390 = vunpack.c.l.b16 %v1098
      %v1391 = vunpack.c.l.b16 %v1099
      %v1392 = vunpack.c.l.b16 %v1100
      %v1393 = vunpack.c.l.b16 %v1101
      %v1394 = vunpack.c.l.b16 %v1102
      %v1395 = vunpack.c.l.b16 %v1103
      %v1396 = vpack.c.b16 %v1253, %v1252
      %v1397 = vpack.c.b16 %v1255, %v1254
      %v1398 = vpack.c.b16 %v1257, %v1256
      %v1399 = vpack.c.b16 %v1259, %v1258
      %v1400 = vpack.c.b16 %v1261, %v1260
      %v1401 = vpack.c.b16 %v1263, %v1262
      %v1402 = vpack.c.b16 %v1265, %v1264
      %v1403 = vpack.c.b16 %v1267, %v1266
      %v1404 = vpack.c.b16 %v1269, %v1268
      %v1405 = vpack.c.b16 %v1271, %v1270
      %v1406 = vpack.c.b16 %v1273, %v1272
      %v1407 = vpack.c.b16 %v1275, %v1274
      %v1408 = vpack.c.b16 %v1277, %v1276
      %v1409 = vpack.c.b16 %v1279, %v1278
      %v1410 = vpack.c.b16 %v1281, %v1280
      %v1411 = vpack.c.b16 %v1283, %v1282
      %v1412 = vpack.c.b16 %v1285, %v1284
      %v1413 = vpack.c.b16 %v1287, %v1286
      %v1414 = vpack.c.b16 %v1289, %v1288
      %v1415 = vpack.c.b16 %v1291, %v1290
      %v1416 = vpack.c.b16 %v1293, %v1292
      %v1417 = vpack.c.b16 %v1295, %v1294
      %v1418 = vpack.c.b16 %v1297, %v1296
      %v1419 = vpack.c.b16 %v1299, %v1298
      %v1420 = vpack.c.b16 %v1301, %v1300
      %v1421 = vpack.c.b16 %v1303, %v1302
      %v1422 = vpack.c.b16 %v1305, %v1304
      %v1423 = vpack.c.b16 %v1307, %v1306
      %v1424 = vpack.c.b16 %v1309, %v1308
      %v1425 = vpack.c.b16 %v1311, %v1310
      %v1426 = vpack.c.b16 %v1313, %v1312
      %v1427 = vpack.c.b16 %v1315, %v1314
      %v1428 = vpack.c.b16 %v1317, %v1316
      %v1429 = vpack.c.b16 %v1319, %v1318
      %v1430 = vpack.c.b16 %v1321, %v1320
      %v1431 = vpack.c.b16 %v1323, %v1322
      %v1432 = vpack.c.b16 %v1325, %v1324
      %v1433 = vpack.c.b16 %v1327, %v1326
      %v1434 = vpack.c.b16 %v1329, %v1328
      %v1435 = vpack.c.b16 %v1331, %v1330
      %v1436 = vpack.c.b16 %v1333, %v1332
      %v1437 = vpack.c.b16 %v1335, %v1334
      %v1438 = vpack.c.b16 %v1337, %v1336
      %v1439 = vpack.c.b16 %v1339, %v1338
      %v1440 = vpack.c.b16 %v1341, %v1340
      %v1441 = vpack.c.b16 %v1343, %v1342
      %v1442 = vpack.c.b16 %v1345, %v1344
      %v1443 = vpack.c.b16 %v1347, %v1346
      %v1444 = vpack.c.b16 %v1349, %v1348
      %v1445 = vpack.c.b16 %v1351, %v1350
      %v1446 = vpack.c.b16 %v1353, %v1352
      %v1447 = vpack.c.b16 %v1355, %v1354
      %v1448 = vpack.c.b16 %v1357, %v1356
      %v1449 = vpack.c.b16 %v1359, %v1358
      %v1450 = vpack.c.b16 %v1361, %v1360
      %v1451 = vpack.c.b16 %v1363, %v1362
      %v1452 = vpack.c.b16 %v1365, %v1364
      %v1453 = vpack.c.b16 %v1367, %v1366
      %v1454 = vpack.c.b16 %v1369, %v1368
      %v1455 = vpack.c.b16 %v1371, %v1370
      %v1456 = vpack.c.b16 %v1373, %v1372
      %v1457 = vpack.c.b16 %v1375, %v1374
      %v1458 = vpack.c.b16 %v1377, %v1376
      %v1459 = vpack.c.b16 %v1379, %v1378
      %v1460 = vpack.c.b16 %v1381, %v1380
      %v1461 = vpack.c.b16 %v1383, %v1382
      %v1462 = vpack.c.b16 %v1385, %v1384
      %v1463 = vpack.c.b16 %v1387, %v1386
      %v1464 = vpack.c.b16 %v1389, %v1388
      %v1465 = vpack.c.b16 %v1391, %v1390
      %v1466 = vpack.c.b16 %v1393, %v1392
      %v1467 = vpack.c.b16 %v1395, %v1394
      %1540 = vmatpush.bf16.msra.mxu0 %v1403
      %1541 = vmatpush.bf16.msra.mxu0 %v1402
      %1542 = vmatpush.bf16.msra.mxu0 %v1401
      %1543 = vmatpush.bf16.msra.mxu0 %v1400
      %1544 = vmatpush.bf16.msra.mxu0 %v1399
      %1545 = vmatpush.bf16.msra.mxu0 %v1398
      %1546 = vmatpush.bf16.msra.mxu0 %v1397
      %1547 = vmatpush.bf16.msra.mxu0 %v1396
      %1548 = vmatmul.bf16.gmra.mxu0 %v554
      %v1549 = vpop.f32.mrf.mxu0
      %v1550 = vadd.f32 %v1106, %v1549
      %v1551 = vpop.f32.mrf.mxu0
      %v1552 = vadd.f32 %v1106, %v1551
      %1553 = vmatmul.bf16.gmra.mxu0 %v555
      %v1554 = vpop.f32.mrf.mxu0
      %v1555 = vadd.f32 %v1106, %v1554
      %v1556 = vpop.f32.mrf.mxu0
      %v1557 = vadd.f32 %v1106, %v1556
      %1558 = vmatmul.bf16.gmra.mxu0 %v556
      %v1559 = vpop.f32.mrf.mxu0
      %v1560 = vadd.f32 %v1106, %v1559
      %v1561 = vpop.f32.mrf.mxu0
      %v1562 = vadd.f32 %v1106, %v1561
      %1563 = vmatmul.bf16.gmra.mxu0 %v557
      %v1564 = vpop.f32.mrf.mxu0
      %v1565 = vadd.f32 %v1106, %v1564
      %v1566 = vpop.f32.mrf.mxu0
      %v1567 = vadd.f32 %v1106, %v1566
      %1568 = vmatmul.bf16.gmra.mxu0 %v558
      %v1569 = vpop.f32.mrf.mxu0
      %v1570 = vadd.f32 %v1106, %v1569
      %v1571 = vpop.f32.mrf.mxu0
      %v1572 = vadd.f32 %v1106, %v1571
      %1573 = vmatmul.bf16.gmra.mxu0 %v559
      %v1574 = vpop.f32.mrf.mxu0
      %v1575 = vadd.f32 %v1106, %v1574
      %v1576 = vpop.f32.mrf.mxu0
      %v1577 = vadd.f32 %v1106, %v1576
      %1578 = vmatmul.bf16.gmra.mxu0 %v560
      %v1579 = vpop.f32.mrf.mxu0
      %v1580 = vadd.f32 %v1106, %v1579
      %v1581 = vpop.f32.mrf.mxu0
      %v1582 = vadd.f32 %v1106, %v1581
      %1583 = vmatmul.bf16.gmra.mxu0 %v561
      %v1584 = vpop.f32.mrf.mxu0
      %v1585 = vadd.f32 %v1106, %v1584
      %v1586 = vpop.f32.mrf.mxu0
      %v1587 = vadd.f32 %v1106, %v1586
      %1588 = vmatmul.bf16.gmra.mxu0 %v562
      %v1589 = vpop.f32.mrf.mxu0
      %v1590 = vadd.f32 %v1106, %v1589
      %v1591 = vpop.f32.mrf.mxu0
      %v1592 = vadd.f32 %v1106, %v1591
      %1593 = vmatmul.bf16.gmra.mxu0 %v563
      %v1594 = vpop.f32.mrf.mxu0
      %v1595 = vadd.f32 %v1106, %v1594
      %v1596 = vpop.f32.mrf.mxu0
      %v1597 = vadd.f32 %v1106, %v1596
      %1598 = vmatmul.bf16.gmra.mxu0 %v564
      %v1599 = vpop.f32.mrf.mxu0
      %v1600 = vadd.f32 %v1106, %v1599
      %v1601 = vpop.f32.mrf.mxu0
      %v1602 = vadd.f32 %v1106, %v1601
      %1603 = vmatmul.bf16.gmra.mxu0 %v565
      %v1604 = vpop.f32.mrf.mxu0
      %v1605 = vadd.f32 %v1106, %v1604
      %v1606 = vpop.f32.mrf.mxu0
      %v1607 = vadd.f32 %v1106, %v1606
      %1608 = vmatmul.bf16.gmra.mxu0 %v566
      %v1609 = vpop.f32.mrf.mxu0
      %v1610 = vadd.f32 %v1106, %v1609
      %v1611 = vpop.f32.mrf.mxu0
      %v1612 = vadd.f32 %v1106, %v1611
      %1613 = vmatmul.bf16.gmra.mxu0 %v567
      %v1614 = vpop.f32.mrf.mxu0
      %v1615 = vadd.f32 %v1106, %v1614
      %v1616 = vpop.f32.mrf.mxu0
      %v1617 = vadd.f32 %v1106, %v1616
      %1618 = vmatmul.bf16.gmra.mxu0 %v568
      %v1619 = vpop.f32.mrf.mxu0
      %v1620 = vadd.f32 %v1106, %v1619
      %v1621 = vpop.f32.mrf.mxu0
      %v1622 = vadd.f32 %v1106, %v1621
      %1623 = vmatmul.bf16.gmra.mxu0 %v569
      %v1624 = vpop.f32.mrf.mxu0
      %v1625 = vadd.f32 %v1106, %v1624
      %v1626 = vpop.f32.mrf.mxu0
      %v1627 = vadd.f32 %v1106, %v1626
      %1628 = vdwg.mxu0
      %1629 = vmatpush.bf16.msra.mxu0 %v1411
      %1630 = vmatpush.bf16.msra.mxu0 %v1410
      %1631 = vmatpush.bf16.msra.mxu0 %v1409
      %1632 = vmatpush.bf16.msra.mxu0 %v1408
      %1633 = vmatpush.bf16.msra.mxu0 %v1407
      %1634 = vmatpush.bf16.msra.mxu0 %v1406
      %1635 = vmatpush.bf16.msra.mxu0 %v1405
      %1636 = vmatpush.bf16.msra.mxu0 %v1404
      %1637 = vmatmul.bf16.gmra.mxu0 %v646
      %v1638 = vpop.f32.mrf.mxu0
      %v1639 = vadd.f32 %v1550, %v1638
      %v1640 = vpop.f32.mrf.mxu0
      %v1641 = vadd.f32 %v1552, %v1640
      %1642 = vmatmul.bf16.gmra.mxu0 %v658
      %v1643 = vpop.f32.mrf.mxu0
      %v1644 = vadd.f32 %v1555, %v1643
      %v1645 = vpop.f32.mrf.mxu0
      %v1646 = vadd.f32 %v1557, %v1645
      %1647 = vmatmul.bf16.gmra.mxu0 %v670
      %v1648 = vpop.f32.mrf.mxu0
      %v1649 = vadd.f32 %v1560, %v1648
      %v1650 = vpop.f32.mrf.mxu0
      %v1651 = vadd.f32 %v1562, %v1650
      %1652 = vmatmul.bf16.gmra.mxu0 %v682
      %v1653 = vpop.f32.mrf.mxu0
      %v1654 = vadd.f32 %v1565, %v1653
      %v1655 = vpop.f32.mrf.mxu0
      %v1656 = vadd.f32 %v1567, %v1655
      %1657 = vmatmul.bf16.gmra.mxu0 %v694
      %v1658 = vpop.f32.mrf.mxu0
      %v1659 = vadd.f32 %v1570, %v1658
      %v1660 = vpop.f32.mrf.mxu0
      %v1661 = vadd.f32 %v1572, %v1660
      %1662 = vmatmul.bf16.gmra.mxu0 %v706
      %v1663 = vpop.f32.mrf.mxu0
      %v1664 = vadd.f32 %v1575, %v1663
      %v1665 = vpop.f32.mrf.mxu0
      %v1666 = vadd.f32 %v1577, %v1665
      %1667 = vmatmul.bf16.gmra.mxu0 %v718
      %v1668 = vpop.f32.mrf.mxu0
      %v1669 = vadd.f32 %v1580, %v1668
      %v1670 = vpop.f32.mrf.mxu0
      %v1671 = vadd.f32 %v1582, %v1670
      %1672 = vmatmul.bf16.gmra.mxu0 %v730
      %v1673 = vpop.f32.mrf.mxu0
      %v1674 = vadd.f32 %v1585, %v1673
      %v1675 = vpop.f32.mrf.mxu0
      %v1676 = vadd.f32 %v1587, %v1675
      %1677 = vmatmul.bf16.gmra.mxu0 %v742
      %v1678 = vpop.f32.mrf.mxu0
      %v1679 = vadd.f32 %v1590, %v1678
      %v1680 = vpop.f32.mrf.mxu0
      %v1681 = vadd.f32 %v1592, %v1680
      %1682 = vmatmul.bf16.gmra.mxu0 %v754
      %v1683 = vpop.f32.mrf.mxu0
      %v1684 = vadd.f32 %v1595, %v1683
      %v1685 = vpop.f32.mrf.mxu0
      %v1686 = vadd.f32 %v1597, %v1685
      %1687 = vmatmul.bf16.gmra.mxu0 %v766
      %v1688 = vpop.f32.mrf.mxu0
      %v1689 = vadd.f32 %v1600, %v1688
      %v1690 = vpop.f32.mrf.mxu0
      %v1691 = vadd.f32 %v1602, %v1690
      %1692 = vmatmul.bf16.gmra.mxu0 %v778
      %v1693 = vpop.f32.mrf.mxu0
      %v1694 = vadd.f32 %v1605, %v1693
      %v1695 = vpop.f32.mrf.mxu0
      %v1696 = vadd.f32 %v1607, %v1695
      %1697 = vmatmul.bf16.gmra.mxu0 %v790
      %v1698 = vpop.f32.mrf.mxu0
      %v1699 = vadd.f32 %v1610, %v1698
      %v1700 = vpop.f32.mrf.mxu0
      %v1701 = vadd.f32 %v1612, %v1700
      %1702 = vmatmul.bf16.gmra.mxu0 %v802
      %v1703 = vpop.f32.mrf.mxu0
      %v1704 = vadd.f32 %v1615, %v1703
      %v1705 = vpop.f32.mrf.mxu0
      %v1706 = vadd.f32 %v1617, %v1705
      %1707 = vmatmul.bf16.gmra.mxu0 %v814
      %v1708 = vpop.f32.mrf.mxu0
      %v1709 = vadd.f32 %v1620, %v1708
      %v1710 = vpop.f32.mrf.mxu0
      %v1711 = vadd.f32 %v1622, %v1710
      %1712 = vmatmul.bf16.gmra.mxu0 %v826
      %v1713 = vpop.f32.mrf.mxu0
      %v1714 = vadd.f32 %v1625, %v1713
      %v1715 = vpop.f32.mrf.mxu0
      %v1716 = vadd.f32 %v1627, %v1715
      %1717 = vdwg.mxu0
      %1718 = vmatpush.bf16.msra.mxu0 %v1419
      %1719 = vmatpush.bf16.msra.mxu0 %v1418
      %1720 = vmatpush.bf16.msra.mxu0 %v1417
      %1721 = vmatpush.bf16.msra.mxu0 %v1416
      %1722 = vmatpush.bf16.msra.mxu0 %v1415
      %1723 = vmatpush.bf16.msra.mxu0 %v1414
      %1724 = vmatpush.bf16.msra.mxu0 %v1413
      %1725 = vmatpush.bf16.msra.mxu0 %v1412
      %1726 = vmatmul.bf16.gmra.mxu0 %v846
      %v1727 = vpop.f32.mrf.mxu0
      %v1728 = vadd.f32 %v1639, %v1727
      %v1729 = vpop.f32.mrf.mxu0
      %v1730 = vadd.f32 %v1641, %v1729
      %1731 = vmatmul.bf16.gmra.mxu0 %v849
      %v1732 = vpop.f32.mrf.mxu0
      %v1733 = vadd.f32 %v1644, %v1732
      %v1734 = vpop.f32.mrf.mxu0
      %v1735 = vadd.f32 %v1646, %v1734
      %1736 = vmatmul.bf16.gmra.mxu0 %v852
      %v1737 = vpop.f32.mrf.mxu0
      %v1738 = vadd.f32 %v1649, %v1737
      %v1739 = vpop.f32.mrf.mxu0
      %v1740 = vadd.f32 %v1651, %v1739
      %1741 = vmatmul.bf16.gmra.mxu0 %v855
      %v1742 = vpop.f32.mrf.mxu0
      %v1743 = vadd.f32 %v1654, %v1742
      %v1744 = vpop.f32.mrf.mxu0
      %v1745 = vadd.f32 %v1656, %v1744
      %1746 = vmatmul.bf16.gmra.mxu0 %v858
      %v1747 = vpop.f32.mrf.mxu0
      %v1748 = vadd.f32 %v1659, %v1747
      %v1749 = vpop.f32.mrf.mxu0
      %v1750 = vadd.f32 %v1661, %v1749
      %1751 = vmatmul.bf16.gmra.mxu0 %v861
      %v1752 = vpop.f32.mrf.mxu0
      %v1753 = vadd.f32 %v1664, %v1752
      %v1754 = vpop.f32.mrf.mxu0
      %v1755 = vadd.f32 %v1666, %v1754
      %1756 = vmatmul.bf16.gmra.mxu0 %v864
      %v1757 = vpop.f32.mrf.mxu0
      %v1758 = vadd.f32 %v1669, %v1757
      %v1759 = vpop.f32.mrf.mxu0
      %v1760 = vadd.f32 %v1671, %v1759
      %1761 = vmatmul.bf16.gmra.mxu0 %v867
      %v1762 = vpop.f32.mrf.mxu0
      %v1763 = vadd.f32 %v1674, %v1762
      %v1764 = vpop.f32.mrf.mxu0
      %v1765 = vadd.f32 %v1676, %v1764
      %1766 = vmatmul.bf16.gmra.mxu0 %v870
      %v1767 = vpop.f32.mrf.mxu0
      %v1768 = vadd.f32 %v1679, %v1767
      %v1769 = vpop.f32.mrf.mxu0
      %v1770 = vadd.f32 %v1681, %v1769
      %1771 = vmatmul.bf16.gmra.mxu0 %v873
      %v1772 = vpop.f32.mrf.mxu0
      %v1773 = vadd.f32 %v1684, %v1772
      %v1774 = vpop.f32.mrf.mxu0
      %v1775 = vadd.f32 %v1686, %v1774
      %1776 = vmatmul.bf16.gmra.mxu0 %v876
      %v1777 = vpop.f32.mrf.mxu0
      %v1778 = vadd.f32 %v1689, %v1777
      %v1779 = vpop.f32.mrf.mxu0
      %v1780 = vadd.f32 %v1691, %v1779
      %1781 = vmatmul.bf16.gmra.mxu0 %v879
      %v1782 = vpop.f32.mrf.mxu0
      %v1783 = vadd.f32 %v1694, %v1782
      %v1784 = vpop.f32.mrf.mxu0
      %v1785 = vadd.f32 %v1696, %v1784
      %1786 = vmatmul.bf16.gmra.mxu0 %v882
      %v1787 = vpop.f32.mrf.mxu0
      %v1788 = vadd.f32 %v1699, %v1787
      %v1789 = vpop.f32.mrf.mxu0
      %v1790 = vadd.f32 %v1701, %v1789
      %1791 = vmatmul.bf16.gmra.mxu0 %v885
      %v1792 = vpop.f32.mrf.mxu0
      %v1793 = vadd.f32 %v1704, %v1792
      %v1794 = vpop.f32.mrf.mxu0
      %v1795 = vadd.f32 %v1706, %v1794
      %1796 = vmatmul.bf16.gmra.mxu0 %v888
      %v1797 = vpop.f32.mrf.mxu0
      %v1798 = vadd.f32 %v1709, %v1797
      %v1799 = vpop.f32.mrf.mxu0
      %v1800 = vadd.f32 %v1711, %v1799
      %1801 = vmatmul.bf16.gmra.mxu0 %v891
      %v1802 = vpop.f32.mrf.mxu0
      %v1803 = vadd.f32 %v1714, %v1802
      %v1804 = vpop.f32.mrf.mxu0
      %v1805 = vadd.f32 %v1716, %v1804
      %1806 = vdwg.mxu0
      %1807 = vmatpush.bf16.msra.mxu0 %v1427
      %1808 = vmatpush.bf16.msra.mxu0 %v1426
      %1809 = vmatpush.bf16.msra.mxu0 %v1425
      %1810 = vmatpush.bf16.msra.mxu0 %v1424
      %1811 = vmatpush.bf16.msra.mxu0 %v1423
      %1812 = vmatpush.bf16.msra.mxu0 %v1422
      %1813 = vmatpush.bf16.msra.mxu0 %v1421
      %1814 = vmatpush.bf16.msra.mxu0 %v1420
      %1815 = vmatmul.bf16.gmra.mxu0 %v555
      %v1816 = vpop.f32.mrf.mxu0
      %v1817 = vadd.f32 %v1728, %v1816
      %v1818 = vpop.f32.mrf.mxu0
      %v1819 = vadd.f32 %v1730, %v1818
      %1820 = vmatmul.bf16.gmra.mxu0 %v556
      %v1821 = vpop.f32.mrf.mxu0
      %v1822 = vadd.f32 %v1733, %v1821
      %v1823 = vpop.f32.mrf.mxu0
      %v1824 = vadd.f32 %v1735, %v1823
      %1825 = vmatmul.bf16.gmra.mxu0 %v557
      %v1826 = vpop.f32.mrf.mxu0
      %v1827 = vadd.f32 %v1738, %v1826
      %v1828 = vpop.f32.mrf.mxu0
      %v1829 = vadd.f32 %v1740, %v1828
      %1830 = vmatmul.bf16.gmra.mxu0 %v558
      %v1831 = vpop.f32.mrf.mxu0
      %v1832 = vadd.f32 %v1743, %v1831
      %v1833 = vpop.f32.mrf.mxu0
      %v1834 = vadd.f32 %v1745, %v1833
      %1835 = vmatmul.bf16.gmra.mxu0 %v559
      %v1836 = vpop.f32.mrf.mxu0
      %v1837 = vadd.f32 %v1748, %v1836
      %v1838 = vpop.f32.mrf.mxu0
      %v1839 = vadd.f32 %v1750, %v1838
      %1840 = vmatmul.bf16.gmra.mxu0 %v560
      %v1841 = vpop.f32.mrf.mxu0
      %v1842 = vadd.f32 %v1753, %v1841
      %v1843 = vpop.f32.mrf.mxu0
      %v1844 = vadd.f32 %v1755, %v1843
      %1845 = vmatmul.bf16.gmra.mxu0 %v561
      %v1846 = vpop.f32.mrf.mxu0
      %v1847 = vadd.f32 %v1758, %v1846
      %v1848 = vpop.f32.mrf.mxu0
      %v1849 = vadd.f32 %v1760, %v1848
      %1850 = vmatmul.bf16.gmra.mxu0 %v562
      %v1851 = vpop.f32.mrf.mxu0
      %v1852 = vadd.f32 %v1763, %v1851
      %v1853 = vpop.f32.mrf.mxu0
      %v1854 = vadd.f32 %v1765, %v1853
      %1855 = vmatmul.bf16.gmra.mxu0 %v563
      %v1856 = vpop.f32.mrf.mxu0
      %v1857 = vadd.f32 %v1768, %v1856
      %v1858 = vpop.f32.mrf.mxu0
      %v1859 = vadd.f32 %v1770, %v1858
      %1860 = vmatmul.bf16.gmra.mxu0 %v564
      %v1861 = vpop.f32.mrf.mxu0
      %v1862 = vadd.f32 %v1773, %v1861
      %v1863 = vpop.f32.mrf.mxu0
      %v1864 = vadd.f32 %v1775, %v1863
      %1865 = vmatmul.bf16.gmra.mxu0 %v565
      %v1866 = vpop.f32.mrf.mxu0
      %v1867 = vadd.f32 %v1778, %v1866
      %v1868 = vpop.f32.mrf.mxu0
      %v1869 = vadd.f32 %v1780, %v1868
      %1870 = vmatmul.bf16.gmra.mxu0 %v566
      %v1871 = vpop.f32.mrf.mxu0
      %v1872 = vadd.f32 %v1783, %v1871
      %v1873 = vpop.f32.mrf.mxu0
      %v1874 = vadd.f32 %v1785, %v1873
      %1875 = vmatmul.bf16.gmra.mxu0 %v567
      %v1876 = vpop.f32.mrf.mxu0
      %v1877 = vadd.f32 %v1788, %v1876
      %v1878 = vpop.f32.mrf.mxu0
      %v1879 = vadd.f32 %v1790, %v1878
      %1880 = vmatmul.bf16.gmra.mxu0 %v568
      %v1881 = vpop.f32.mrf.mxu0
      %v1882 = vadd.f32 %v1793, %v1881
      %v1883 = vpop.f32.mrf.mxu0
      %v1884 = vadd.f32 %v1795, %v1883
      %1885 = vmatmul.bf16.gmra.mxu0 %v569
      %v1886 = vpop.f32.mrf.mxu0
      %v1887 = vadd.f32 %v1798, %v1886
      %v1888 = vpop.f32.mrf.mxu0
      %v1889 = vadd.f32 %v1800, %v1888
      %1890 = vmatmul.bf16.gmra.mxu0 %v912
      %v1891 = vpop.f32.mrf.mxu0
      %v1892 = vadd.f32 %v1803, %v1891
      %v1893 = vpop.f32.mrf.mxu0
      %v1894 = vadd.f32 %v1805, %v1893
      %1895 = vdwg.mxu0
      %1896 = vmatpush.bf16.msra.mxu0 %v1435
      %1897 = vmatpush.bf16.msra.mxu0 %v1434
      %1898 = vmatpush.bf16.msra.mxu0 %v1433
      %1899 = vmatpush.bf16.msra.mxu0 %v1432
      %1900 = vmatpush.bf16.msra.mxu0 %v1431
      %1901 = vmatpush.bf16.msra.mxu0 %v1430
      %1902 = vmatpush.bf16.msra.mxu0 %v1429
      %1903 = vmatpush.bf16.msra.mxu0 %v1428
      %1904 = vmatmul.bf16.gmra.mxu0 %v658
      %v1905 = vpop.f32.mrf.mxu0
      %v1906 = vadd.f32 %v1817, %v1905
      %v1907 = vpop.f32.mrf.mxu0
      %v1908 = vadd.f32 %v1819, %v1907
      %1909 = vmatmul.bf16.gmra.mxu0 %v670
      %v1910 = vpop.f32.mrf.mxu0
      %v1911 = vadd.f32 %v1822, %v1910
      %v1912 = vpop.f32.mrf.mxu0
      %v1913 = vadd.f32 %v1824, %v1912
      %1914 = vmatmul.bf16.gmra.mxu0 %v682
      %v1915 = vpop.f32.mrf.mxu0
      %v1916 = vadd.f32 %v1827, %v1915
      %v1917 = vpop.f32.mrf.mxu0
      %v1918 = vadd.f32 %v1829, %v1917
      %1919 = vmatmul.bf16.gmra.mxu0 %v694
      %v1920 = vpop.f32.mrf.mxu0
      %v1921 = vadd.f32 %v1832, %v1920
      %v1922 = vpop.f32.mrf.mxu0
      %v1923 = vadd.f32 %v1834, %v1922
      %1924 = vmatmul.bf16.gmra.mxu0 %v706
      %v1925 = vpop.f32.mrf.mxu0
      %v1926 = vadd.f32 %v1837, %v1925
      %v1927 = vpop.f32.mrf.mxu0
      %v1928 = vadd.f32 %v1839, %v1927
      %1929 = vmatmul.bf16.gmra.mxu0 %v718
      %v1930 = vpop.f32.mrf.mxu0
      %v1931 = vadd.f32 %v1842, %v1930
      %v1932 = vpop.f32.mrf.mxu0
      %v1933 = vadd.f32 %v1844, %v1932
      %1934 = vmatmul.bf16.gmra.mxu0 %v730
      %v1935 = vpop.f32.mrf.mxu0
      %v1936 = vadd.f32 %v1847, %v1935
      %v1937 = vpop.f32.mrf.mxu0
      %v1938 = vadd.f32 %v1849, %v1937
      %1939 = vmatmul.bf16.gmra.mxu0 %v742
      %v1940 = vpop.f32.mrf.mxu0
      %v1941 = vadd.f32 %v1852, %v1940
      %v1942 = vpop.f32.mrf.mxu0
      %v1943 = vadd.f32 %v1854, %v1942
      %1944 = vmatmul.bf16.gmra.mxu0 %v754
      %v1945 = vpop.f32.mrf.mxu0
      %v1946 = vadd.f32 %v1857, %v1945
      %v1947 = vpop.f32.mrf.mxu0
      %v1948 = vadd.f32 %v1859, %v1947
      %1949 = vmatmul.bf16.gmra.mxu0 %v766
      %v1950 = vpop.f32.mrf.mxu0
      %v1951 = vadd.f32 %v1862, %v1950
      %v1952 = vpop.f32.mrf.mxu0
      %v1953 = vadd.f32 %v1864, %v1952
      %1954 = vmatmul.bf16.gmra.mxu0 %v778
      %v1955 = vpop.f32.mrf.mxu0
      %v1956 = vadd.f32 %v1867, %v1955
      %v1957 = vpop.f32.mrf.mxu0
      %v1958 = vadd.f32 %v1869, %v1957
      %1959 = vmatmul.bf16.gmra.mxu0 %v790
      %v1960 = vpop.f32.mrf.mxu0
      %v1961 = vadd.f32 %v1872, %v1960
      %v1962 = vpop.f32.mrf.mxu0
      %v1963 = vadd.f32 %v1874, %v1962
      %1964 = vmatmul.bf16.gmra.mxu0 %v802
      %v1965 = vpop.f32.mrf.mxu0
      %v1966 = vadd.f32 %v1877, %v1965
      %v1967 = vpop.f32.mrf.mxu0
      %v1968 = vadd.f32 %v1879, %v1967
      %1969 = vmatmul.bf16.gmra.mxu0 %v814
      %v1970 = vpop.f32.mrf.mxu0
      %v1971 = vadd.f32 %v1882, %v1970
      %v1972 = vpop.f32.mrf.mxu0
      %v1973 = vadd.f32 %v1884, %v1972
      %1974 = vmatmul.bf16.gmra.mxu0 %v826
      %v1975 = vpop.f32.mrf.mxu0
      %v1976 = vadd.f32 %v1887, %v1975
      %v1977 = vpop.f32.mrf.mxu0
      %v1978 = vadd.f32 %v1889, %v1977
      %1979 = vmatmul.bf16.gmra.mxu0 %v928
      %v1980 = vpop.f32.mrf.mxu0
      %v1981 = vadd.f32 %v1892, %v1980
      %v1982 = vpop.f32.mrf.mxu0
      %v1983 = vadd.f32 %v1894, %v1982
      %1984 = vdwg.mxu0
      %1985 = vmatpush.bf16.msra.mxu0 %v1443
      %1986 = vmatpush.bf16.msra.mxu0 %v1442
      %1987 = vmatpush.bf16.msra.mxu0 %v1441
      %1988 = vmatpush.bf16.msra.mxu0 %v1440
      %1989 = vmatpush.bf16.msra.mxu0 %v1439
      %1990 = vmatpush.bf16.msra.mxu0 %v1438
      %1991 = vmatpush.bf16.msra.mxu0 %v1437
      %1992 = vmatpush.bf16.msra.mxu0 %v1436
      %1993 = vmatmul.bf16.gmra.mxu0 %v849
      %v1994 = vpop.f32.mrf.mxu0
      %v1995 = vadd.f32 %v1906, %v1994
      %v1996 = vpop.f32.mrf.mxu0
      %v1997 = vadd.f32 %v1908, %v1996
      %1998 = vmatmul.bf16.gmra.mxu0 %v852
      %v1999 = vpop.f32.mrf.mxu0
      %v2000 = vadd.f32 %v1911, %v1999
      %v2001 = vpop.f32.mrf.mxu0
      %v2002 = vadd.f32 %v1913, %v2001
      %2003 = vmatmul.bf16.gmra.mxu0 %v855
      %v2004 = vpop.f32.mrf.mxu0
      %v2005 = vadd.f32 %v1916, %v2004
      %v2006 = vpop.f32.mrf.mxu0
      %v2007 = vadd.f32 %v1918, %v2006
      %2008 = vmatmul.bf16.gmra.mxu0 %v858
      %v2009 = vpop.f32.mrf.mxu0
      %v2010 = vadd.f32 %v1921, %v2009
      %v2011 = vpop.f32.mrf.mxu0
      %v2012 = vadd.f32 %v1923, %v2011
      %2013 = vmatmul.bf16.gmra.mxu0 %v861
      %v2014 = vpop.f32.mrf.mxu0
      %v2015 = vadd.f32 %v1926, %v2014
      %v2016 = vpop.f32.mrf.mxu0
      %v2017 = vadd.f32 %v1928, %v2016
      %2018 = vmatmul.bf16.gmra.mxu0 %v864
      %v2019 = vpop.f32.mrf.mxu0
      %v2020 = vadd.f32 %v1931, %v2019
      %v2021 = vpop.f32.mrf.mxu0
      %v2022 = vadd.f32 %v1933, %v2021
      %2023 = vmatmul.bf16.gmra.mxu0 %v867
      %v2024 = vpop.f32.mrf.mxu0
      %v2025 = vadd.f32 %v1936, %v2024
      %v2026 = vpop.f32.mrf.mxu0
      %v2027 = vadd.f32 %v1938, %v2026
      %2028 = vmatmul.bf16.gmra.mxu0 %v870
      %v2029 = vpop.f32.mrf.mxu0
      %v2030 = vadd.f32 %v1941, %v2029
      %v2031 = vpop.f32.mrf.mxu0
      %v2032 = vadd.f32 %v1943, %v2031
      %2033 = vmatmul.bf16.gmra.mxu0 %v873
      %v2034 = vpop.f32.mrf.mxu0
      %v2035 = vadd.f32 %v1946, %v2034
      %v2036 = vpop.f32.mrf.mxu0
      %v2037 = vadd.f32 %v1948, %v2036
      %2038 = vmatmul.bf16.gmra.mxu0 %v876
      %v2039 = vpop.f32.mrf.mxu0
      %v2040 = vadd.f32 %v1951, %v2039
      %v2041 = vpop.f32.mrf.mxu0
      %v2042 = vadd.f32 %v1953, %v2041
      %2043 = vmatmul.bf16.gmra.mxu0 %v879
      %v2044 = vpop.f32.mrf.mxu0
      %v2045 = vadd.f32 %v1956, %v2044
      %v2046 = vpop.f32.mrf.mxu0
      %v2047 = vadd.f32 %v1958, %v2046
      %2048 = vmatmul.bf16.gmra.mxu0 %v882
      %v2049 = vpop.f32.mrf.mxu0
      %v2050 = vadd.f32 %v1961, %v2049
      %v2051 = vpop.f32.mrf.mxu0
      %v2052 = vadd.f32 %v1963, %v2051
      %2053 = vmatmul.bf16.gmra.mxu0 %v885
      %v2054 = vpop.f32.mrf.mxu0
      %v2055 = vadd.f32 %v1966, %v2054
      %v2056 = vpop.f32.mrf.mxu0
      %v2057 = vadd.f32 %v1968, %v2056
      %2058 = vmatmul.bf16.gmra.mxu0 %v888
      %v2059 = vpop.f32.mrf.mxu0
      %v2060 = vadd.f32 %v1971, %v2059
      %v2061 = vpop.f32.mrf.mxu0
      %v2062 = vadd.f32 %v1973, %v2061
      %2063 = vmatmul.bf16.gmra.mxu0 %v891
      %v2064 = vpop.f32.mrf.mxu0
      %v2065 = vadd.f32 %v1976, %v2064
      %v2066 = vpop.f32.mrf.mxu0
      %v2067 = vadd.f32 %v1978, %v2066
      %2068 = vmatmul.bf16.gmra.mxu0 %v932
      %v2069 = vpop.f32.mrf.mxu0
      %v2070 = vadd.f32 %v1981, %v2069
      %v2071 = vpop.f32.mrf.mxu0
      %v2072 = vadd.f32 %v1983, %v2071
      %2073 = vdwg.mxu0
      %2074 = vmatpush.bf16.msra.mxu0 %v1451
      %2075 = vmatpush.bf16.msra.mxu0 %v1450
      %2076 = vmatpush.bf16.msra.mxu0 %v1449
      %2077 = vmatpush.bf16.msra.mxu0 %v1448
      %2078 = vmatpush.bf16.msra.mxu0 %v1447
      %2079 = vmatpush.bf16.msra.mxu0 %v1446
      %2080 = vmatpush.bf16.msra.mxu0 %v1445
      %2081 = vmatpush.bf16.msra.mxu0 %v1444
      %2082 = vmatmul.bf16.gmra.mxu0 %v556
      %v2083 = vpop.f32.mrf.mxu0
      %v2084 = vadd.f32 %v1995, %v2083
      %v2085 = vpop.f32.mrf.mxu0
      %v2086 = vadd.f32 %v1997, %v2085
      %2087 = vmatmul.bf16.gmra.mxu0 %v557
      %v2088 = vpop.f32.mrf.mxu0
      %v2089 = vadd.f32 %v2000, %v2088
      %v2090 = vpop.f32.mrf.mxu0
      %v2091 = vadd.f32 %v2002, %v2090
      %2092 = vmatmul.bf16.gmra.mxu0 %v558
      %v2093 = vpop.f32.mrf.mxu0
      %v2094 = vadd.f32 %v2005, %v2093
      %v2095 = vpop.f32.mrf.mxu0
      %v2096 = vadd.f32 %v2007, %v2095
      %2097 = vmatmul.bf16.gmra.mxu0 %v559
      %v2098 = vpop.f32.mrf.mxu0
      %v2099 = vadd.f32 %v2010, %v2098
      %v2100 = vpop.f32.mrf.mxu0
      %v2101 = vadd.f32 %v2012, %v2100
      %2102 = vmatmul.bf16.gmra.mxu0 %v560
      %v2103 = vpop.f32.mrf.mxu0
      %v2104 = vadd.f32 %v2015, %v2103
      %v2105 = vpop.f32.mrf.mxu0
      %v2106 = vadd.f32 %v2017, %v2105
      %2107 = vmatmul.bf16.gmra.mxu0 %v561
      %v2108 = vpop.f32.mrf.mxu0
      %v2109 = vadd.f32 %v2020, %v2108
      %v2110 = vpop.f32.mrf.mxu0
      %v2111 = vadd.f32 %v2022, %v2110
      %2112 = vmatmul.bf16.gmra.mxu0 %v562
      %v2113 = vpop.f32.mrf.mxu0
      %v2114 = vadd.f32 %v2025, %v2113
      %v2115 = vpop.f32.mrf.mxu0
      %v2116 = vadd.f32 %v2027, %v2115
      %2117 = vmatmul.bf16.gmra.mxu0 %v563
      %v2118 = vpop.f32.mrf.mxu0
      %v2119 = vadd.f32 %v2030, %v2118
      %v2120 = vpop.f32.mrf.mxu0
      %v2121 = vadd.f32 %v2032, %v2120
      %2122 = vmatmul.bf16.gmra.mxu0 %v564
      %v2123 = vpop.f32.mrf.mxu0
      %v2124 = vadd.f32 %v2035, %v2123
      %v2125 = vpop.f32.mrf.mxu0
      %v2126 = vadd.f32 %v2037, %v2125
      %2127 = vmatmul.bf16.gmra.mxu0 %v565
      %v2128 = vpop.f32.mrf.mxu0
      %v2129 = vadd.f32 %v2040, %v2128
      %v2130 = vpop.f32.mrf.mxu0
      %v2131 = vadd.f32 %v2042, %v2130
      %2132 = vmatmul.bf16.gmra.mxu0 %v566
      %v2133 = vpop.f32.mrf.mxu0
      %v2134 = vadd.f32 %v2045, %v2133
      %v2135 = vpop.f32.mrf.mxu0
      %v2136 = vadd.f32 %v2047, %v2135
      %2137 = vmatmul.bf16.gmra.mxu0 %v567
      %v2138 = vpop.f32.mrf.mxu0
      %v2139 = vadd.f32 %v2050, %v2138
      %v2140 = vpop.f32.mrf.mxu0
      %v2141 = vadd.f32 %v2052, %v2140
      %2142 = vmatmul.bf16.gmra.mxu0 %v568
      %v2143 = vpop.f32.mrf.mxu0
      %v2144 = vadd.f32 %v2055, %v2143
      %v2145 = vpop.f32.mrf.mxu0
      %v2146 = vadd.f32 %v2057, %v2145
      %2147 = vmatmul.bf16.gmra.mxu0 %v569
      %v2148 = vpop.f32.mrf.mxu0
      %v2149 = vadd.f32 %v2060, %v2148
      %v2150 = vpop.f32.mrf.mxu0
      %v2151 = vadd.f32 %v2062, %v2150
      %2152 = vmatmul.bf16.gmra.mxu0 %v912
      %v2153 = vpop.f32.mrf.mxu0
      %v2154 = vadd.f32 %v2065, %v2153
      %v2155 = vpop.f32.mrf.mxu0
      %v2156 = vadd.f32 %v2067, %v2155
      %2157 = vmatmul.bf16.gmra.mxu0 %v938
      %v2158 = vpop.f32.mrf.mxu0
      %v2159 = vadd.f32 %v2070, %v2158
      %v2160 = vpop.f32.mrf.mxu0
      %v2161 = vadd.f32 %v2072, %v2160
      %2162 = vdwg.mxu0
      %2163 = vmatpush.bf16.msra.mxu0 %v1459
      %2164 = vmatpush.bf16.msra.mxu0 %v1458
      %2165 = vmatpush.bf16.msra.mxu0 %v1457
      %2166 = vmatpush.bf16.msra.mxu0 %v1456
      %2167 = vmatpush.bf16.msra.mxu0 %v1455
      %2168 = vmatpush.bf16.msra.mxu0 %v1454
      %2169 = vmatpush.bf16.msra.mxu0 %v1453
      %2170 = vmatpush.bf16.msra.mxu0 %v1452
      %2171 = vmatmul.bf16.gmra.mxu0 %v670
      %v2172 = vpop.f32.mrf.mxu0
      %v2173 = vadd.f32 %v2084, %v2172
      %v2174 = vpop.f32.mrf.mxu0
      %v2175 = vadd.f32 %v2086, %v2174
      %2176 = vmatmul.bf16.gmra.mxu0 %v682
      %v2177 = vpop.f32.mrf.mxu0
      %v2178 = vadd.f32 %v2089, %v2177
      %v2179 = vpop.f32.mrf.mxu0
      %v2180 = vadd.f32 %v2091, %v2179
      %2181 = vmatmul.bf16.gmra.mxu0 %v694
      %v2182 = vpop.f32.mrf.mxu0
      %v2183 = vadd.f32 %v2094, %v2182
      %v2184 = vpop.f32.mrf.mxu0
      %v2185 = vadd.f32 %v2096, %v2184
      %2186 = vmatmul.bf16.gmra.mxu0 %v706
      %v2187 = vpop.f32.mrf.mxu0
      %v2188 = vadd.f32 %v2099, %v2187
      %v2189 = vpop.f32.mrf.mxu0
      %v2190 = vadd.f32 %v2101, %v2189
      %2191 = vmatmul.bf16.gmra.mxu0 %v718
      %v2192 = vpop.f32.mrf.mxu0
      %v2193 = vadd.f32 %v2104, %v2192
      %v2194 = vpop.f32.mrf.mxu0
      %v2195 = vadd.f32 %v2106, %v2194
      %2196 = vmatmul.bf16.gmra.mxu0 %v730
      %v2197 = vpop.f32.mrf.mxu0
      %v2198 = vadd.f32 %v2109, %v2197
      %v2199 = vpop.f32.mrf.mxu0
      %v2200 = vadd.f32 %v2111, %v2199
      %2201 = vmatmul.bf16.gmra.mxu0 %v742
      %v2202 = vpop.f32.mrf.mxu0
      %v2203 = vadd.f32 %v2114, %v2202
      %v2204 = vpop.f32.mrf.mxu0
      %v2205 = vadd.f32 %v2116, %v2204
      %2206 = vmatmul.bf16.gmra.mxu0 %v754
      %v2207 = vpop.f32.mrf.mxu0
      %v2208 = vadd.f32 %v2119, %v2207
      %v2209 = vpop.f32.mrf.mxu0
      %v2210 = vadd.f32 %v2121, %v2209
      %2211 = vmatmul.bf16.gmra.mxu0 %v766
      %v2212 = vpop.f32.mrf.mxu0
      %v2213 = vadd.f32 %v2124, %v2212
      %v2214 = vpop.f32.mrf.mxu0
      %v2215 = vadd.f32 %v2126, %v2214
      %2216 = vmatmul.bf16.gmra.mxu0 %v778
      %v2217 = vpop.f32.mrf.mxu0
      %v2218 = vadd.f32 %v2129, %v2217
      %v2219 = vpop.f32.mrf.mxu0
      %v2220 = vadd.f32 %v2131, %v2219
      %2221 = vmatmul.bf16.gmra.mxu0 %v790
      %v2222 = vpop.f32.mrf.mxu0
      %v2223 = vadd.f32 %v2134, %v2222
      %v2224 = vpop.f32.mrf.mxu0
      %v2225 = vadd.f32 %v2136, %v2224
      %2226 = vmatmul.bf16.gmra.mxu0 %v802
      %v2227 = vpop.f32.mrf.mxu0
      %v2228 = vadd.f32 %v2139, %v2227
      %v2229 = vpop.f32.mrf.mxu0
      %v2230 = vadd.f32 %v2141, %v2229
      %2231 = vmatmul.bf16.gmra.mxu0 %v814
      %v2232 = vpop.f32.mrf.mxu0
      %v2233 = vadd.f32 %v2144, %v2232
      %v2234 = vpop.f32.mrf.mxu0
      %v2235 = vadd.f32 %v2146, %v2234
      %2236 = vmatmul.bf16.gmra.mxu0 %v826
      %v2237 = vpop.f32.mrf.mxu0
      %v2238 = vadd.f32 %v2149, %v2237
      %v2239 = vpop.f32.mrf.mxu0
      %v2240 = vadd.f32 %v2151, %v2239
      %2241 = vmatmul.bf16.gmra.mxu0 %v928
      %v2242 = vpop.f32.mrf.mxu0
      %v2243 = vadd.f32 %v2154, %v2242
      %v2244 = vpop.f32.mrf.mxu0
      %v2245 = vadd.f32 %v2156, %v2244
      %2246 = vmatmul.bf16.gmra.mxu0 %v954
      %v2247 = vpop.f32.mrf.mxu0
      %v2248 = vadd.f32 %v2159, %v2247
      %v2249 = vpop.f32.mrf.mxu0
      %v2250 = vadd.f32 %v2161, %v2249
      %2251 = vdwg.mxu0
      %2252 = vmatpush.bf16.msra.mxu0 %v1467
      %2253 = vmatpush.bf16.msra.mxu0 %v1466
      %2254 = vmatpush.bf16.msra.mxu0 %v1465
      %2255 = vmatpush.bf16.msra.mxu0 %v1464
      %2256 = vmatpush.bf16.msra.mxu0 %v1463
      %2257 = vmatpush.bf16.msra.mxu0 %v1462
      %2258 = vmatpush.bf16.msra.mxu0 %v1461
      %2259 = vmatpush.bf16.msra.mxu0 %v1460
      %2260 = vmatmul.bf16.gmra.mxu0 %v852
      %v2261 = vpop.f32.mrf.mxu0
      %v2262 = vadd.f32 %v2173, %v2261
      %v2263 = vpop.f32.mrf.mxu0
      %v2264 = vadd.f32 %v2175, %v2263
      %2265 = vmatmul.bf16.gmra.mxu0 %v855
      %v2266 = vpop.f32.mrf.mxu0
      %v2267 = vadd.f32 %v2178, %v2266
      %v2268 = vpop.f32.mrf.mxu0
      %v2269 = vadd.f32 %v2180, %v2268
      %2270 = vmatmul.bf16.gmra.mxu0 %v858
      %v2271 = vpop.f32.mrf.mxu0
      %v2272 = vadd.f32 %v2183, %v2271
      %v2273 = vpop.f32.mrf.mxu0
      %v2274 = vadd.f32 %v2185, %v2273
      %2275 = vmatmul.bf16.gmra.mxu0 %v861
      %v2276 = vpop.f32.mrf.mxu0
      %v2277 = vadd.f32 %v2188, %v2276
      %v2278 = vpop.f32.mrf.mxu0
      %v2279 = vadd.f32 %v2190, %v2278
      %2280 = vmatmul.bf16.gmra.mxu0 %v864
      %v2281 = vpop.f32.mrf.mxu0
      %v2282 = vadd.f32 %v2193, %v2281
      %v2283 = vpop.f32.mrf.mxu0
      %v2284 = vadd.f32 %v2195, %v2283
      %2285 = vmatmul.bf16.gmra.mxu0 %v867
      %v2286 = vpop.f32.mrf.mxu0
      %v2287 = vadd.f32 %v2198, %v2286
      %v2288 = vpop.f32.mrf.mxu0
      %v2289 = vadd.f32 %v2200, %v2288
      %2290 = vmatmul.bf16.gmra.mxu0 %v870
      %v2291 = vpop.f32.mrf.mxu0
      %v2292 = vadd.f32 %v2203, %v2291
      %v2293 = vpop.f32.mrf.mxu0
      %v2294 = vadd.f32 %v2205, %v2293
      %2295 = vmatmul.bf16.gmra.mxu0 %v873
      %v2296 = vpop.f32.mrf.mxu0
      %v2297 = vadd.f32 %v2208, %v2296
      %v2298 = vpop.f32.mrf.mxu0
      %v2299 = vadd.f32 %v2210, %v2298
      %2300 = vmatmul.bf16.gmra.mxu0 %v876
      %v2301 = vpop.f32.mrf.mxu0
      %v2302 = vadd.f32 %v2213, %v2301
      %v2303 = vpop.f32.mrf.mxu0
      %v2304 = vadd.f32 %v2215, %v2303
      %2305 = vmatmul.bf16.gmra.mxu0 %v879
      %v2306 = vpop.f32.mrf.mxu0
      %v2307 = vadd.f32 %v2218, %v2306
      %v2308 = vpop.f32.mrf.mxu0
      %v2309 = vadd.f32 %v2220, %v2308
      %2310 = vmatmul.bf16.gmra.mxu0 %v882
      %v2311 = vpop.f32.mrf.mxu0
      %v2312 = vadd.f32 %v2223, %v2311
      %v2313 = vpop.f32.mrf.mxu0
      %v2314 = vadd.f32 %v2225, %v2313
      %2315 = vmatmul.bf16.gmra.mxu0 %v885
      %v2316 = vpop.f32.mrf.mxu0
      %v2317 = vadd.f32 %v2228, %v2316
      %v2318 = vpop.f32.mrf.mxu0
      %v2319 = vadd.f32 %v2230, %v2318
      %2320 = vmatmul.bf16.gmra.mxu0 %v888
      %v2321 = vpop.f32.mrf.mxu0
      %v2322 = vadd.f32 %v2233, %v2321
      %v2323 = vpop.f32.mrf.mxu0
      %v2324 = vadd.f32 %v2235, %v2323
      %2325 = vmatmul.bf16.gmra.mxu0 %v891
      %v2326 = vpop.f32.mrf.mxu0
      %v2327 = vadd.f32 %v2238, %v2326
      %v2328 = vpop.f32.mrf.mxu0
      %v2329 = vadd.f32 %v2240, %v2328
      %2330 = vmatmul.bf16.gmra.mxu0 %v932
      %v2331 = vpop.f32.mrf.mxu0
      %v2332 = vadd.f32 %v2243, %v2331
      %v2333 = vpop.f32.mrf.mxu0
      %v2334 = vadd.f32 %v2245, %v2333
      %2335 = vmatmul.bf16.gmra.mxu0 %v958
      %v2336 = vpop.f32.mrf.mxu0
      %v2337 = vadd.f32 %v2248, %v2336
      %v2338 = vpop.f32.mrf.mxu0
      %v2339 = vadd.f32 %v2250, %v2338
      %2340 = vdwg.mxu0
      %v2341 = vpack.c.bf16 %v2262, %v2262
      %v2342 = vpack.c.bf16 %v2264, %v2264
      %v2343 = vpack.c.bf16 %v2267, %v2267
      %v2344 = vpack.c.bf16 %v2269, %v2269
      %v2345 = vpack.c.bf16 %v2272, %v2272
      %v2346 = vpack.c.bf16 %v2274, %v2274
      %v2347 = vpack.c.bf16 %v2277, %v2277
      %v2348 = vpack.c.bf16 %v2279, %v2279
      %v2349 = vpack.c.bf16 %v2282, %v2282
      %v2350 = vpack.c.bf16 %v2284, %v2284
      %v2351 = vpack.c.bf16 %v2287, %v2287
      %v2352 = vpack.c.bf16 %v2289, %v2289
      %v2353 = vpack.c.bf16 %v2292, %v2292
      %v2354 = vpack.c.bf16 %v2294, %v2294
      %v2355 = vpack.c.bf16 %v2297, %v2297
      %v2356 = vpack.c.bf16 %v2299, %v2299
      %v2357 = vpack.c.bf16 %v2302, %v2302
      %v2358 = vpack.c.bf16 %v2304, %v2304
      %v2359 = vpack.c.bf16 %v2307, %v2307
      %v2360 = vpack.c.bf16 %v2309, %v2309
      %v2361 = vpack.c.bf16 %v2312, %v2312
      %v2362 = vpack.c.bf16 %v2314, %v2314
      %v2363 = vpack.c.bf16 %v2317, %v2317
      %v2364 = vpack.c.bf16 %v2319, %v2319
      %v2365 = vpack.c.bf16 %v2322, %v2322
      %v2366 = vpack.c.bf16 %v2324, %v2324
      %v2367 = vpack.c.bf16 %v2327, %v2327
      %v2368 = vpack.c.bf16 %v2329, %v2329
      %v2369 = vpack.c.bf16 %v2332, %v2332
      %v2370 = vpack.c.bf16 %v2334, %v2334
      %v2371 = vpack.c.bf16 %v2337, %v2337
      %v2372 = vpack.c.bf16 %v2339, %v2339
      %2373 = vst [vmem:[%s427] sm:$0xf] %v2341
      %2374 = vst [vmem:[%s427 + $0x4] sm:$0xf] %v2342
      %2375 = vst [vmem:[%s427 + $0x8] sm:$0xf] %v2343
      %2376 = vst [vmem:[%s427 + $0xc] sm:$0xf] %v2344
      %2377 = vst [vmem:[%s427 + $0x10] sm:$0xf] %v2345
      %2378 = vst [vmem:[%s427 + $0x14] sm:$0xf] %v2346
      %2379 = vst [vmem:[%s427 + $0x18] sm:$0xf] %v2347
      %2380 = vst [vmem:[%s427 + $0x1c] sm:$0xf] %v2348
      %2381 = vst [vmem:[%s427 + $0x20] sm:$0xf] %v2349
      %2382 = vst [vmem:[%s427 + $0x24] sm:$0xf] %v2350
      %2383 = vst [vmem:[%s427 + $0x28] sm:$0xf] %v2351
      %2384 = vst [vmem:[%s427 + $0x2c] sm:$0xf] %v2352
      %2385 = vst [vmem:[%s427 + $0x30] sm:$0xf] %v2353
      %2386 = vst [vmem:[%s427 + $0x34] sm:$0xf] %v2354
      %2387 = vst [vmem:[%s427 + $0x38] sm:$0xf] %v2355
      %2388 = vst [vmem:[%s427 + $0x3c] sm:$0xf] %v2356
      %2389 = vst [vmem:[%s427 + $0x40] sm:$0xf] %v2357
      %2390 = vst [vmem:[%s427 + $0x44] sm:$0xf] %v2358
      %2391 = vst [vmem:[%s427 + $0x48] sm:$0xf] %v2359
      %2392 = vst [vmem:[%s427 + $0x4c] sm:$0xf] %v2360
      %2393 = vst [vmem:[%s427 + $0x50] sm:$0xf] %v2361
      %2394 = vst [vmem:[%s427 + $0x54] sm:$0xf] %v2362
      %2395 = vst [vmem:[%s427 + $0x58] sm:$0xf] %v2363
      %2396 = vst [vmem:[%s427 + $0x5c] sm:$0xf] %v2364
      %2397 = vst [vmem:[%s427 + $0x60] sm:$0xf] %v2365
      %2398 = vst [vmem:[%s427 + $0x64] sm:$0xf] %v2366
      %2399 = vst [vmem:[%s427 + $0x68] sm:$0xf] %v2367
      %2400 = vst [vmem:[%s427 + $0x6c] sm:$0xf] %v2368
      %2401 = vst [vmem:[%s427 + $0x70] sm:$0xf] %v2369
      %2402 = vst [vmem:[%s427 + $0x74] sm:$0xf] %v2370
      %2403 = vst [vmem:[%s427 + $0x78] sm:$0xf] %v2371
      %2404 = vst [vmem:[%s427 + $0x7c] sm:$0xf] %v2372
      %v2405 = vadd.f32 %v2262, %v2264
      %v2406 = vadd.f32 %v2405, %v2267
      %v2407 = vadd.f32 %v2406, %v2269
      %v2408 = vadd.f32 %v2407, %v2272
      %v2409 = vadd.f32 %v2408, %v2274
      %v2410 = vadd.f32 %v2409, %v2277
      %v2411 = vadd.f32 %v2410, %v2279
      %v2412 = vadd.f32 %v2411, %v2282
      %v2413 = vadd.f32 %v2412, %v2284
      %v2414 = vadd.f32 %v2413, %v2287
      %v2415 = vadd.f32 %v2414, %v2289
      %v2416 = vadd.f32 %v2415, %v2292
      %v2417 = vadd.f32 %v2416, %v2294
      %v2418 = vadd.f32 %v2417, %v2297
      %v2419 = vadd.f32 %v2418, %v2299
      %v2420 = vadd.f32 %v2419, %v2302
      %v2421 = vadd.f32 %v2420, %v2304
      %v2422 = vadd.f32 %v2421, %v2307
      %v2423 = vadd.f32 %v2422, %v2309
      %v2424 = vadd.f32 %v2423, %v2312
      %v2425 = vadd.f32 %v2424, %v2314
      %v2426 = vadd.f32 %v2425, %v2317
      %v2427 = vadd.f32 %v2426, %v2319
      %v2428 = vadd.f32 %v2427, %v2322
      %v2429 = vadd.f32 %v2428, %v2324
      %v2430 = vadd.f32 %v2429, %v2327
      %v2431 = vadd.f32 %v2430, %v2329
      %v2432 = vadd.f32 %v2431, %v2332
      %v2433 = vadd.f32 %v2432, %v2334
      %v2434 = vadd.f32 %v2433, %v2337
      %v2435 = vadd.f32 %v2434, %v2339
      %v2436 = vrot.slane %v2435, 4
      %v2437 = vadd.f32 %v2435, %v2436
      %v2438 = vrot.slane %v2437, 2
      %v2439 = vadd.f32 %v2437, %v2438
      %v2440 = vrot.slane %v2439, 1
      %v2441 = vadd.f32 %v2439, %v2440
      %v2442 = vmul.f32 %v2262, %v2262
      %v2443 = vmul.f32 %v2264, %v2264
      %v2444 = vmul.f32 %v2267, %v2267
      %v2445 = vmul.f32 %v2269, %v2269
      %v2446 = vmul.f32 %v2272, %v2272
      %v2447 = vmul.f32 %v2274, %v2274
      %v2448 = vmul.f32 %v2277, %v2277
      %v2449 = vmul.f32 %v2279, %v2279
      %v2450 = vmul.f32 %v2282, %v2282
      %v2451 = vmul.f32 %v2284, %v2284
      %v2452 = vmul.f32 %v2287, %v2287
      %v2453 = vmul.f32 %v2289, %v2289
      %v2454 = vmul.f32 %v2292, %v2292
      %v2455 = vmul.f32 %v2294, %v2294
      %v2456 = vmul.f32 %v2297, %v2297
      %v2457 = vmul.f32 %v2299, %v2299
      %v2458 = vmul.f32 %v2302, %v2302
      %v2459 = vmul.f32 %v2304, %v2304
      %v2460 = vmul.f32 %v2307, %v2307
      %v2461 = vmul.f32 %v2309, %v2309
      %v2462 = vmul.f32 %v2312, %v2312
      %v2463 = vmul.f32 %v2314, %v2314
      %v2464 = vmul.f32 %v2317, %v2317
      %v2465 = vmul.f32 %v2319, %v2319
      %v2466 = vmul.f32 %v2322, %v2322
      %v2467 = vmul.f32 %v2324, %v2324
      %v2468 = vmul.f32 %v2327, %v2327
      %v2469 = vmul.f32 %v2329, %v2329
      %v2470 = vmul.f32 %v2332, %v2332
      %v2471 = vmul.f32 %v2334, %v2334
      %v2472 = vmul.f32 %v2337, %v2337
      %v2473 = vmul.f32 %v2339, %v2339
      %v2474 = vadd.f32 %v2442, %v2443
      %v2475 = vadd.f32 %v2474, %v2444
      %v2476 = vadd.f32 %v2475, %v2445
      %v2477 = vadd.f32 %v2476, %v2446
      %v2478 = vadd.f32 %v2477, %v2447
      %v2479 = vadd.f32 %v2478, %v2448
      %v2480 = vadd.f32 %v2479, %v2449
      %v2481 = vadd.f32 %v2480, %v2450
      %v2482 = vadd.f32 %v2481, %v2451
      %v2483 = vadd.f32 %v2482, %v2452
      %v2484 = vadd.f32 %v2483, %v2453
      %v2485 = vadd.f32 %v2484, %v2454
      %v2486 = vadd.f32 %v2485, %v2455
      %v2487 = vadd.f32 %v2486, %v2456
      %v2488 = vadd.f32 %v2487, %v2457
      %v2489 = vadd.f32 %v2488, %v2458
      %v2490 = vadd.f32 %v2489, %v2459
      %v2491 = vadd.f32 %v2490, %v2460
      %v2492 = vadd.f32 %v2491, %v2461
      %v2493 = vadd.f32 %v2492, %v2462
      %v2494 = vadd.f32 %v2493, %v2463
      %v2495 = vadd.f32 %v2494, %v2464
      %v2496 = vadd.f32 %v2495, %v2465
      %v2497 = vadd.f32 %v2496, %v2466
      %v2498 = vadd.f32 %v2497, %v2467
      %v2499 = vadd.f32 %v2498, %v2468
      %v2500 = vadd.f32 %v2499, %v2469
      %v2501 = vadd.f32 %v2500, %v2470
      %v2502 = vadd.f32 %v2501, %v2471
      %v2503 = vadd.f32 %v2502, %v2472
      %v2504 = vadd.f32 %v2503, %v2473
      %v2505 = vrot.slane %v2504, 4
      %v2506 = vadd.f32 %v2504, %v2505
      %v2507 = vrot.slane %v2506, 2
      %v2508 = vadd.f32 %v2506, %v2507
      %v2509 = vrot.slane %v2508, 1
      %v2510 = vadd.f32 %v2508, %v2509
      %vm2511 = vcmask 1040384
      %v2512 = vsel %vm2511, %v2441, %v2510
      %2513 = vst [vmem:[%s435] sm:$0x3] %v2512
      %s2514 = smul.u32 16, %s23
      %p2515 = scmp.lt.s32.totalorder %s22, 1
      %s2516 = scalar_select %p2515, %s22, 1
      %p2517 = scmp.lt.s32.totalorder %s2514, 15
      %s2518 = scalar_select %p2517, %s2514, 15
      %s2519 = smul.addr %s2518, 2
      %s2520 = smul.addr %s2516, 32
      %s2521 = sadd.s32 %s2519, %s2520
      %s2522 = smul.addr %s2521, 4
      %s2523 = scalar_lea.vmem %s5, %s2522
      %p2524 = scmp.lt.s32.totalorder %s22, 1
      %s2525 = scalar_select %p2524, %s22, 1
      %p2526 = scmp.lt.s32.totalorder %s23, 0
      %s2527 = scalar_select %p2526, %s23, 0
      %s2528 = sadd.s32 %s2527, %s2525
      %s2529 = smul.addr %s2528, 2
      %s2530 = scalar_lea.vmem %s6, %s2529
      // Predicated region
      $region41: #{basic_block_forward.6} parent=39 // pred_check
        %p2531 = pneg %p184
      $region42: #{basic_block_forward.6} parent=39 // pred_check_branch
        %2533 = sbr.rel (%p2531) target = $region44
      $region43: #{basic_block_forward.6} parent=39 // pred_region
        %s2534 = smul.u32 16, %s23
      $region44: #{basic_block_forward.6} parent=39 // pred_fallthru
        _
      // Predicated region
      $region45: #{basic_block_forward.6} parent=39 // pred_check
        %p2535 = pneg %p212
      $region46: #{basic_block_forward.6} parent=39 // pred_check_branch
        %2537 = sbr.rel (%p2535) target = $region48
      $region47: #{basic_block_forward.6} parent=39 // pred_region
        _
      $region48: #{basic_block_forward.6} parent=39 // pred_fallthru
        _
    $region40: #{basic_block_forward.6} parent=5 // pred_fallthru
      _
    %p2538 = scmp.le.s32.totalorder 2, %s13
    // Predicated region
    $region49: #{basic_block_forward.6} parent=5 // pred_check
      %p2539 = pneg %p2538
    $region50: #{basic_block_forward.6} parent=5 // pred_check_branch
      %2541 = sbr.rel (%p2539) target = $region52
    $region51: #{basic_block_forward.6} parent=5 // pred_region
      %s2542 = ssub.s32 %s13, 2
      // Predicated region
      $region53: #{basic_block_forward.6} parent=51 // pred_check
        %p2543 = pneg %p190
      $region54: #{basic_block_forward.6} parent=51 // pred_check_branch
        %2545 = sbr.rel (%p2543) target = $region56
      $region55: #{basic_block_forward.6} parent=51 // pred_region
        %s2546 = smul.u32 16, %s25
        %p2547 = scmp.lt.s32.totalorder %s24, 1
        %s2548 = scalar_select %p2547, %s24, 1
        %p2549 = scmp.lt.s32.totalorder %s2546, 15
        %s2550 = scalar_select %p2549, %s2546, 15
        %s2551 = smul.addr %s2550, 2
        %s2552 = smul.addr %s2548, 32
        %s2553 = sadd.s32 %s2551, %s2552
        %s2554 = smul.addr %s2553, 4
        %s2555 = scalar_lea.vmem %s5, %s2554
      $region56: #{basic_block_forward.6} parent=51 // pred_fallthru
        _
      // Predicated region
      $region57: #{basic_block_forward.6} parent=51 // pred_check
        %p2556 = pneg %p218
      $region58: #{basic_block_forward.6} parent=51 // pred_check_branch
        %2558 = sbr.rel (%p2556) target = $region60
      $region59: #{basic_block_forward.6} parent=51 // pred_region
        %p2559 = scmp.lt.s32.totalorder %s24, 1
        %s2560 = scalar_select %p2559, %s24, 1
        %p2561 = scmp.lt.s32.totalorder %s25, 0
        %s2562 = scalar_select %p2561, %s25, 0
        %s2563 = sadd.s32 %s2562, %s2560
        %s2564 = smul.addr %s2563, 2
        %s2565 = scalar_lea.vmem %s6, %s2564
      $region60: #{basic_block_forward.6} parent=51 // pred_fallthru
        _
    $region52: #{basic_block_forward.6} parent=5 // pred_fallthru
      _
  $region6: #{basic_block_forward.6} parent=0 // loop_footer
    %s17 = sadd.s32 1, %s13
  $region7: #{basic_block_forward.6} parent=0 // loop_footer_branch
    %12 = sbr.rel target = $region3
  $region8: #{basic_block_forward.6} parent=0 // loop_exit
    _

</llo_original>
